<compile_context>
chip_gen: v5e
topology: v5e:2x2
jax: 0.10.0
libtpu: 0.0.40
codegen_flags: <defaults>
</compile_context>

<pallas_src>
import math

import jax
import jax.numpy as jnp
from jax.experimental import pallas as pl
from jax.experimental.pallas import tpu as pltpu

# ----------------------------- model dims (small) -----------------------------
B = 2            # batch
T = 8            # decoder target length (eos already removed)
S = 16           # encoder output length
H = 32           # hidden_state_dim
NUM_HEADS = 4
D_HEAD = H // NUM_HEADS
C = 16           # num_classes
NUM_LAYERS = 2   # LSTM layers (hard-coded as 2 below)


# ============================== fused decoder kernel ===========================
def fused_decoder_kernel(
    tgt_ref,                                   # (B, T) int32 in SMEM (scalar prefetch)
    emb_ref,                                   # (C, H) embedding table
    w0_ref, b0_ref, w1_ref, b1_ref,            # LSTM: stacked (2H,4H) weights, (1,4H) bias
    enc_ref,                                   # (B*S, H) encoder outputs (batch-flattened)
    wq_ref, bq_ref, wk_ref, bk_ref, wv_ref, bv_ref,
    w_fc1_ref, b_fc1_ref, w_fc2_ref, b_fc2_ref,
    logp_ref, attn_ref, ctx_ref,               # outputs (flat 2-D)
    xstep, dec_buf,                            # VMEM scratch
):
    f32 = jnp.float32

    def lstm_cell(xin, h, c, w_ref, b_ref):
        # Fused gate matmul: concat([x, h]) @ W_stacked, PyTorch gate order [i,f,g,o].
        xh = jnp.concatenate([xin, h], axis=-1)                       # (B, 2H)
        z = jnp.dot(xh, w_ref[...], preferred_element_type=f32) + b_ref[...]
        i = jax.nn.sigmoid(z[:, 0 * H:1 * H])
        f = jax.nn.sigmoid(z[:, 1 * H:2 * H])
        g = jnp.tanh(z[:, 2 * H:3 * H])
        o = jax.nn.sigmoid(z[:, 3 * H:4 * H])
        c_new = f * c + i * g
        h_new = o * jnp.tanh(c_new)
        return h_new, c_new

    h0 = jnp.zeros((B, H), f32)
    c0 = jnp.zeros((B, H), f32)
    h1 = jnp.zeros((B, H), f32)
    c1 = jnp.zeros((B, H), f32)

    # --------------------- embedding gather + 2-layer LSTM ---------------------
    for t in range(T):                       # static full unroll (T is small)
        # In-kernel embedding lookup from scalar-prefetched target ids.
        for b in range(B):
            tid = tgt_ref[b, t]
            xstep[pl.ds(b, 1), :] = emb_ref[pl.ds(tid, 1), :]
        x_t = xstep[...]                                              # (B, H)

        # (inter-layer dropout is identity in eval mode)
        h0, c0 = lstm_cell(x_t, h0, c0, w0_ref, b0_ref)
        h1, c1 = lstm_cell(h0, h1, c1, w1_ref, b1_ref)

        # Store top-layer output batch-major: row b*T + t.
        for b in range(B):
            dec_buf[pl.ds(b * T + t, 1), :] = h1[b:b + 1, :]

    dec = dec_buf[...]                                                # (B*T, H)
    enc = enc_ref[...]                                                # (B*S, H)

    # --------------------- multi-head attention (flattened) --------------------
    q = jnp.dot(dec, wq_ref[...], preferred_element_type=f32) + bq_ref[...]   # (B*T, H)
    k = jnp.dot(enc, wk_ref[...], preferred_element_type=f32) + bk_ref[...]   # (B*S, H)
    v = jnp.dot(enc, wv_ref[...], preferred_element_type=f32) + bv_ref[...]   # (B*S, H)

    scale = 1.0 / math.sqrt(D_HEAD)
    score_blocks = []
    for h in range(NUM_HEADS):               # head-major ordering (matches KoSpeech attn)
        for b in range(B):
            qhb = q[b * T:(b + 1) * T, h * D_HEAD:(h + 1) * D_HEAD]   # (T, dh)
            khb = k[b * S:(b + 1) * S, h * D_HEAD:(h + 1) * D_HEAD]   # (S, dh)
            score_blocks.append(
                jnp.dot(qhb, khb.T, preferred_element_type=f32))      # (T, S)
    scores = jnp.concatenate(score_blocks, axis=0) * scale            # (NH*B*T, S)

    # One batched softmax over all heads/batches/time steps.
    m = jnp.max(scores, axis=-1, keepdims=True)
    e = jnp.exp(scores - m)
    denom = jnp.sum(e, axis=-1, keepdims=True)
    a = e * pl.reciprocal(denom, approx=True)                         # (NH*B*T, S)
    attn_ref[...] = a

    ctx_rows = []
    for b in range(B):
        parts = []
        for h in range(NUM_HEADS):
            a_hb = a[(h * B + b) * T:(h * B + b + 1) * T, :]          # (T, S)
            vhb = v[b * S:(b + 1) * S, h * D_HEAD:(h + 1) * D_HEAD]   # (S, dh)
            parts.append(jnp.dot(a_hb, vhb, preferred_element_type=f32))
        ctx_rows.append(jnp.concatenate(parts, axis=-1))              # (T, H)
    ctx = jnp.concatenate(ctx_rows, axis=0)                           # (B*T, H)
    ctx_ref[...] = ctx

    # --------------------------- fc + log_softmax ------------------------------
    cat = jnp.concatenate([dec, ctx], axis=-1)                        # (B*T, 2H)
    hid = jnp.tanh(
        jnp.dot(cat, w_fc1_ref[...], preferred_element_type=f32) + b_fc1_ref[...])
    logits = jnp.dot(hid, w_fc2_ref[...], preferred_element_type=f32) + b_fc2_ref[...]
    m2 = jnp.max(logits, axis=-1, keepdims=True)
    lse = jnp.log(jnp.sum(jnp.exp(logits - m2), axis=-1, keepdims=True)) + m2
    logp_ref[...] = logits - lse                                      # (B*T, C)


# ================================ wrapper =====================================
def _const_spec(shape):
    return pl.BlockSpec(shape, lambda i, tgt: tuple(0 for _ in shape))


@jax.jit
def decoder_rnn_forward(targets, encoder_outputs, params):
    """Teacher-forcing forward (teacher_forcing_ratio=1.0, eval mode).

    targets: (B, T) int32, eos tokens already removed (as in the torch module).
    encoder_outputs: (B, S, H) float32.
    Returns (predicted_log_probs (B,T,C), attn (num_heads*B,T,S), context (B,T,H)).
    """
    enc_flat = encoder_outputs.reshape(B * S, H)     # free contiguous reshape

    grid_spec = pltpu.PrefetchScalarGridSpec(
        num_scalar_prefetch=1,                       # targets -> SMEM
        grid=(1,),
        in_specs=[
            _const_spec((C, H)),                     # embedding table
            _const_spec((2 * H, 4 * H)), _const_spec((1, 4 * H)),   # LSTM layer 0
            _const_spec((2 * H, 4 * H)), _const_spec((1, 4 * H)),   # LSTM layer 1
            _const_spec((B * S, H)),                 # encoder outputs (flat)
            _const_spec((H, H)), _const_spec((1, H)),  # Wq, bq
            _const_spec((H, H)), _const_spec((1, H)),  # Wk, bk
            _const_spec((H, H)), _const_spec((1, H)),  # Wv, bv
            _const_spec((2 * H, H)), _const_spec((1, H)),  # fc1
            _const_spec((H, C)), _const_spec((1, C)),      # fc2
        ],
        out_specs=(
            _const_spec((B * T, C)),                         # log-probs (flat)
            _const_spec((NUM_HEADS * B * T, S)),             # attention (flat)
            _const_spec((B * T, H)),                         # context (flat)
        ),
        scratch_shapes=[
            pltpu.VMEM((B, H), jnp.float32),        # per-step embedded input
            pltpu.VMEM((B * T, H), jnp.float32),    # LSTM top-layer outputs
        ],
    )

    logp_flat, attn_flat, ctx_flat = pl.pallas_call(
        fused_decoder_kernel,
        out_shape=(
            jax.ShapeDtypeStruct((B * T, C), jnp.float32),
            jax.ShapeDtypeStruct((NUM_HEADS * B * T, S), jnp.float32),
            jax.ShapeDtypeStruct((B * T, H), jnp.float32),
        ),
        grid_spec=grid_spec,
        compiler_params=pltpu.CompilerParams(
            dimension_semantics=("arbitrary",)),
    )(targets, params["emb"],
      params["w_lstm0"], params["b_lstm0"], params["w_lstm1"], params["b_lstm1"],
      enc_flat,
      params["wq"], params["bq"], params["wk"], params["bk"],
      params["wv"], params["bv"],
      params["fc1_w"], params["fc1_b"], params["fc2_w"], params["fc2_b"])

    # Free leading-dim reshapes back to the PyTorch shapes.
    logp = logp_flat.reshape(B, T, C)
    attn = attn_flat.reshape(NUM_HEADS * B, T, S)   # head-major, matches KoSpeech MHA
    ctx = ctx_flat.reshape(B, T, H)
    return logp, attn, ctx


# ========================== parameter init / conversion ========================
def stack_lstm_layer(w_ih, w_hh, b_ih, b_hh):
    """Explicit conversion from PyTorch LSTM layout (gate order [i,f,g,o]):
       w_ih: (4H, in), w_hh: (4H, H), b_ih/b_hh: (4H,)
    to the fused layout used by the kernel:  z = concat([x, h]) @ W + b,
       W: (in + H, 4H),  b: (1, 4H) = b_ih + b_hh."""
    w = jnp.concatenate([w_ih.T, w_hh.T], axis=0).astype(jnp.float32)
    b = (b_ih + b_hh).reshape(1, -1).astype(jnp.float32)
    return w, b


def init_params(key):
    def u(k, shape, scale=0.1):
        return scale * jax.random.uniform(k, shape, jnp.float32, -1.0, 1.0)

    ks = jax.random.split(key, 19)
    # PyTorch-layout LSTM weights, then convert explicitly.
    w_lstm0, b_lstm0 = stack_lstm_layer(u(ks[1], (4 * H, H)), u(ks[2], (4 * H, H)),
                                        u(ks[3], (4 * H,)), u(ks[4], (4 * H,)))
    w_lstm1, b_lstm1 = stack_lstm_layer(u(ks[5], (4 * H, H)), u(ks[6], (4 * H, H)),
                                        u(ks[7], (4 * H,)), u(ks[8], (4 * H,)))
    return {
        "emb": u(ks[0], (C, H)),
        "w_lstm0": w_lstm0, "b_lstm0": b_lstm0,
        "w_lstm1": w_lstm1, "b_lstm1": b_lstm1,
        # attention projections in (in, out) layout (PyTorch weight.T):
        "wq": u(ks[9], (H, H)), "bq": u(ks[10], (1, H)),
        "wk": u(ks[11], (H, H)), "bk": u(ks[12], (1, H)),
        "wv": u(ks[13], (H, H)), "bv": u(ks[14], (1, H)),
        # fc: Linear(2H -> H), tanh, Linear(H -> C)
        "fc1_w": u(ks[15], (2 * H, H)), "fc1_b": u(ks[16], (1, H)),
        "fc2_w": u(ks[17], (H, C)), "fc2_b": u(ks[18], (1, C)),
    }


# ============================ pure-JAX reference ==============================
def reference_forward(targets, encoder_outputs, params):
    emb = jnp.take(params["emb"], targets, axis=0)                  # (B, T, H)

    def cell(x, h, c, w, b):
        z = jnp.concatenate([x, h], axis=-1) @ w + b
        i = jax.nn.sigmoid(z[:, :H]); f = jax.nn.sigmoid(z[:, H:2 * H])
        g = jnp.tanh(z[:, 2 * H:3 * H]); o = jax.nn.sigmoid(z[:, 3 * H:])
        c = f * c + i * g
        return o * jnp.tanh(c), c

    h0 = c0 = h1 = c1 = jnp.zeros((B, H), jnp.float32)
    outs = []
    for t in range(T):
        h0, c0 = cell(emb[:, t, :], h0, c0, params["w_lstm0"], params["b_lstm0"])
        h1, c1 = cell(h0, h1, c1, params["w_lstm1"], params["b_lstm1"])
        outs.append(h1)
    dec = jnp.stack(outs, axis=1)                                    # (B, T, H)

    q = dec @ params["wq"] + params["bq"]
    k = encoder_outputs @ params["wk"] + params["bk"]
    v = encoder_outputs @ params["wv"] + params["bv"]
    qh = q.reshape(B, T, NUM_HEADS, D_HEAD).transpose(2, 0, 1, 3)
    kh = k.reshape(B, S, NUM_HEADS, D_HEAD).transpose(2, 0, 1, 3)
    vh = v.reshape(B, S, NUM_HEADS, D_HEAD).transpose(2, 0, 1, 3)
    scores = jnp.einsum("hbtd,hbsd->hbts", qh, kh) / math.sqrt(D_HEAD)
    a = jax.nn.softmax(scores, axis=-1)                              # (NH, B, T, S)
    ctxh = jnp.einsum("hbts,hbsd->hbtd", a, vh)
    ctx = jnp.concatenate([ctxh[h] for h in range(NUM_HEADS)], axis=-1)   # (B, T, H)

    cat = jnp.concatenate([dec, ctx], axis=-1)
    hid = jnp.tanh(cat @ params["fc1_w"] + params["fc1_b"])
    logits = hid @ params["fc2_w"] + params["fc2_b"]
    logp = jax.nn.log_softmax(logits, axis=-1)
    return logp, a.reshape(NUM_HEADS * B, T, S), ctx


# ===================================== main ====================================
if __name__ == "__main__":
    key = jax.random.PRNGKey(0)
    kp, kt, ke = jax.random.split(key, 3)

    params = init_params(kp)
    # targets avoid pad/sos/eos ids (0,1,2) -> plays the role of eos-filtered targets
    targets = jax.random.randint(kt, (B, T), 3, C, dtype=jnp.int32)
    encoder_outputs = jax.random.normal(ke, (B, S, H), dtype=jnp.float32)

    logp, attn, ctx = decoder_rnn_forward(targets, encoder_outputs, params)
    jax.block_until_ready((logp, attn, ctx))

    assert logp.shape == (B, T, C)
    assert attn.shape == (NUM_HEADS * B, T, S)
    assert ctx.shape == (B, T, H)
    # log_softmax rows should sum to ~1 in prob space
    assert bool(jnp.all(jnp.abs(jnp.sum(jnp.exp(logp), axis=-1) - 1.0) < 1e-3))
    # attention rows should sum to ~1 (approx reciprocal -> slightly looser tol)
    assert bool(jnp.all(jnp.abs(jnp.sum(attn, axis=-1) - 1.0) < 1e-2))

    # Compare against the pure-JAX reference (tolerance covers approx reciprocal).
    ref_logp, ref_attn, ref_ctx = reference_forward(targets, encoder_outputs, params)
    assert bool(jnp.max(jnp.abs(logp - ref_logp)) < 5e-2)
    assert bool(jnp.max(jnp.abs(attn - ref_attn)) < 5e-2)
    assert bool(jnp.max(jnp.abs(ctx - ref_ctx)) < 5e-2)

    print("KERNEL_OK")
</pallas_src>

<mosaic_0001>
module attributes {stable_mosaic.version = 11 : i64} {
  func.func @fused_decoder_kernel(%arg0: i32, %arg1: memref<2x8xi32, #tpu.memory_space<smem>>, %arg2: memref<16x32xf32, #tpu.memory_space<vmem>>, %arg3: memref<64x128xf32, #tpu.memory_space<vmem>>, %arg4: memref<1x128xf32, #tpu.memory_space<vmem>>, %arg5: memref<64x128xf32, #tpu.memory_space<vmem>>, %arg6: memref<1x128xf32, #tpu.memory_space<vmem>>, %arg7: memref<32x32xf32, #tpu.memory_space<vmem>>, %arg8: memref<32x32xf32, #tpu.memory_space<vmem>>, %arg9: memref<1x32xf32, #tpu.memory_space<vmem>>, %arg10: memref<32x32xf32, #tpu.memory_space<vmem>>, %arg11: memref<1x32xf32, #tpu.memory_space<vmem>>, %arg12: memref<32x32xf32, #tpu.memory_space<vmem>>, %arg13: memref<1x32xf32, #tpu.memory_space<vmem>>, %arg14: memref<64x32xf32, #tpu.memory_space<vmem>>, %arg15: memref<1x32xf32, #tpu.memory_space<vmem>>, %arg16: memref<32x16xf32, #tpu.memory_space<vmem>>, %arg17: memref<1x16xf32, #tpu.memory_space<vmem>>, %arg18: memref<16x16xf32, #tpu.memory_space<vmem>>, %arg19: memref<64x16xf32, #tpu.memory_space<vmem>>, %arg20: memref<16x32xf32, #tpu.memory_space<vmem>>, %arg21: memref<2x32xf32, #tpu.memory_space<vmem>>, %arg22: memref<16x32xf32, #tpu.memory_space<vmem>>) attributes {dimension_semantics = [#tpu.dimension_semantics<arbitrary>], iteration_bounds = array<i64: 1>, scalar_prefetch = 1 : i64, scratch_operands = 2 : i64, tpu.core_type = #tpu.core_type<tc>, window_params = [{pipeline_mode = #tpu.pipeline_mode<synchronous>, transform_indices = @transform_0, window_bounds = array<i64: 16, 32>}, {pipeline_mode = #tpu.pipeline_mode<synchronous>, transform_indices = @transform_1, window_bounds = array<i64: 64, 128>}, {pipeline_mode = #tpu.pipeline_mode<synchronous>, transform_indices = @transform_2, window_bounds = array<i64: 1, 128>}, {pipeline_mode = #tpu.pipeline_mode<synchronous>, transform_indices = @transform_3, window_bounds = array<i64: 64, 128>}, {pipeline_mode = #tpu.pipeline_mode<synchronous>, transform_indices = @transform_4, window_bounds = array<i64: 1, 128>}, {pipeline_mode = #tpu.pipeline_mode<synchronous>, transform_indices = @transform_5, window_bounds = array<i64: 32, 32>}, {pipeline_mode = #tpu.pipeline_mode<synchronous>, transform_indices = @transform_6, window_bounds = array<i64: 32, 32>}, {pipeline_mode = #tpu.pipeline_mode<synchronous>, transform_indices = @transform_7, window_bounds = array<i64: 1, 32>}, {pipeline_mode = #tpu.pipeline_mode<synchronous>, transform_indices = @transform_8, window_bounds = array<i64: 32, 32>}, {pipeline_mode = #tpu.pipeline_mode<synchronous>, transform_indices = @transform_9, window_bounds = array<i64: 1, 32>}, {pipeline_mode = #tpu.pipeline_mode<synchronous>, transform_indices = @transform_10, window_bounds = array<i64: 32, 32>}, {pipeline_mode = #tpu.pipeline_mode<synchronous>, transform_indices = @transform_11, window_bounds = array<i64: 1, 32>}, {pipeline_mode = #tpu.pipeline_mode<synchronous>, transform_indices = @transform_12, window_bounds = array<i64: 64, 32>}, {pipeline_mode = #tpu.pipeline_mode<synchronous>, transform_indices = @transform_13, window_bounds = array<i64: 1, 32>}, {pipeline_mode = #tpu.pipeline_mode<synchronous>, transform_indices = @transform_14, window_bounds = array<i64: 32, 16>}, {pipeline_mode = #tpu.pipeline_mode<synchronous>, transform_indices = @transform_15, window_bounds = array<i64: 1, 16>}, {pipeline_mode = #tpu.pipeline_mode<synchronous>, transform_indices = @transform_16, window_bounds = array<i64: 16, 16>}, {pipeline_mode = #tpu.pipeline_mode<synchronous>, transform_indices = @transform_17, window_bounds = array<i64: 64, 16>}, {pipeline_mode = #tpu.pipeline_mode<synchronous>, transform_indices = @transform_18, window_bounds = array<i64: 16, 32>}]} {
    %cst = arith.constant 0.000000e+00 : f32
    %0 = vector.broadcast %cst : f32 to vector<2x32xf32>
    %cst_0 = arith.constant 0.000000e+00 : f32
    %1 = vector.broadcast %cst_0 : f32 to vector<2x32xf32>
    %cst_1 = arith.constant 0.000000e+00 : f32
    %2 = vector.broadcast %cst_1 : f32 to vector<2x32xf32>
    %cst_2 = arith.constant 0.000000e+00 : f32
    %3 = vector.broadcast %cst_2 : f32 to vector<2x32xf32>
    %c0 = arith.constant 0 : index
    %c0_3 = arith.constant 0 : index
    %4 = memref.load %arg1[%c0, %c0_3] : memref<2x8xi32, #tpu.memory_space<smem>>
    %5 = arith.index_cast %4 : i32 to index
    %c0_4 = arith.constant 0 : index
    %6 = vector.load %arg2[%5, %c0_4] : memref<16x32xf32, #tpu.memory_space<vmem>>, vector<1x32xf32>
    %c0_5 = arith.constant 0 : index
    %c0_6 = arith.constant 0 : index
    %7 = vector.load %arg21[%c0_5, %c0_6] : memref<2x32xf32, #tpu.memory_space<vmem>>, vector<1x32xf32>
    tpu.vector_store %arg21[%c0_5, %c0_6], %6 {strides = array<i32>} : memref<2x32xf32, #tpu.memory_space<vmem>>, vector<1x32xf32>,
    %c1 = arith.constant 1 : index
    %c0_7 = arith.constant 0 : index
    %8 = memref.load %arg1[%c1, %c0_7] : memref<2x8xi32, #tpu.memory_space<smem>>
    %9 = arith.index_cast %8 : i32 to index
    %c0_8 = arith.constant 0 : index
    %10 = vector.load %arg2[%9, %c0_8] : memref<16x32xf32, #tpu.memory_space<vmem>>, vector<1x32xf32>
    %c1_9 = arith.constant 1 : index
    %c0_10 = arith.constant 0 : index
    %11 = vector.load %arg21[%c1_9, %c0_10] : memref<2x32xf32, #tpu.memory_space<vmem>>, vector<1x32xf32>
    tpu.vector_store %arg21[%c1_9, %c0_10], %10 {strides = array<i32>} : memref<2x32xf32, #tpu.memory_space<vmem>>, vector<1x32xf32>,
    %c0_11 = arith.constant 0 : index
    %c0_12 = arith.constant 0 : index
    %12 = vector.load %arg21[%c0_11, %c0_12] : memref<2x32xf32, #tpu.memory_space<vmem>>, vector<2x32xf32>
    %13 = tpu.concatenate %12, %0 in 1 : vector<2x32xf32>, vector<2x32xf32> -> vector<2x64xf32>
    %c0_13 = arith.constant 0 : index
    %c0_14 = arith.constant 0 : index
    %14 = vector.load %arg3[%c0_13, %c0_14] : memref<64x128xf32, #tpu.memory_space<vmem>>, vector<64x128xf32>
    %cst_15 = arith.constant dense<0.000000e+00> : vector<2x128xf32>
    %15 = tpu.matmul %13, %14, %cst_15 {dimension_numbers = #tpu.dot_dimension_numbers<[1], [0], [0], [1], [0, 0, 1, 1], [], []>} : vector<2x64xf32>, vector<64x128xf32>, vector<2x128xf32> -> vector<2x128xf32>
    %c0_16 = arith.constant 0 : index
    %c0_17 = arith.constant 0 : index
    %16 = vector.load %arg4[%c0_16, %c0_17] : memref<1x128xf32, #tpu.memory_space<vmem>>, vector<1x128xf32>
    %17 = vector.broadcast %16 : vector<1x128xf32> to vector<2x128xf32>
    %18 = arith.addf %15, %17 : vector<2x128xf32>
    %19 = vector.extract_strided_slice %18 {offsets = [0, 0], sizes = [2, 32], strides = [1, 1]} : vector<2x128xf32> to vector<2x32xf32>
    %20 = arith.negf %19 : vector<2x32xf32>
    %21 = math.exp %20 : vector<2x32xf32>
    %cst_18 = arith.constant 1.000000e+00 : f32
    %22 = vector.broadcast %cst_18 : f32 to vector<2x32xf32>
    %23 = arith.addf %22, %21 : vector<2x32xf32>
    %24 = arith.divf %22, %23 : vector<2x32xf32>
    %25 = vector.extract_strided_slice %18 {offsets = [0, 32], sizes = [2, 32], strides = [1, 1]} : vector<2x128xf32> to vector<2x32xf32>
    %26 = arith.negf %25 : vector<2x32xf32>
    %27 = math.exp %26 : vector<2x32xf32>
    %cst_19 = arith.constant 1.000000e+00 : f32
    %28 = vector.broadcast %cst_19 : f32 to vector<2x32xf32>
    %29 = arith.addf %28, %27 : vector<2x32xf32>
    %30 = arith.divf %28, %29 : vector<2x32xf32>
    %31 = vector.extract_strided_slice %18 {offsets = [0, 64], sizes = [2, 32], strides = [1, 1]} : vector<2x128xf32> to vector<2x32xf32>
    %32 = math.tanh %31 : vector<2x32xf32>
    %33 = vector.extract_strided_slice %18 {offsets = [0, 96], sizes = [2, 32], strides = [1, 1]} : vector<2x128xf32> to vector<2x32xf32>
    %34 = arith.negf %33 : vector<2x32xf32>
    %35 = math.exp %34 : vector<2x32xf32>
    %cst_20 = arith.constant 1.000000e+00 : f32
    %36 = vector.broadcast %cst_20 : f32 to vector<2x32xf32>
    %37 = arith.addf %36, %35 : vector<2x32xf32>
    %38 = arith.divf %36, %37 : vector<2x32xf32>
    %39 = arith.mulf %30, %1 : vector<2x32xf32>
    %40 = arith.mulf %24, %32 : vector<2x32xf32>
    %41 = arith.addf %39, %40 : vector<2x32xf32>
    %42 = math.tanh %41 : vector<2x32xf32>
    %43 = arith.mulf %38, %42 : vector<2x32xf32>
    %44 = tpu.concatenate %43, %2 in 1 : vector<2x32xf32>, vector<2x32xf32> -> vector<2x64xf32>
    %c0_21 = arith.constant 0 : index
    %c0_22 = arith.constant 0 : index
    %45 = vector.load %arg5[%c0_21, %c0_22] : memref<64x128xf32, #tpu.memory_space<vmem>>, vector<64x128xf32>
    %cst_23 = arith.constant dense<0.000000e+00> : vector<2x128xf32>
    %46 = tpu.matmul %44, %45, %cst_23 {dimension_numbers = #tpu.dot_dimension_numbers<[1], [0], [0], [1], [0, 0, 1, 1], [], []>} : vector<2x64xf32>, vector<64x128xf32>, vector<2x128xf32> -> vector<2x128xf32>
    %c0_24 = arith.constant 0 : index
    %c0_25 = arith.constant 0 : index
    %47 = vector.load %arg6[%c0_24, %c0_25] : memref<1x128xf32, #tpu.memory_space<vmem>>, vector<1x128xf32>
    %48 = vector.broadcast %47 : vector<1x128xf32> to vector<2x128xf32>
    %49 = arith.addf %46, %48 : vector<2x128xf32>
    %50 = vector.extract_strided_slice %49 {offsets = [0, 0], sizes = [2, 32], strides = [1, 1]} : vector<2x128xf32> to vector<2x32xf32>
    %51 = arith.negf %50 : vector<2x32xf32>
    %52 = math.exp %51 : vector<2x32xf32>
    %cst_26 = arith.constant 1.000000e+00 : f32
    %53 = vector.broadcast %cst_26 : f32 to vector<2x32xf32>
    %54 = arith.addf %53, %52 : vector<2x32xf32>
    %55 = arith.divf %53, %54 : vector<2x32xf32>
    %56 = vector.extract_strided_slice %49 {offsets = [0, 32], sizes = [2, 32], strides = [1, 1]} : vector<2x128xf32> to vector<2x32xf32>
    %57 = arith.negf %56 : vector<2x32xf32>
    %58 = math.exp %57 : vector<2x32xf32>
    %cst_27 = arith.constant 1.000000e+00 : f32
    %59 = vector.broadcast %cst_27 : f32 to vector<2x32xf32>
    %60 = arith.addf %59, %58 : vector<2x32xf32>
    %61 = arith.divf %59, %60 : vector<2x32xf32>
    %62 = vector.extract_strided_slice %49 {offsets = [0, 64], sizes = [2, 32], strides = [1, 1]} : vector<2x128xf32> to vector<2x32xf32>
    %63 = math.tanh %62 : vector<2x32xf32>
    %64 = vector.extract_strided_slice %49 {offsets = [0, 96], sizes = [2, 32], strides = [1, 1]} : vector<2x128xf32> to vector<2x32xf32>
    %65 = arith.negf %64 : vector<2x32xf32>
    %66 = math.exp %65 : vector<2x32xf32>
    %cst_28 = arith.constant 1.000000e+00 : f32
    %67 = vector.broadcast %cst_28 : f32 to vector<2x32xf32>
    %68 = arith.addf %67, %66 : vector<2x32xf32>
    %69 = arith.divf %67, %68 : vector<2x32xf32>
    %70 = arith.mulf %61, %3 : vector<2x32xf32>
    %71 = arith.mulf %55, %63 : vector<2x32xf32>
    %72 = arith.addf %70, %71 : vector<2x32xf32>
    %73 = math.tanh %72 : vector<2x32xf32>
    %74 = arith.mulf %69, %73 : vector<2x32xf32>
    %75 = vector.extract_strided_slice %74 {offsets = [0, 0], sizes = [1, 32], strides = [1, 1]} : vector<2x32xf32> to vector<1x32xf32>
    %c0_29 = arith.constant 0 : index
    %c0_30 = arith.constant 0 : index
    %76 = vector.load %arg22[%c0_29, %c0_30] : memref<16x32xf32, #tpu.memory_space<vmem>>, vector<1x32xf32>
    tpu.vector_store %arg22[%c0_29, %c0_30], %75 {strides = array<i32>} : memref<16x32xf32, #tpu.memory_space<vmem>>, vector<1x32xf32>,
    %77 = vector.extract_strided_slice %74 {offsets = [1, 0], sizes = [1, 32], strides = [1, 1]} : vector<2x32xf32> to vector<1x32xf32>
    %c8 = arith.constant 8 : index
    %c0_31 = arith.constant 0 : index
    %78 = vector.load %arg22[%c8, %c0_31] : memref<16x32xf32, #tpu.memory_space<vmem>>, vector<1x32xf32>
    tpu.vector_store %arg22[%c8, %c0_31], %77 {strides = array<i32>} : memref<16x32xf32, #tpu.memory_space<vmem>>, vector<1x32xf32>,
    %c0_32 = arith.constant 0 : index
    %c1_33 = arith.constant 1 : index
    %79 = memref.load %arg1[%c0_32, %c1_33] : memref<2x8xi32, #tpu.memory_space<smem>>
    %80 = arith.index_cast %79 : i32 to index
    %c0_34 = arith.constant 0 : index
    %81 = vector.load %arg2[%80, %c0_34] : memref<16x32xf32, #tpu.memory_space<vmem>>, vector<1x32xf32>
    %c0_35 = arith.constant 0 : index
    %c0_36 = arith.constant 0 : index
    %82 = vector.load %arg21[%c0_35, %c0_36] : memref<2x32xf32, #tpu.memory_space<vmem>>, vector<1x32xf32>
    tpu.vector_store %arg21[%c0_35, %c0_36], %81 {strides = array<i32>} : memref<2x32xf32, #tpu.memory_space<vmem>>, vector<1x32xf32>,
    %c1_37 = arith.constant 1 : index
    %c1_38 = arith.constant 1 : index
    %83 = memref.load %arg1[%c1_37, %c1_38] : memref<2x8xi32, #tpu.memory_space<smem>>
    %84 = arith.index_cast %83 : i32 to index
    %c0_39 = arith.constant 0 : index
    %85 = vector.load %arg2[%84, %c0_39] : memref<16x32xf32, #tpu.memory_space<vmem>>, vector<1x32xf32>
    %c1_40 = arith.constant 1 : index
    %c0_41 = arith.constant 0 : index
    %86 = vector.load %arg21[%c1_40, %c0_41] : memref<2x32xf32, #tpu.memory_space<vmem>>, vector<1x32xf32>
    tpu.vector_store %arg21[%c1_40, %c0_41], %85 {strides = array<i32>} : memref<2x32xf32, #tpu.memory_space<vmem>>, vector<1x32xf32>,
    %c0_42 = arith.constant 0 : index
    %c0_43 = arith.constant 0 : index
    %87 = vector.load %arg21[%c0_42, %c0_43] : memref<2x32xf32, #tpu.memory_space<vmem>>, vector<2x32xf32>
    %88 = tpu.concatenate %87, %43 in 1 : vector<2x32xf32>, vector<2x32xf32> -> vector<2x64xf32>
    %c0_44 = arith.constant 0 : index
    %c0_45 = arith.constant 0 : index
    %89 = vector.load %arg3[%c0_44, %c0_45] : memref<64x128xf32, #tpu.memory_space<vmem>>, vector<64x128xf32>
    %cst_46 = arith.constant dense<0.000000e+00> : vector<2x128xf32>
    %90 = tpu.matmul %88, %89, %cst_46 {dimension_numbers = #tpu.dot_dimension_numbers<[1], [0], [0], [1], [0, 0, 1, 1], [], []>} : vector<2x64xf32>, vector<64x128xf32>, vector<2x128xf32> -> vector<2x128xf32>
    %c0_47 = arith.constant 0 : index
    %c0_48 = arith.constant 0 : index
    %91 = vector.load %arg4[%c0_47, %c0_48] : memref<1x128xf32, #tpu.memory_space<vmem>>, vector<1x128xf32>
    %92 = vector.broadcast %91 : vector<1x128xf32> to vector<2x128xf32>
    %93 = arith.addf %90, %92 : vector<2x128xf32>
    %94 = vector.extract_strided_slice %93 {offsets = [0, 0], sizes = [2, 32], strides = [1, 1]} : vector<2x128xf32> to vector<2x32xf32>
    %95 = arith.negf %94 : vector<2x32xf32>
    %96 = math.exp %95 : vector<2x32xf32>
    %cst_49 = arith.constant 1.000000e+00 : f32
    %97 = vector.broadcast %cst_49 : f32 to vector<2x32xf32>
    %98 = arith.addf %97, %96 : vector<2x32xf32>
    %99 = arith.divf %97, %98 : vector<2x32xf32>
    %100 = vector.extract_strided_slice %93 {offsets = [0, 32], sizes = [2, 32], strides = [1, 1]} : vector<2x128xf32> to vector<2x32xf32>
    %101 = arith.negf %100 : vector<2x32xf32>
    %102 = math.exp %101 : vector<2x32xf32>
    %cst_50 = arith.constant 1.000000e+00 : f32
    %103 = vector.broadcast %cst_50 : f32 to vector<2x32xf32>
    %104 = arith.addf %103, %102 : vector<2x32xf32>
    %105 = arith.divf %103, %104 : vector<2x32xf32>
    %106 = vector.extract_strided_slice %93 {offsets = [0, 64], sizes = [2, 32], strides = [1, 1]} : vector<2x128xf32> to vector<2x32xf32>
    %107 = math.tanh %106 : vector<2x32xf32>
    %108 = vector.extract_strided_slice %93 {offsets = [0, 96], sizes = [2, 32], strides = [1, 1]} : vector<2x128xf32> to vector<2x32xf32>
    %109 = arith.negf %108 : vector<2x32xf32>
    %110 = math.exp %109 : vector<2x32xf32>
    %cst_51 = arith.constant 1.000000e+00 : f32
    %111 = vector.broadcast %cst_51 : f32 to vector<2x32xf32>
    %112 = arith.addf %111, %110 : vector<2x32xf32>
    %113 = arith.divf %111, %112 : vector<2x32xf32>
    %114 = arith.mulf %105, %41 : vector<2x32xf32>
    %115 = arith.mulf %99, %107 : vector<2x32xf32>
    %116 = arith.addf %114, %115 : vector<2x32xf32>
    %117 = math.tanh %116 : vector<2x32xf32>
    %118 = arith.mulf %113, %117 : vector<2x32xf32>
    %119 = tpu.concatenate %118, %74 in 1 : vector<2x32xf32>, vector<2x32xf32> -> vector<2x64xf32>
    %c0_52 = arith.constant 0 : index
    %c0_53 = arith.constant 0 : index
    %120 = vector.load %arg5[%c0_52, %c0_53] : memref<64x128xf32, #tpu.memory_space<vmem>>, vector<64x128xf32>
    %cst_54 = arith.constant dense<0.000000e+00> : vector<2x128xf32>
    %121 = tpu.matmul %119, %120, %cst_54 {dimension_numbers = #tpu.dot_dimension_numbers<[1], [0], [0], [1], [0, 0, 1, 1], [], []>} : vector<2x64xf32>, vector<64x128xf32>, vector<2x128xf32> -> vector<2x128xf32>
    %c0_55 = arith.constant 0 : index
    %c0_56 = arith.constant 0 : index
    %122 = vector.load %arg6[%c0_55, %c0_56] : memref<1x128xf32, #tpu.memory_space<vmem>>, vector<1x128xf32>
    %123 = vector.broadcast %122 : vector<1x128xf32> to vector<2x128xf32>
    %124 = arith.addf %121, %123 : vector<2x128xf32>
    %125 = vector.extract_strided_slice %124 {offsets = [0, 0], sizes = [2, 32], strides = [1, 1]} : vector<2x128xf32> to vector<2x32xf32>
    %126 = arith.negf %125 : vector<2x32xf32>
    %127 = math.exp %126 : vector<2x32xf32>
    %cst_57 = arith.constant 1.000000e+00 : f32
    %128 = vector.broadcast %cst_57 : f32 to vector<2x32xf32>
    %129 = arith.addf %128, %127 : vector<2x32xf32>
    %130 = arith.divf %128, %129 : vector<2x32xf32>
    %131 = vector.extract_strided_slice %124 {offsets = [0, 32], sizes = [2, 32], strides = [1, 1]} : vector<2x128xf32> to vector<2x32xf32>
    %132 = arith.negf %131 : vector<2x32xf32>
    %133 = math.exp %132 : vector<2x32xf32>
    %cst_58 = arith.constant 1.000000e+00 : f32
    %134 = vector.broadcast %cst_58 : f32 to vector<2x32xf32>
    %135 = arith.addf %134, %133 : vector<2x32xf32>
    %136 = arith.divf %134, %135 : vector<2x32xf32>
    %137 = vector.extract_strided_slice %124 {offsets = [0, 64], sizes = [2, 32], strides = [1, 1]} : vector<2x128xf32> to vector<2x32xf32>
    %138 = math.tanh %137 : vector<2x32xf32>
    %139 = vector.extract_strided_slice %124 {offsets = [0, 96], sizes = [2, 32], strides = [1, 1]} : vector<2x128xf32> to vector<2x32xf32>
    %140 = arith.negf %139 : vector<2x32xf32>
    %141 = math.exp %140 : vector<2x32xf32>
    %cst_59 = arith.constant 1.000000e+00 : f32
    %142 = vector.broadcast %cst_59 : f32 to vector<2x32xf32>
    %143 = arith.addf %142, %141 : vector<2x32xf32>
    %144 = arith.divf %142, %143 : vector<2x32xf32>
    %145 = arith.mulf %136, %72 : vector<2x32xf32>
    %146 = arith.mulf %130, %138 : vector<2x32xf32>
    %147 = arith.addf %145, %146 : vector<2x32xf32>
    %148 = math.tanh %147 : vector<2x32xf32>
    %149 = arith.mulf %144, %148 : vector<2x32xf32>
    %150 = vector.extract_strided_slice %149 {offsets = [0, 0], sizes = [1, 32], strides = [1, 1]} : vector<2x32xf32> to vector<1x32xf32>
    %c1_60 = arith.constant 1 : index
    %c0_61 = arith.constant 0 : index
    %151 = vector.load %arg22[%c1_60, %c0_61] : memref<16x32xf32, #tpu.memory_space<vmem>>, vector<1x32xf32>
    tpu.vector_store %arg22[%c1_60, %c0_61], %150 {strides = array<i32>} : memref<16x32xf32, #tpu.memory_space<vmem>>, vector<1x32xf32>,
    %152 = vector.extract_strided_slice %149 {offsets = [1, 0], sizes = [1, 32], strides = [1, 1]} : vector<2x32xf32> to vector<1x32xf32>
    %c9 = arith.constant 9 : index
    %c0_62 = arith.constant 0 : index
    %153 = vector.load %arg22[%c9, %c0_62] : memref<16x32xf32, #tpu.memory_space<vmem>>, vector<1x32xf32>
    tpu.vector_store %arg22[%c9, %c0_62], %152 {strides = array<i32>} : memref<16x32xf32, #tpu.memory_space<vmem>>, vector<1x32xf32>,
    %c0_63 = arith.constant 0 : index
    %c2 = arith.constant 2 : index
    %154 = memref.load %arg1[%c0_63, %c2] : memref<2x8xi32, #tpu.memory_space<smem>>
    %155 = arith.index_cast %154 : i32 to index
    %c0_64 = arith.constant 0 : index
    %156 = vector.load %arg2[%155, %c0_64] : memref<16x32xf32, #tpu.memory_space<vmem>>, vector<1x32xf32>
    %c0_65 = arith.constant 0 : index
    %c0_66 = arith.constant 0 : index
    %157 = vector.load %arg21[%c0_65, %c0_66] : memref<2x32xf32, #tpu.memory_space<vmem>>, vector<1x32xf32>
    tpu.vector_store %arg21[%c0_65, %c0_66], %156 {strides = array<i32>} : memref<2x32xf32, #tpu.memory_space<vmem>>, vector<1x32xf32>,
    %c1_67 = arith.constant 1 : index
    %c2_68 = arith.constant 2 : index
    %158 = memref.load %arg1[%c1_67, %c2_68] : memref<2x8xi32, #tpu.memory_space<smem>>
    %159 = arith.index_cast %158 : i32 to index
    %c0_69 = arith.constant 0 : index
    %160 = vector.load %arg2[%159, %c0_69] : memref<16x32xf32, #tpu.memory_space<vmem>>, vector<1x32xf32>
    %c1_70 = arith.constant 1 : index
    %c0_71 = arith.constant 0 : index
    %161 = vector.load %arg21[%c1_70, %c0_71] : memref<2x32xf32, #tpu.memory_space<vmem>>, vector<1x32xf32>
    tpu.vector_store %arg21[%c1_70, %c0_71], %160 {strides = array<i32>} : memref<2x32xf32, #tpu.memory_space<vmem>>, vector<1x32xf32>,
    %c0_72 = arith.constant 0 : index
    %c0_73 = arith.constant 0 : index
    %162 = vector.load %arg21[%c0_72, %c0_73] : memref<2x32xf32, #tpu.memory_space<vmem>>, vector<2x32xf32>
    %163 = tpu.concatenate %162, %118 in 1 : vector<2x32xf32>, vector<2x32xf32> -> vector<2x64xf32>
    %c0_74 = arith.constant 0 : index
    %c0_75 = arith.constant 0 : index
    %164 = vector.load %arg3[%c0_74, %c0_75] : memref<64x128xf32, #tpu.memory_space<vmem>>, vector<64x128xf32>
    %cst_76 = arith.constant dense<0.000000e+00> : vector<2x128xf32>
    %165 = tpu.matmul %163, %164, %cst_76 {dimension_numbers = #tpu.dot_dimension_numbers<[1], [0], [0], [1], [0, 0, 1, 1], [], []>} : vector<2x64xf32>, vector<64x128xf32>, vector<2x128xf32> -> vector<2x128xf32>
    %c0_77 = arith.constant 0 : index
    %c0_78 = arith.constant 0 : index
    %166 = vector.load %arg4[%c0_77, %c0_78] : memref<1x128xf32, #tpu.memory_space<vmem>>, vector<1x128xf32>
    %167 = vector.broadcast %166 : vector<1x128xf32> to vector<2x128xf32>
    %168 = arith.addf %165, %167 : vector<2x128xf32>
    %169 = vector.extract_strided_slice %168 {offsets = [0, 0], sizes = [2, 32], strides = [1, 1]} : vector<2x128xf32> to vector<2x32xf32>
    %170 = arith.negf %169 : vector<2x32xf32>
    %171 = math.exp %170 : vector<2x32xf32>
    %cst_79 = arith.constant 1.000000e+00 : f32
    %172 = vector.broadcast %cst_79 : f32 to vector<2x32xf32>
    %173 = arith.addf %172, %171 : vector<2x32xf32>
    %174 = arith.divf %172, %173 : vector<2x32xf32>
    %175 = vector.extract_strided_slice %168 {offsets = [0, 32], sizes = [2, 32], strides = [1, 1]} : vector<2x128xf32> to vector<2x32xf32>
    %176 = arith.negf %175 : vector<2x32xf32>
    %177 = math.exp %176 : vector<2x32xf32>
    %cst_80 = arith.constant 1.000000e+00 : f32
    %178 = vector.broadcast %cst_80 : f32 to vector<2x32xf32>
    %179 = arith.addf %178, %177 : vector<2x32xf32>
    %180 = arith.divf %178, %179 : vector<2x32xf32>
    %181 = vector.extract_strided_slice %168 {offsets = [0, 64], sizes = [2, 32], strides = [1, 1]} : vector<2x128xf32> to vector<2x32xf32>
    %182 = math.tanh %181 : vector<2x32xf32>
    %183 = vector.extract_strided_slice %168 {offsets = [0, 96], sizes = [2, 32], strides = [1, 1]} : vector<2x128xf32> to vector<2x32xf32>
    %184 = arith.negf %183 : vector<2x32xf32>
    %185 = math.exp %184 : vector<2x32xf32>
    %cst_81 = arith.constant 1.000000e+00 : f32
    %186 = vector.broadcast %cst_81 : f32 to vector<2x32xf32>
    %187 = arith.addf %186, %185 : vector<2x32xf32>
    %188 = arith.divf %186, %187 : vector<2x32xf32>
    %189 = arith.mulf %180, %116 : vector<2x32xf32>
    %190 = arith.mulf %174, %182 : vector<2x32xf32>
    %191 = arith.addf %189, %190 : vector<2x32xf32>
    %192 = math.tanh %191 : vector<2x32xf32>
    %193 = arith.mulf %188, %192 : vector<2x32xf32>
    %194 = tpu.concatenate %193, %149 in 1 : vector<2x32xf32>, vector<2x32xf32> -> vector<2x64xf32>
    %c0_82 = arith.constant 0 : index
    %c0_83 = arith.constant 0 : index
    %195 = vector.load %arg5[%c0_82, %c0_83] : memref<64x128xf32, #tpu.memory_space<vmem>>, vector<64x128xf32>
    %cst_84 = arith.constant dense<0.000000e+00> : vector<2x128xf32>
    %196 = tpu.matmul %194, %195, %cst_84 {dimension_numbers = #tpu.dot_dimension_numbers<[1], [0], [0], [1], [0, 0, 1, 1], [], []>} : vector<2x64xf32>, vector<64x128xf32>, vector<2x128xf32> -> vector<2x128xf32>
    %c0_85 = arith.constant 0 : index
    %c0_86 = arith.constant 0 : index
    %197 = vector.load %arg6[%c0_85, %c0_86] : memref<1x128xf32, #tpu.memory_space<vmem>>, vector<1x128xf32>
    %198 = vector.broadcast %197 : vector<1x128xf32> to vector<2x128xf32>
    %199 = arith.addf %196, %198 : vector<2x128xf32>
    %200 = vector.extract_strided_slice %199 {offsets = [0, 0], sizes = [2, 32], strides = [1, 1]} : vector<2x128xf32> to vector<2x32xf32>
    %201 = arith.negf %200 : vector<2x32xf32>
    %202 = math.exp %201 : vector<2x32xf32>
    %cst_87 = arith.constant 1.000000e+00 : f32
    %203 = vector.broadcast %cst_87 : f32 to vector<2x32xf32>
    %204 = arith.addf %203, %202 : vector<2x32xf32>
    %205 = arith.divf %203, %204 : vector<2x32xf32>
    %206 = vector.extract_strided_slice %199 {offsets = [0, 32], sizes = [2, 32], strides = [1, 1]} : vector<2x128xf32> to vector<2x32xf32>
    %207 = arith.negf %206 : vector<2x32xf32>
    %208 = math.exp %207 : vector<2x32xf32>
    %cst_88 = arith.constant 1.000000e+00 : f32
    %209 = vector.broadcast %cst_88 : f32 to vector<2x32xf32>
    %210 = arith.addf %209, %208 : vector<2x32xf32>
    %211 = arith.divf %209, %210 : vector<2x32xf32>
    %212 = vector.extract_strided_slice %199 {offsets = [0, 64], sizes = [2, 32], strides = [1, 1]} : vector<2x128xf32> to vector<2x32xf32>
    %213 = math.tanh %212 : vector<2x32xf32>
    %214 = vector.extract_strided_slice %199 {offsets = [0, 96], sizes = [2, 32], strides = [1, 1]} : vector<2x128xf32> to vector<2x32xf32>
    %215 = arith.negf %214 : vector<2x32xf32>
    %216 = math.exp %215 : vector<2x32xf32>
    %cst_89 = arith.constant 1.000000e+00 : f32
    %217 = vector.broadcast %cst_89 : f32 to vector<2x32xf32>
    %218 = arith.addf %217, %216 : vector<2x32xf32>
    %219 = arith.divf %217, %218 : vector<2x32xf32>
    %220 = arith.mulf %211, %147 : vector<2x32xf32>
    %221 = arith.mulf %205, %213 : vector<2x32xf32>
    %222 = arith.addf %220, %221 : vector<2x32xf32>
    %223 = math.tanh %222 : vector<2x32xf32>
    %224 = arith.mulf %219, %223 : vector<2x32xf32>
    %225 = vector.extract_strided_slice %224 {offsets = [0, 0], sizes = [1, 32], strides = [1, 1]} : vector<2x32xf32> to vector<1x32xf32>
    %c2_90 = arith.constant 2 : index
    %c0_91 = arith.constant 0 : index
    %226 = vector.load %arg22[%c2_90, %c0_91] : memref<16x32xf32, #tpu.memory_space<vmem>>, vector<1x32xf32>
    tpu.vector_store %arg22[%c2_90, %c0_91], %225 {strides = array<i32>} : memref<16x32xf32, #tpu.memory_space<vmem>>, vector<1x32xf32>,
    %227 = vector.extract_strided_slice %224 {offsets = [1, 0], sizes = [1, 32], strides = [1, 1]} : vector<2x32xf32> to vector<1x32xf32>
    %c10 = arith.constant 10 : index
    %c0_92 = arith.constant 0 : index
    %228 = vector.load %arg22[%c10, %c0_92] : memref<16x32xf32, #tpu.memory_space<vmem>>, vector<1x32xf32>
    tpu.vector_store %arg22[%c10, %c0_92], %227 {strides = array<i32>} : memref<16x32xf32, #tpu.memory_space<vmem>>, vector<1x32xf32>,
    %c0_93 = arith.constant 0 : index
    %c3 = arith.constant 3 : index
    %229 = memref.load %arg1[%c0_93, %c3] : memref<2x8xi32, #tpu.memory_space<smem>>
    %230 = arith.index_cast %229 : i32 to index
    %c0_94 = arith.constant 0 : index
    %231 = vector.load %arg2[%230, %c0_94] : memref<16x32xf32, #tpu.memory_space<vmem>>, vector<1x32xf32>
    %c0_95 = arith.constant 0 : index
    %c0_96 = arith.constant 0 : index
    %232 = vector.load %arg21[%c0_95, %c0_96] : memref<2x32xf32, #tpu.memory_space<vmem>>, vector<1x32xf32>
    tpu.vector_store %arg21[%c0_95, %c0_96], %231 {strides = array<i32>} : memref<2x32xf32, #tpu.memory_space<vmem>>, vector<1x32xf32>,
    %c1_97 = arith.constant 1 : index
    %c3_98 = arith.constant 3 : index
    %233 = memref.load %arg1[%c1_97, %c3_98] : memref<2x8xi32, #tpu.memory_space<smem>>
    %234 = arith.index_cast %233 : i32 to index
    %c0_99 = arith.constant 0 : index
    %235 = vector.load %arg2[%234, %c0_99] : memref<16x32xf32, #tpu.memory_space<vmem>>, vector<1x32xf32>
    %c1_100 = arith.constant 1 : index
    %c0_101 = arith.constant 0 : index
    %236 = vector.load %arg21[%c1_100, %c0_101] : memref<2x32xf32, #tpu.memory_space<vmem>>, vector<1x32xf32>
    tpu.vector_store %arg21[%c1_100, %c0_101], %235 {strides = array<i32>} : memref<2x32xf32, #tpu.memory_space<vmem>>, vector<1x32xf32>,
    %c0_102 = arith.constant 0 : index
    %c0_103 = arith.constant 0 : index
    %237 = vector.load %arg21[%c0_102, %c0_103] : memref<2x32xf32, #tpu.memory_space<vmem>>, vector<2x32xf32>
    %238 = tpu.concatenate %237, %193 in 1 : vector<2x32xf32>, vector<2x32xf32> -> vector<2x64xf32>
    %c0_104 = arith.constant 0 : index
    %c0_105 = arith.constant 0 : index
    %239 = vector.load %arg3[%c0_104, %c0_105] : memref<64x128xf32, #tpu.memory_space<vmem>>, vector<64x128xf32>
    %cst_106 = arith.constant dense<0.000000e+00> : vector<2x128xf32>
    %240 = tpu.matmul %238, %239, %cst_106 {dimension_numbers = #tpu.dot_dimension_numbers<[1], [0], [0], [1], [0, 0, 1, 1], [], []>} : vector<2x64xf32>, vector<64x128xf32>, vector<2x128xf32> -> vector<2x128xf32>
    %c0_107 = arith.constant 0 : index
    %c0_108 = arith.constant 0 : index
    %241 = vector.load %arg4[%c0_107, %c0_108] : memref<1x128xf32, #tpu.memory_space<vmem>>, vector<1x128xf32>
    %242 = vector.broadcast %241 : vector<1x128xf32> to vector<2x128xf32>
    %243 = arith.addf %240, %242 : vector<2x128xf32>
    %244 = vector.extract_strided_slice %243 {offsets = [0, 0], sizes = [2, 32], strides = [1, 1]} : vector<2x128xf32> to vector<2x32xf32>
    %245 = arith.negf %244 : vector<2x32xf32>
    %246 = math.exp %245 : vector<2x32xf32>
    %cst_109 = arith.constant 1.000000e+00 : f32
    %247 = vector.broadcast %cst_109 : f32 to vector<2x32xf32>
    %248 = arith.addf %247, %246 : vector<2x32xf32>
    %249 = arith.divf %247, %248 : vector<2x32xf32>
    %250 = vector.extract_strided_slice %243 {offsets = [0, 32], sizes = [2, 32], strides = [1, 1]} : vector<2x128xf32> to vector<2x32xf32>
    %251 = arith.negf %250 : vector<2x32xf32>
    %252 = math.exp %251 : vector<2x32xf32>
    %cst_110 = arith.constant 1.000000e+00 : f32
    %253 = vector.broadcast %cst_110 : f32 to vector<2x32xf32>
    %254 = arith.addf %253, %252 : vector<2x32xf32>
    %255 = arith.divf %253, %254 : vector<2x32xf32>
    %256 = vector.extract_strided_slice %243 {offsets = [0, 64], sizes = [2, 32], strides = [1, 1]} : vector<2x128xf32> to vector<2x32xf32>
    %257 = math.tanh %256 : vector<2x32xf32>
    %258 = vector.extract_strided_slice %243 {offsets = [0, 96], sizes = [2, 32], strides = [1, 1]} : vector<2x128xf32> to vector<2x32xf32>
    %259 = arith.negf %258 : vector<2x32xf32>
    %260 = math.exp %259 : vector<2x32xf32>
    %cst_111 = arith.constant 1.000000e+00 : f32
    %261 = vector.broadcast %cst_111 : f32 to vector<2x32xf32>
    %262 = arith.addf %261, %260 : vector<2x32xf32>
    %263 = arith.divf %261, %262 : vector<2x32xf32>
    %264 = arith.mulf %255, %191 : vector<2x32xf32>
    %265 = arith.mulf %249, %257 : vector<2x32xf32>
    %266 = arith.addf %264, %265 : vector<2x32xf32>
    %267 = math.tanh %266 : vector<2x32xf32>
    %268 = arith.mulf %263, %267 : vector<2x32xf32>
    %269 = tpu.concatenate %268, %224 in 1 : vector<2x32xf32>, vector<2x32xf32> -> vector<2x64xf32>
    %c0_112 = arith.constant 0 : index
    %c0_113 = arith.constant 0 : index
    %270 = vector.load %arg5[%c0_112, %c0_113] : memref<64x128xf32, #tpu.memory_space<vmem>>, vector<64x128xf32>
    %cst_114 = arith.constant dense<0.000000e+00> : vector<2x128xf32>
    %271 = tpu.matmul %269, %270, %cst_114 {dimension_numbers = #tpu.dot_dimension_numbers<[1], [0], [0], [1], [0, 0, 1, 1], [], []>} : vector<2x64xf32>, vector<64x128xf32>, vector<2x128xf32> -> vector<2x128xf32>
    %c0_115 = arith.constant 0 : index
    %c0_116 = arith.constant 0 : index
    %272 = vector.load %arg6[%c0_115, %c0_116] : memref<1x128xf32, #tpu.memory_space<vmem>>, vector<1x128xf32>
    %273 = vector.broadcast %272 : vector<1x128xf32> to vector<2x128xf32>
    %274 = arith.addf %271, %273 : vector<2x128xf32>
    %275 = vector.extract_strided_slice %274 {offsets = [0, 0], sizes = [2, 32], strides = [1, 1]} : vector<2x128xf32> to vector<2x32xf32>
    %276 = arith.negf %275 : vector<2x32xf32>
    %277 = math.exp %276 : vector<2x32xf32>
    %cst_117 = arith.constant 1.000000e+00 : f32
    %278 = vector.broadcast %cst_117 : f32 to vector<2x32xf32>
    %279 = arith.addf %278, %277 : vector<2x32xf32>
    %280 = arith.divf %278, %279 : vector<2x32xf32>
    %281 = vector.extract_strided_slice %274 {offsets = [0, 32], sizes = [2, 32], strides = [1, 1]} : vector<2x128xf32> to vector<2x32xf32>
    %282 = arith.negf %281 : vector<2x32xf32>
    %283 = math.exp %282 : vector<2x32xf32>
    %cst_118 = arith.constant 1.000000e+00 : f32
    %284 = vector.broadcast %cst_118 : f32 to vector<2x32xf32>
    %285 = arith.addf %284, %283 : vector<2x32xf32>
    %286 = arith.divf %284, %285 : vector<2x32xf32>
    %287 = vector.extract_strided_slice %274 {offsets = [0, 64], sizes = [2, 32], strides = [1, 1]} : vector<2x128xf32> to vector<2x32xf32>
    %288 = math.tanh %287 : vector<2x32xf32>
    %289 = vector.extract_strided_slice %274 {offsets = [0, 96], sizes = [2, 32], strides = [1, 1]} : vector<2x128xf32> to vector<2x32xf32>
    %290 = arith.negf %289 : vector<2x32xf32>
    %291 = math.exp %290 : vector<2x32xf32>
    %cst_119 = arith.constant 1.000000e+00 : f32
    %292 = vector.broadcast %cst_119 : f32 to vector<2x32xf32>
    %293 = arith.addf %292, %291 : vector<2x32xf32>
    %294 = arith.divf %292, %293 : vector<2x32xf32>
    %295 = arith.mulf %286, %222 : vector<2x32xf32>
    %296 = arith.mulf %280, %288 : vector<2x32xf32>
    %297 = arith.addf %295, %296 : vector<2x32xf32>
    %298 = math.tanh %297 : vector<2x32xf32>
    %299 = arith.mulf %294, %298 : vector<2x32xf32>
    %300 = vector.extract_strided_slice %299 {offsets = [0, 0], sizes = [1, 32], strides = [1, 1]} : vector<2x32xf32> to vector<1x32xf32>
    %c3_120 = arith.constant 3 : index
    %c0_121 = arith.constant 0 : index
    %301 = vector.load %arg22[%c3_120, %c0_121] : memref<16x32xf32, #tpu.memory_space<vmem>>, vector<1x32xf32>
    tpu.vector_store %arg22[%c3_120, %c0_121], %300 {strides = array<i32>} : memref<16x32xf32, #tpu.memory_space<vmem>>, vector<1x32xf32>,
    %302 = vector.extract_strided_slice %299 {offsets = [1, 0], sizes = [1, 32], strides = [1, 1]} : vector<2x32xf32> to vector<1x32xf32>
    %c11 = arith.constant 11 : index
    %c0_122 = arith.constant 0 : index
    %303 = vector.load %arg22[%c11, %c0_122] : memref<16x32xf32, #tpu.memory_space<vmem>>, vector<1x32xf32>
    tpu.vector_store %arg22[%c11, %c0_122], %302 {strides = array<i32>} : memref<16x32xf32, #tpu.memory_space<vmem>>, vector<1x32xf32>,
    %c0_123 = arith.constant 0 : index
    %c4 = arith.constant 4 : index
    %304 = memref.load %arg1[%c0_123, %c4] : memref<2x8xi32, #tpu.memory_space<smem>>
    %305 = arith.index_cast %304 : i32 to index
    %c0_124 = arith.constant 0 : index
    %306 = vector.load %arg2[%305, %c0_124] : memref<16x32xf32, #tpu.memory_space<vmem>>, vector<1x32xf32>
    %c0_125 = arith.constant 0 : index
    %c0_126 = arith.constant 0 : index
    %307 = vector.load %arg21[%c0_125, %c0_126] : memref<2x32xf32, #tpu.memory_space<vmem>>, vector<1x32xf32>
    tpu.vector_store %arg21[%c0_125, %c0_126], %306 {strides = array<i32>} : memref<2x32xf32, #tpu.memory_space<vmem>>, vector<1x32xf32>,
    %c1_127 = arith.constant 1 : index
    %c4_128 = arith.constant 4 : index
    %308 = memref.load %arg1[%c1_127, %c4_128] : memref<2x8xi32, #tpu.memory_space<smem>>
    %309 = arith.index_cast %308 : i32 to index
    %c0_129 = arith.constant 0 : index
    %310 = vector.load %arg2[%309, %c0_129] : memref<16x32xf32, #tpu.memory_space<vmem>>, vector<1x32xf32>
    %c1_130 = arith.constant 1 : index
    %c0_131 = arith.constant 0 : index
    %311 = vector.load %arg21[%c1_130, %c0_131] : memref<2x32xf32, #tpu.memory_space<vmem>>, vector<1x32xf32>
    tpu.vector_store %arg21[%c1_130, %c0_131], %310 {strides = array<i32>} : memref<2x32xf32, #tpu.memory_space<vmem>>, vector<1x32xf32>,
    %c0_132 = arith.constant 0 : index
    %c0_133 = arith.constant 0 : index
    %312 = vector.load %arg21[%c0_132, %c0_133] : memref<2x32xf32, #tpu.memory_space<vmem>>, vector<2x32xf32>
    %313 = tpu.concatenate %312, %268 in 1 : vector<2x32xf32>, vector<2x32xf32> -> vector<2x64xf32>
    %c0_134 = arith.constant 0 : index
    %c0_135 = arith.constant 0 : index
    %314 = vector.load %arg3[%c0_134, %c0_135] : memref<64x128xf32, #tpu.memory_space<vmem>>, vector<64x128xf32>
    %cst_136 = arith.constant dense<0.000000e+00> : vector<2x128xf32>
    %315 = tpu.matmul %313, %314, %cst_136 {dimension_numbers = #tpu.dot_dimension_numbers<[1], [0], [0], [1], [0, 0, 1, 1], [], []>} : vector<2x64xf32>, vector<64x128xf32>, vector<2x128xf32> -> vector<2x128xf32>
    %c0_137 = arith.constant 0 : index
    %c0_138 = arith.constant 0 : index
    %316 = vector.load %arg4[%c0_137, %c0_138] : memref<1x128xf32, #tpu.memory_space<vmem>>, vector<1x128xf32>
    %317 = vector.broadcast %316 : vector<1x128xf32> to vector<2x128xf32>
    %318 = arith.addf %315, %317 : vector<2x128xf32>
    %319 = vector.extract_strided_slice %318 {offsets = [0, 0], sizes = [2, 32], strides = [1, 1]} : vector<2x128xf32> to vector<2x32xf32>
    %320 = arith.negf %319 : vector<2x32xf32>
    %321 = math.exp %320 : vector<2x32xf32>
    %cst_139 = arith.constant 1.000000e+00 : f32
    %322 = vector.broadcast %cst_139 : f32 to vector<2x32xf32>
    %323 = arith.addf %322, %321 : vector<2x32xf32>
    %324 = arith.divf %322, %323 : vector<2x32xf32>
    %325 = vector.extract_strided_slice %318 {offsets = [0, 32], sizes = [2, 32], strides = [1, 1]} : vector<2x128xf32> to vector<2x32xf32>
    %326 = arith.negf %325 : vector<2x32xf32>
    %327 = math.exp %326 : vector<2x32xf32>
    %cst_140 = arith.constant 1.000000e+00 : f32
    %328 = vector.broadcast %cst_140 : f32 to vector<2x32xf32>
    %329 = arith.addf %328, %327 : vector<2x32xf32>
    %330 = arith.divf %328, %329 : vector<2x32xf32>
    %331 = vector.extract_strided_slice %318 {offsets = [0, 64], sizes = [2, 32], strides = [1, 1]} : vector<2x128xf32> to vector<2x32xf32>
    %332 = math.tanh %331 : vector<2x32xf32>
    %333 = vector.extract_strided_slice %318 {offsets = [0, 96], sizes = [2, 32], strides = [1, 1]} : vector<2x128xf32> to vector<2x32xf32>
    %334 = arith.negf %333 : vector<2x32xf32>
    %335 = math.exp %334 : vector<2x32xf32>
    %cst_141 = arith.constant 1.000000e+00 : f32
    %336 = vector.broadcast %cst_141 : f32 to vector<2x32xf32>
    %337 = arith.addf %336, %335 : vector<2x32xf32>
    %338 = arith.divf %336, %337 : vector<2x32xf32>
    %339 = arith.mulf %330, %266 : vector<2x32xf32>
    %340 = arith.mulf %324, %332 : vector<2x32xf32>
    %341 = arith.addf %339, %340 : vector<2x32xf32>
    %342 = math.tanh %341 : vector<2x32xf32>
    %343 = arith.mulf %338, %342 : vector<2x32xf32>
    %344 = tpu.concatenate %343, %299 in 1 : vector<2x32xf32>, vector<2x32xf32> -> vector<2x64xf32>
    %c0_142 = arith.constant 0 : index
    %c0_143 = arith.constant 0 : index
    %345 = vector.load %arg5[%c0_142, %c0_143] : memref<64x128xf32, #tpu.memory_space<vmem>>, vector<64x128xf32>
    %cst_144 = arith.constant dense<0.000000e+00> : vector<2x128xf32>
    %346 = tpu.matmul %344, %345, %cst_144 {dimension_numbers = #tpu.dot_dimension_numbers<[1], [0], [0], [1], [0, 0, 1, 1], [], []>} : vector<2x64xf32>, vector<64x128xf32>, vector<2x128xf32> -> vector<2x128xf32>
    %c0_145 = arith.constant 0 : index
    %c0_146 = arith.constant 0 : index
    %347 = vector.load %arg6[%c0_145, %c0_146] : memref<1x128xf32, #tpu.memory_space<vmem>>, vector<1x128xf32>
    %348 = vector.broadcast %347 : vector<1x128xf32> to vector<2x128xf32>
    %349 = arith.addf %346, %348 : vector<2x128xf32>
    %350 = vector.extract_strided_slice %349 {offsets = [0, 0], sizes = [2, 32], strides = [1, 1]} : vector<2x128xf32> to vector<2x32xf32>
    %351 = arith.negf %350 : vector<2x32xf32>
    %352 = math.exp %351 : vector<2x32xf32>
    %cst_147 = arith.constant 1.000000e+00 : f32
    %353 = vector.broadcast %cst_147 : f32 to vector<2x32xf32>
    %354 = arith.addf %353, %352 : vector<2x32xf32>
    %355 = arith.divf %353, %354 : vector<2x32xf32>
    %356 = vector.extract_strided_slice %349 {offsets = [0, 32], sizes = [2, 32], strides = [1, 1]} : vector<2x128xf32> to vector<2x32xf32>
    %357 = arith.negf %356 : vector<2x32xf32>
    %358 = math.exp %357 : vector<2x32xf32>
    %cst_148 = arith.constant 1.000000e+00 : f32
    %359 = vector.broadcast %cst_148 : f32 to vector<2x32xf32>
    %360 = arith.addf %359, %358 : vector<2x32xf32>
    %361 = arith.divf %359, %360 : vector<2x32xf32>
    %362 = vector.extract_strided_slice %349 {offsets = [0, 64], sizes = [2, 32], strides = [1, 1]} : vector<2x128xf32> to vector<2x32xf32>
    %363 = math.tanh %362 : vector<2x32xf32>
    %364 = vector.extract_strided_slice %349 {offsets = [0, 96], sizes = [2, 32], strides = [1, 1]} : vector<2x128xf32> to vector<2x32xf32>
    %365 = arith.negf %364 : vector<2x32xf32>
    %366 = math.exp %365 : vector<2x32xf32>
    %cst_149 = arith.constant 1.000000e+00 : f32
    %367 = vector.broadcast %cst_149 : f32 to vector<2x32xf32>
    %368 = arith.addf %367, %366 : vector<2x32xf32>
    %369 = arith.divf %367, %368 : vector<2x32xf32>
    %370 = arith.mulf %361, %297 : vector<2x32xf32>
    %371 = arith.mulf %355, %363 : vector<2x32xf32>
    %372 = arith.addf %370, %371 : vector<2x32xf32>
    %373 = math.tanh %372 : vector<2x32xf32>
    %374 = arith.mulf %369, %373 : vector<2x32xf32>
    %375 = vector.extract_strided_slice %374 {offsets = [0, 0], sizes = [1, 32], strides = [1, 1]} : vector<2x32xf32> to vector<1x32xf32>
    %c4_150 = arith.constant 4 : index
    %c0_151 = arith.constant 0 : index
    %376 = vector.load %arg22[%c4_150, %c0_151] : memref<16x32xf32, #tpu.memory_space<vmem>>, vector<1x32xf32>
    tpu.vector_store %arg22[%c4_150, %c0_151], %375 {strides = array<i32>} : memref<16x32xf32, #tpu.memory_space<vmem>>, vector<1x32xf32>,
    %377 = vector.extract_strided_slice %374 {offsets = [1, 0], sizes = [1, 32], strides = [1, 1]} : vector<2x32xf32> to vector<1x32xf32>
    %c12 = arith.constant 12 : index
    %c0_152 = arith.constant 0 : index
    %378 = vector.load %arg22[%c12, %c0_152] : memref<16x32xf32, #tpu.memory_space<vmem>>, vector<1x32xf32>
    tpu.vector_store %arg22[%c12, %c0_152], %377 {strides = array<i32>} : memref<16x32xf32, #tpu.memory_space<vmem>>, vector<1x32xf32>,
    %c0_153 = arith.constant 0 : index
    %c5 = arith.constant 5 : index
    %379 = memref.load %arg1[%c0_153, %c5] : memref<2x8xi32, #tpu.memory_space<smem>>
    %380 = arith.index_cast %379 : i32 to index
    %c0_154 = arith.constant 0 : index
    %381 = vector.load %arg2[%380, %c0_154] : memref<16x32xf32, #tpu.memory_space<vmem>>, vector<1x32xf32>
    %c0_155 = arith.constant 0 : index
    %c0_156 = arith.constant 0 : index
    %382 = vector.load %arg21[%c0_155, %c0_156] : memref<2x32xf32, #tpu.memory_space<vmem>>, vector<1x32xf32>
    tpu.vector_store %arg21[%c0_155, %c0_156], %381 {strides = array<i32>} : memref<2x32xf32, #tpu.memory_space<vmem>>, vector<1x32xf32>,
    %c1_157 = arith.constant 1 : index
    %c5_158 = arith.constant 5 : index
    %383 = memref.load %arg1[%c1_157, %c5_158] : memref<2x8xi32, #tpu.memory_space<smem>>
    %384 = arith.index_cast %383 : i32 to index
    %c0_159 = arith.constant 0 : index
    %385 = vector.load %arg2[%384, %c0_159] : memref<16x32xf32, #tpu.memory_space<vmem>>, vector<1x32xf32>
    %c1_160 = arith.constant 1 : index
    %c0_161 = arith.constant 0 : index
    %386 = vector.load %arg21[%c1_160, %c0_161] : memref<2x32xf32, #tpu.memory_space<vmem>>, vector<1x32xf32>
    tpu.vector_store %arg21[%c1_160, %c0_161], %385 {strides = array<i32>} : memref<2x32xf32, #tpu.memory_space<vmem>>, vector<1x32xf32>,
    %c0_162 = arith.constant 0 : index
    %c0_163 = arith.constant 0 : index
    %387 = vector.load %arg21[%c0_162, %c0_163] : memref<2x32xf32, #tpu.memory_space<vmem>>, vector<2x32xf32>
    %388 = tpu.concatenate %387, %343 in 1 : vector<2x32xf32>, vector<2x32xf32> -> vector<2x64xf32>
    %c0_164 = arith.constant 0 : index
    %c0_165 = arith.constant 0 : index
    %389 = vector.load %arg3[%c0_164, %c0_165] : memref<64x128xf32, #tpu.memory_space<vmem>>, vector<64x128xf32>
    %cst_166 = arith.constant dense<0.000000e+00> : vector<2x128xf32>
    %390 = tpu.matmul %388, %389, %cst_166 {dimension_numbers = #tpu.dot_dimension_numbers<[1], [0], [0], [1], [0, 0, 1, 1], [], []>} : vector<2x64xf32>, vector<64x128xf32>, vector<2x128xf32> -> vector<2x128xf32>
    %c0_167 = arith.constant 0 : index
    %c0_168 = arith.constant 0 : index
    %391 = vector.load %arg4[%c0_167, %c0_168] : memref<1x128xf32, #tpu.memory_space<vmem>>, vector<1x128xf32>
    %392 = vector.broadcast %391 : vector<1x128xf32> to vector<2x128xf32>
    %393 = arith.addf %390, %392 : vector<2x128xf32>
    %394 = vector.extract_strided_slice %393 {offsets = [0, 0], sizes = [2, 32], strides = [1, 1]} : vector<2x128xf32> to vector<2x32xf32>
    %395 = arith.negf %394 : vector<2x32xf32>
    %396 = math.exp %395 : vector<2x32xf32>
    %cst_169 = arith.constant 1.000000e+00 : f32
    %397 = vector.broadcast %cst_169 : f32 to vector<2x32xf32>
    %398 = arith.addf %397, %396 : vector<2x32xf32>
    %399 = arith.divf %397, %398 : vector<2x32xf32>
    %400 = vector.extract_strided_slice %393 {offsets = [0, 32], sizes = [2, 32], strides = [1, 1]} : vector<2x128xf32> to vector<2x32xf32>
    %401 = arith.negf %400 : vector<2x32xf32>
    %402 = math.exp %401 : vector<2x32xf32>
    %cst_170 = arith.constant 1.000000e+00 : f32
    %403 = vector.broadcast %cst_170 : f32 to vector<2x32xf32>
    %404 = arith.addf %403, %402 : vector<2x32xf32>
    %405 = arith.divf %403, %404 : vector<2x32xf32>
    %406 = vector.extract_strided_slice %393 {offsets = [0, 64], sizes = [2, 32], strides = [1, 1]} : vector<2x128xf32> to vector<2x32xf32>
    %407 = math.tanh %406 : vector<2x32xf32>
    %408 = vector.extract_strided_slice %393 {offsets = [0, 96], sizes = [2, 32], strides = [1, 1]} : vector<2x128xf32> to vector<2x32xf32>
    %409 = arith.negf %408 : vector<2x32xf32>
    %410 = math.exp %409 : vector<2x32xf32>
    %cst_171 = arith.constant 1.000000e+00 : f32
    %411 = vector.broadcast %cst_171 : f32 to vector<2x32xf32>
    %412 = arith.addf %411, %410 : vector<2x32xf32>
    %413 = arith.divf %411, %412 : vector<2x32xf32>
    %414 = arith.mulf %405, %341 : vector<2x32xf32>
    %415 = arith.mulf %399, %407 : vector<2x32xf32>
    %416 = arith.addf %414, %415 : vector<2x32xf32>
    %417 = math.tanh %416 : vector<2x32xf32>
    %418 = arith.mulf %413, %417 : vector<2x32xf32>
    %419 = tpu.concatenate %418, %374 in 1 : vector<2x32xf32>, vector<2x32xf32> -> vector<2x64xf32>
    %c0_172 = arith.constant 0 : index
    %c0_173 = arith.constant 0 : index
    %420 = vector.load %arg5[%c0_172, %c0_173] : memref<64x128xf32, #tpu.memory_space<vmem>>, vector<64x128xf32>
    %cst_174 = arith.constant dense<0.000000e+00> : vector<2x128xf32>
    %421 = tpu.matmul %419, %420, %cst_174 {dimension_numbers = #tpu.dot_dimension_numbers<[1], [0], [0], [1], [0, 0, 1, 1], [], []>} : vector<2x64xf32>, vector<64x128xf32>, vector<2x128xf32> -> vector<2x128xf32>
    %c0_175 = arith.constant 0 : index
    %c0_176 = arith.constant 0 : index
    %422 = vector.load %arg6[%c0_175, %c0_176] : memref<1x128xf32, #tpu.memory_space<vmem>>, vector<1x128xf32>
    %423 = vector.broadcast %422 : vector<1x128xf32> to vector<2x128xf32>
    %424 = arith.addf %421, %423 : vector<2x128xf32>
    %425 = vector.extract_strided_slice %424 {offsets = [0, 0], sizes = [2, 32], strides = [1, 1]} : vector<2x128xf32> to vector<2x32xf32>
    %426 = arith.negf %425 : vector<2x32xf32>
    %427 = math.exp %426 : vector<2x32xf32>
    %cst_177 = arith.constant 1.000000e+00 : f32
    %428 = vector.broadcast %cst_177 : f32 to vector<2x32xf32>
    %429 = arith.addf %428, %427 : vector<2x32xf32>
    %430 = arith.divf %428, %429 : vector<2x32xf32>
    %431 = vector.extract_strided_slice %424 {offsets = [0, 32], sizes = [2, 32], strides = [1, 1]} : vector<2x128xf32> to vector<2x32xf32>
    %432 = arith.negf %431 : vector<2x32xf32>
    %433 = math.exp %432 : vector<2x32xf32>
    %cst_178 = arith.constant 1.000000e+00 : f32
    %434 = vector.broadcast %cst_178 : f32 to vector<2x32xf32>
    %435 = arith.addf %434, %433 : vector<2x32xf32>
    %436 = arith.divf %434, %435 : vector<2x32xf32>
    %437 = vector.extract_strided_slice %424 {offsets = [0, 64], sizes = [2, 32], strides = [1, 1]} : vector<2x128xf32> to vector<2x32xf32>
    %438 = math.tanh %437 : vector<2x32xf32>
    %439 = vector.extract_strided_slice %424 {offsets = [0, 96], sizes = [2, 32], strides = [1, 1]} : vector<2x128xf32> to vector<2x32xf32>
    %440 = arith.negf %439 : vector<2x32xf32>
    %441 = math.exp %440 : vector<2x32xf32>
    %cst_179 = arith.constant 1.000000e+00 : f32
    %442 = vector.broadcast %cst_179 : f32 to vector<2x32xf32>
    %443 = arith.addf %442, %441 : vector<2x32xf32>
    %444 = arith.divf %442, %443 : vector<2x32xf32>
    %445 = arith.mulf %436, %372 : vector<2x32xf32>
    %446 = arith.mulf %430, %438 : vector<2x32xf32>
    %447 = arith.addf %445, %446 : vector<2x32xf32>
    %448 = math.tanh %447 : vector<2x32xf32>
    %449 = arith.mulf %444, %448 : vector<2x32xf32>
    %450 = vector.extract_strided_slice %449 {offsets = [0, 0], sizes = [1, 32], strides = [1, 1]} : vector<2x32xf32> to vector<1x32xf32>
    %c5_180 = arith.constant 5 : index
    %c0_181 = arith.constant 0 : index
    %451 = vector.load %arg22[%c5_180, %c0_181] : memref<16x32xf32, #tpu.memory_space<vmem>>, vector<1x32xf32>
    tpu.vector_store %arg22[%c5_180, %c0_181], %450 {strides = array<i32>} : memref<16x32xf32, #tpu.memory_space<vmem>>, vector<1x32xf32>,
    %452 = vector.extract_strided_slice %449 {offsets = [1, 0], sizes = [1, 32], strides = [1, 1]} : vector<2x32xf32> to vector<1x32xf32>
    %c13 = arith.constant 13 : index
    %c0_182 = arith.constant 0 : index
    %453 = vector.load %arg22[%c13, %c0_182] : memref<16x32xf32, #tpu.memory_space<vmem>>, vector<1x32xf32>
    tpu.vector_store %arg22[%c13, %c0_182], %452 {strides = array<i32>} : memref<16x32xf32, #tpu.memory_space<vmem>>, vector<1x32xf32>,
    %c0_183 = arith.constant 0 : index
    %c6 = arith.constant 6 : index
    %454 = memref.load %arg1[%c0_183, %c6] : memref<2x8xi32, #tpu.memory_space<smem>>
    %455 = arith.index_cast %454 : i32 to index
    %c0_184 = arith.constant 0 : index
    %456 = vector.load %arg2[%455, %c0_184] : memref<16x32xf32, #tpu.memory_space<vmem>>, vector<1x32xf32>
    %c0_185 = arith.constant 0 : index
    %c0_186 = arith.constant 0 : index
    %457 = vector.load %arg21[%c0_185, %c0_186] : memref<2x32xf32, #tpu.memory_space<vmem>>, vector<1x32xf32>
    tpu.vector_store %arg21[%c0_185, %c0_186], %456 {strides = array<i32>} : memref<2x32xf32, #tpu.memory_space<vmem>>, vector<1x32xf32>,
    %c1_187 = arith.constant 1 : index
    %c6_188 = arith.constant 6 : index
    %458 = memref.load %arg1[%c1_187, %c6_188] : memref<2x8xi32, #tpu.memory_space<smem>>
    %459 = arith.index_cast %458 : i32 to index
    %c0_189 = arith.constant 0 : index
    %460 = vector.load %arg2[%459, %c0_189] : memref<16x32xf32, #tpu.memory_space<vmem>>, vector<1x32xf32>
    %c1_190 = arith.constant 1 : index
    %c0_191 = arith.constant 0 : index
    %461 = vector.load %arg21[%c1_190, %c0_191] : memref<2x32xf32, #tpu.memory_space<vmem>>, vector<1x32xf32>
    tpu.vector_store %arg21[%c1_190, %c0_191], %460 {strides = array<i32>} : memref<2x32xf32, #tpu.memory_space<vmem>>, vector<1x32xf32>,
    %c0_192 = arith.constant 0 : index
    %c0_193 = arith.constant 0 : index
    %462 = vector.load %arg21[%c0_192, %c0_193] : memref<2x32xf32, #tpu.memory_space<vmem>>, vector<2x32xf32>
    %463 = tpu.concatenate %462, %418 in 1 : vector<2x32xf32>, vector<2x32xf32> -> vector<2x64xf32>
    %c0_194 = arith.constant 0 : index
    %c0_195 = arith.constant 0 : index
    %464 = vector.load %arg3[%c0_194, %c0_195] : memref<64x128xf32, #tpu.memory_space<vmem>>, vector<64x128xf32>
    %cst_196 = arith.constant dense<0.000000e+00> : vector<2x128xf32>
    %465 = tpu.matmul %463, %464, %cst_196 {dimension_numbers = #tpu.dot_dimension_numbers<[1], [0], [0], [1], [0, 0, 1, 1], [], []>} : vector<2x64xf32>, vector<64x128xf32>, vector<2x128xf32> -> vector<2x128xf32>
    %c0_197 = arith.constant 0 : index
    %c0_198 = arith.constant 0 : index
    %466 = vector.load %arg4[%c0_197, %c0_198] : memref<1x128xf32, #tpu.memory_space<vmem>>, vector<1x128xf32>
    %467 = vector.broadcast %466 : vector<1x128xf32> to vector<2x128xf32>
    %468 = arith.addf %465, %467 : vector<2x128xf32>
    %469 = vector.extract_strided_slice %468 {offsets = [0, 0], sizes = [2, 32], strides = [1, 1]} : vector<2x128xf32> to vector<2x32xf32>
    %470 = arith.negf %469 : vector<2x32xf32>
    %471 = math.exp %470 : vector<2x32xf32>
    %cst_199 = arith.constant 1.000000e+00 : f32
    %472 = vector.broadcast %cst_199 : f32 to vector<2x32xf32>
    %473 = arith.addf %472, %471 : vector<2x32xf32>
    %474 = arith.divf %472, %473 : vector<2x32xf32>
    %475 = vector.extract_strided_slice %468 {offsets = [0, 32], sizes = [2, 32], strides = [1, 1]} : vector<2x128xf32> to vector<2x32xf32>
    %476 = arith.negf %475 : vector<2x32xf32>
    %477 = math.exp %476 : vector<2x32xf32>
    %cst_200 = arith.constant 1.000000e+00 : f32
    %478 = vector.broadcast %cst_200 : f32 to vector<2x32xf32>
    %479 = arith.addf %478, %477 : vector<2x32xf32>
    %480 = arith.divf %478, %479 : vector<2x32xf32>
    %481 = vector.extract_strided_slice %468 {offsets = [0, 64], sizes = [2, 32], strides = [1, 1]} : vector<2x128xf32> to vector<2x32xf32>
    %482 = math.tanh %481 : vector<2x32xf32>
    %483 = vector.extract_strided_slice %468 {offsets = [0, 96], sizes = [2, 32], strides = [1, 1]} : vector<2x128xf32> to vector<2x32xf32>
    %484 = arith.negf %483 : vector<2x32xf32>
    %485 = math.exp %484 : vector<2x32xf32>
    %cst_201 = arith.constant 1.000000e+00 : f32
    %486 = vector.broadcast %cst_201 : f32 to vector<2x32xf32>
    %487 = arith.addf %486, %485 : vector<2x32xf32>
    %488 = arith.divf %486, %487 : vector<2x32xf32>
    %489 = arith.mulf %480, %416 : vector<2x32xf32>
    %490 = arith.mulf %474, %482 : vector<2x32xf32>
    %491 = arith.addf %489, %490 : vector<2x32xf32>
    %492 = math.tanh %491 : vector<2x32xf32>
    %493 = arith.mulf %488, %492 : vector<2x32xf32>
    %494 = tpu.concatenate %493, %449 in 1 : vector<2x32xf32>, vector<2x32xf32> -> vector<2x64xf32>
    %c0_202 = arith.constant 0 : index
    %c0_203 = arith.constant 0 : index
    %495 = vector.load %arg5[%c0_202, %c0_203] : memref<64x128xf32, #tpu.memory_space<vmem>>, vector<64x128xf32>
    %cst_204 = arith.constant dense<0.000000e+00> : vector<2x128xf32>
    %496 = tpu.matmul %494, %495, %cst_204 {dimension_numbers = #tpu.dot_dimension_numbers<[1], [0], [0], [1], [0, 0, 1, 1], [], []>} : vector<2x64xf32>, vector<64x128xf32>, vector<2x128xf32> -> vector<2x128xf32>
    %c0_205 = arith.constant 0 : index
    %c0_206 = arith.constant 0 : index
    %497 = vector.load %arg6[%c0_205, %c0_206] : memref<1x128xf32, #tpu.memory_space<vmem>>, vector<1x128xf32>
    %498 = vector.broadcast %497 : vector<1x128xf32> to vector<2x128xf32>
    %499 = arith.addf %496, %498 : vector<2x128xf32>
    %500 = vector.extract_strided_slice %499 {offsets = [0, 0], sizes = [2, 32], strides = [1, 1]} : vector<2x128xf32> to vector<2x32xf32>
    %501 = arith.negf %500 : vector<2x32xf32>
    %502 = math.exp %501 : vector<2x32xf32>
    %cst_207 = arith.constant 1.000000e+00 : f32
    %503 = vector.broadcast %cst_207 : f32 to vector<2x32xf32>
    %504 = arith.addf %503, %502 : vector<2x32xf32>
    %505 = arith.divf %503, %504 : vector<2x32xf32>
    %506 = vector.extract_strided_slice %499 {offsets = [0, 32], sizes = [2, 32], strides = [1, 1]} : vector<2x128xf32> to vector<2x32xf32>
    %507 = arith.negf %506 : vector<2x32xf32>
    %508 = math.exp %507 : vector<2x32xf32>
    %cst_208 = arith.constant 1.000000e+00 : f32
    %509 = vector.broadcast %cst_208 : f32 to vector<2x32xf32>
    %510 = arith.addf %509, %508 : vector<2x32xf32>
    %511 = arith.divf %509, %510 : vector<2x32xf32>
    %512 = vector.extract_strided_slice %499 {offsets = [0, 64], sizes = [2, 32], strides = [1, 1]} : vector<2x128xf32> to vector<2x32xf32>
    %513 = math.tanh %512 : vector<2x32xf32>
    %514 = vector.extract_strided_slice %499 {offsets = [0, 96], sizes = [2, 32], strides = [1, 1]} : vector<2x128xf32> to vector<2x32xf32>
    %515 = arith.negf %514 : vector<2x32xf32>
    %516 = math.exp %515 : vector<2x32xf32>
    %cst_209 = arith.constant 1.000000e+00 : f32
    %517 = vector.broadcast %cst_209 : f32 to vector<2x32xf32>
    %518 = arith.addf %517, %516 : vector<2x32xf32>
    %519 = arith.divf %517, %518 : vector<2x32xf32>
    %520 = arith.mulf %511, %447 : vector<2x32xf32>
    %521 = arith.mulf %505, %513 : vector<2x32xf32>
    %522 = arith.addf %520, %521 : vector<2x32xf32>
    %523 = math.tanh %522 : vector<2x32xf32>
    %524 = arith.mulf %519, %523 : vector<2x32xf32>
    %525 = vector.extract_strided_slice %524 {offsets = [0, 0], sizes = [1, 32], strides = [1, 1]} : vector<2x32xf32> to vector<1x32xf32>
    %c6_210 = arith.constant 6 : index
    %c0_211 = arith.constant 0 : index
    %526 = vector.load %arg22[%c6_210, %c0_211] : memref<16x32xf32, #tpu.memory_space<vmem>>, vector<1x32xf32>
    tpu.vector_store %arg22[%c6_210, %c0_211], %525 {strides = array<i32>} : memref<16x32xf32, #tpu.memory_space<vmem>>, vector<1x32xf32>,
    %527 = vector.extract_strided_slice %524 {offsets = [1, 0], sizes = [1, 32], strides = [1, 1]} : vector<2x32xf32> to vector<1x32xf32>
    %c14 = arith.constant 14 : index
    %c0_212 = arith.constant 0 : index
    %528 = vector.load %arg22[%c14, %c0_212] : memref<16x32xf32, #tpu.memory_space<vmem>>, vector<1x32xf32>
    tpu.vector_store %arg22[%c14, %c0_212], %527 {strides = array<i32>} : memref<16x32xf32, #tpu.memory_space<vmem>>, vector<1x32xf32>,
    %c0_213 = arith.constant 0 : index
    %c7 = arith.constant 7 : index
    %529 = memref.load %arg1[%c0_213, %c7] : memref<2x8xi32, #tpu.memory_space<smem>>
    %530 = arith.index_cast %529 : i32 to index
    %c0_214 = arith.constant 0 : index
    %531 = vector.load %arg2[%530, %c0_214] : memref<16x32xf32, #tpu.memory_space<vmem>>, vector<1x32xf32>
    %c0_215 = arith.constant 0 : index
    %c0_216 = arith.constant 0 : index
    %532 = vector.load %arg21[%c0_215, %c0_216] : memref<2x32xf32, #tpu.memory_space<vmem>>, vector<1x32xf32>
    tpu.vector_store %arg21[%c0_215, %c0_216], %531 {strides = array<i32>} : memref<2x32xf32, #tpu.memory_space<vmem>>, vector<1x32xf32>,
    %c1_217 = arith.constant 1 : index
    %c7_218 = arith.constant 7 : index
    %533 = memref.load %arg1[%c1_217, %c7_218] : memref<2x8xi32, #tpu.memory_space<smem>>
    %534 = arith.index_cast %533 : i32 to index
    %c0_219 = arith.constant 0 : index
    %535 = vector.load %arg2[%534, %c0_219] : memref<16x32xf32, #tpu.memory_space<vmem>>, vector<1x32xf32>
    %c1_220 = arith.constant 1 : index
    %c0_221 = arith.constant 0 : index
    %536 = vector.load %arg21[%c1_220, %c0_221] : memref<2x32xf32, #tpu.memory_space<vmem>>, vector<1x32xf32>
    tpu.vector_store %arg21[%c1_220, %c0_221], %535 {strides = array<i32>} : memref<2x32xf32, #tpu.memory_space<vmem>>, vector<1x32xf32>,
    %c0_222 = arith.constant 0 : index
    %c0_223 = arith.constant 0 : index
    %537 = vector.load %arg21[%c0_222, %c0_223] : memref<2x32xf32, #tpu.memory_space<vmem>>, vector<2x32xf32>
    %538 = tpu.concatenate %537, %493 in 1 : vector<2x32xf32>, vector<2x32xf32> -> vector<2x64xf32>
    %c0_224 = arith.constant 0 : index
    %c0_225 = arith.constant 0 : index
    %539 = vector.load %arg3[%c0_224, %c0_225] : memref<64x128xf32, #tpu.memory_space<vmem>>, vector<64x128xf32>
    %cst_226 = arith.constant dense<0.000000e+00> : vector<2x128xf32>
    %540 = tpu.matmul %538, %539, %cst_226 {dimension_numbers = #tpu.dot_dimension_numbers<[1], [0], [0], [1], [0, 0, 1, 1], [], []>} : vector<2x64xf32>, vector<64x128xf32>, vector<2x128xf32> -> vector<2x128xf32>
    %c0_227 = arith.constant 0 : index
    %c0_228 = arith.constant 0 : index
    %541 = vector.load %arg4[%c0_227, %c0_228] : memref<1x128xf32, #tpu.memory_space<vmem>>, vector<1x128xf32>
    %542 = vector.broadcast %541 : vector<1x128xf32> to vector<2x128xf32>
    %543 = arith.addf %540, %542 : vector<2x128xf32>
    %544 = vector.extract_strided_slice %543 {offsets = [0, 0], sizes = [2, 32], strides = [1, 1]} : vector<2x128xf32> to vector<2x32xf32>
    %545 = arith.negf %544 : vector<2x32xf32>
    %546 = math.exp %545 : vector<2x32xf32>
    %cst_229 = arith.constant 1.000000e+00 : f32
    %547 = vector.broadcast %cst_229 : f32 to vector<2x32xf32>
    %548 = arith.addf %547, %546 : vector<2x32xf32>
    %549 = arith.divf %547, %548 : vector<2x32xf32>
    %550 = vector.extract_strided_slice %543 {offsets = [0, 32], sizes = [2, 32], strides = [1, 1]} : vector<2x128xf32> to vector<2x32xf32>
    %551 = arith.negf %550 : vector<2x32xf32>
    %552 = math.exp %551 : vector<2x32xf32>
    %cst_230 = arith.constant 1.000000e+00 : f32
    %553 = vector.broadcast %cst_230 : f32 to vector<2x32xf32>
    %554 = arith.addf %553, %552 : vector<2x32xf32>
    %555 = arith.divf %553, %554 : vector<2x32xf32>
    %556 = vector.extract_strided_slice %543 {offsets = [0, 64], sizes = [2, 32], strides = [1, 1]} : vector<2x128xf32> to vector<2x32xf32>
    %557 = math.tanh %556 : vector<2x32xf32>
    %558 = vector.extract_strided_slice %543 {offsets = [0, 96], sizes = [2, 32], strides = [1, 1]} : vector<2x128xf32> to vector<2x32xf32>
    %559 = arith.negf %558 : vector<2x32xf32>
    %560 = math.exp %559 : vector<2x32xf32>
    %cst_231 = arith.constant 1.000000e+00 : f32
    %561 = vector.broadcast %cst_231 : f32 to vector<2x32xf32>
    %562 = arith.addf %561, %560 : vector<2x32xf32>
    %563 = arith.divf %561, %562 : vector<2x32xf32>
    %564 = arith.mulf %555, %491 : vector<2x32xf32>
    %565 = arith.mulf %549, %557 : vector<2x32xf32>
    %566 = arith.addf %564, %565 : vector<2x32xf32>
    %567 = math.tanh %566 : vector<2x32xf32>
    %568 = arith.mulf %563, %567 : vector<2x32xf32>
    %569 = tpu.concatenate %568, %524 in 1 : vector<2x32xf32>, vector<2x32xf32> -> vector<2x64xf32>
    %c0_232 = arith.constant 0 : index
    %c0_233 = arith.constant 0 : index
    %570 = vector.load %arg5[%c0_232, %c0_233] : memref<64x128xf32, #tpu.memory_space<vmem>>, vector<64x128xf32>
    %cst_234 = arith.constant dense<0.000000e+00> : vector<2x128xf32>
    %571 = tpu.matmul %569, %570, %cst_234 {dimension_numbers = #tpu.dot_dimension_numbers<[1], [0], [0], [1], [0, 0, 1, 1], [], []>} : vector<2x64xf32>, vector<64x128xf32>, vector<2x128xf32> -> vector<2x128xf32>
    %c0_235 = arith.constant 0 : index
    %c0_236 = arith.constant 0 : index
    %572 = vector.load %arg6[%c0_235, %c0_236] : memref<1x128xf32, #tpu.memory_space<vmem>>, vector<1x128xf32>
    %573 = vector.broadcast %572 : vector<1x128xf32> to vector<2x128xf32>
    %574 = arith.addf %571, %573 : vector<2x128xf32>
    %575 = vector.extract_strided_slice %574 {offsets = [0, 0], sizes = [2, 32], strides = [1, 1]} : vector<2x128xf32> to vector<2x32xf32>
    %576 = arith.negf %575 : vector<2x32xf32>
    %577 = math.exp %576 : vector<2x32xf32>
    %cst_237 = arith.constant 1.000000e+00 : f32
    %578 = vector.broadcast %cst_237 : f32 to vector<2x32xf32>
    %579 = arith.addf %578, %577 : vector<2x32xf32>
    %580 = arith.divf %578, %579 : vector<2x32xf32>
    %581 = vector.extract_strided_slice %574 {offsets = [0, 32], sizes = [2, 32], strides = [1, 1]} : vector<2x128xf32> to vector<2x32xf32>
    %582 = arith.negf %581 : vector<2x32xf32>
    %583 = math.exp %582 : vector<2x32xf32>
    %cst_238 = arith.constant 1.000000e+00 : f32
    %584 = vector.broadcast %cst_238 : f32 to vector<2x32xf32>
    %585 = arith.addf %584, %583 : vector<2x32xf32>
    %586 = arith.divf %584, %585 : vector<2x32xf32>
    %587 = vector.extract_strided_slice %574 {offsets = [0, 64], sizes = [2, 32], strides = [1, 1]} : vector<2x128xf32> to vector<2x32xf32>
    %588 = math.tanh %587 : vector<2x32xf32>
    %589 = vector.extract_strided_slice %574 {offsets = [0, 96], sizes = [2, 32], strides = [1, 1]} : vector<2x128xf32> to vector<2x32xf32>
    %590 = arith.negf %589 : vector<2x32xf32>
    %591 = math.exp %590 : vector<2x32xf32>
    %cst_239 = arith.constant 1.000000e+00 : f32
    %592 = vector.broadcast %cst_239 : f32 to vector<2x32xf32>
    %593 = arith.addf %592, %591 : vector<2x32xf32>
    %594 = arith.divf %592, %593 : vector<2x32xf32>
    %595 = arith.mulf %586, %522 : vector<2x32xf32>
    %596 = arith.mulf %580, %588 : vector<2x32xf32>
    %597 = arith.addf %595, %596 : vector<2x32xf32>
    %598 = math.tanh %597 : vector<2x32xf32>
    %599 = arith.mulf %594, %598 : vector<2x32xf32>
    %600 = vector.extract_strided_slice %599 {offsets = [0, 0], sizes = [1, 32], strides = [1, 1]} : vector<2x32xf32> to vector<1x32xf32>
    %c7_240 = arith.constant 7 : index
    %c0_241 = arith.constant 0 : index
    %601 = vector.load %arg22[%c7_240, %c0_241] : memref<16x32xf32, #tpu.memory_space<vmem>>, vector<1x32xf32>
    tpu.vector_store %arg22[%c7_240, %c0_241], %600 {strides = array<i32>} : memref<16x32xf32, #tpu.memory_space<vmem>>, vector<1x32xf32>,
    %602 = vector.extract_strided_slice %599 {offsets = [1, 0], sizes = [1, 32], strides = [1, 1]} : vector<2x32xf32> to vector<1x32xf32>
    %c15 = arith.constant 15 : index
    %c0_242 = arith.constant 0 : index
    %603 = vector.load %arg22[%c15, %c0_242] : memref<16x32xf32, #tpu.memory_space<vmem>>, vector<1x32xf32>
    tpu.vector_store %arg22[%c15, %c0_242], %602 {strides = array<i32>} : memref<16x32xf32, #tpu.memory_space<vmem>>, vector<1x32xf32>,
    %c0_243 = arith.constant 0 : index
    %c0_244 = arith.constant 0 : index
    %604 = vector.load %arg22[%c0_243, %c0_244] : memref<16x32xf32, #tpu.memory_space<vmem>>, vector<16x32xf32>
    %c0_245 = arith.constant 0 : index
    %c0_246 = arith.constant 0 : index
    %605 = vector.load %arg7[%c0_245, %c0_246] : memref<32x32xf32, #tpu.memory_space<vmem>>, vector<32x32xf32>
    %c0_247 = arith.constant 0 : index
    %c0_248 = arith.constant 0 : index
    %606 = vector.load %arg8[%c0_247, %c0_248] : memref<32x32xf32, #tpu.memory_space<vmem>>, vector<32x32xf32>
    %cst_249 = arith.constant dense<0.000000e+00> : vector<16x32xf32>
    %607 = tpu.matmul %604, %606, %cst_249 {dimension_numbers = #tpu.dot_dimension_numbers<[1], [0], [0], [1], [0, 0, 1, 1], [], []>} : vector<16x32xf32>, vector<32x32xf32>, vector<16x32xf32> -> vector<16x32xf32>
    %c0_250 = arith.constant 0 : index
    %c0_251 = arith.constant 0 : index
    %608 = vector.load %arg9[%c0_250, %c0_251] : memref<1x32xf32, #tpu.memory_space<vmem>>, vector<1x32xf32>
    %609 = vector.broadcast %608 : vector<1x32xf32> to vector<16x32xf32>
    %610 = arith.addf %607, %609 : vector<16x32xf32>
    %c0_252 = arith.constant 0 : index
    %c0_253 = arith.constant 0 : index
    %611 = vector.load %arg10[%c0_252, %c0_253] : memref<32x32xf32, #tpu.memory_space<vmem>>, vector<32x32xf32>
    %cst_254 = arith.constant dense<0.000000e+00> : vector<32x32xf32>
    %612 = tpu.matmul %605, %611, %cst_254 {dimension_numbers = #tpu.dot_dimension_numbers<[1], [0], [0], [1], [0, 0, 1, 1], [], []>} : vector<32x32xf32>, vector<32x32xf32>, vector<32x32xf32> -> vector<32x32xf32>
    %c0_255 = arith.constant 0 : index
    %c0_256 = arith.constant 0 : index
    %613 = vector.load %arg11[%c0_255, %c0_256] : memref<1x32xf32, #tpu.memory_space<vmem>>, vector<1x32xf32>
    %614 = vector.broadcast %613 : vector<1x32xf32> to vector<32x32xf32>
    %615 = arith.addf %612, %614 : vector<32x32xf32>
    %c0_257 = arith.constant 0 : index
    %c0_258 = arith.constant 0 : index
    %616 = vector.load %arg12[%c0_257, %c0_258] : memref<32x32xf32, #tpu.memory_space<vmem>>, vector<32x32xf32>
    %cst_259 = arith.constant dense<0.000000e+00> : vector<32x32xf32>
    %617 = tpu.matmul %605, %616, %cst_259 {dimension_numbers = #tpu.dot_dimension_numbers<[1], [0], [0], [1], [0, 0, 1, 1], [], []>} : vector<32x32xf32>, vector<32x32xf32>, vector<32x32xf32> -> vector<32x32xf32>
    %c0_260 = arith.constant 0 : index
    %c0_261 = arith.constant 0 : index
    %618 = vector.load %arg13[%c0_260, %c0_261] : memref<1x32xf32, #tpu.memory_space<vmem>>, vector<1x32xf32>
    %619 = vector.broadcast %618 : vector<1x32xf32> to vector<32x32xf32>
    %620 = arith.addf %617, %619 : vector<32x32xf32>
    %621 = vector.extract_strided_slice %610 {offsets = [0, 0], sizes = [8, 8], strides = [1, 1]} : vector<16x32xf32> to vector<8x8xf32>
    %622 = vector.extract_strided_slice %615 {offsets = [0, 0], sizes = [16, 8], strides = [1, 1]} : vector<32x32xf32> to vector<16x8xf32>
    %623 = tpu.transpose %622, [1, 0] : vector<16x8xf32> -> vector<8x16xf32>
    %cst_262 = arith.constant dense<0.000000e+00> : vector<8x16xf32>
    %624 = tpu.matmul %621, %623, %cst_262 {dimension_numbers = #tpu.dot_dimension_numbers<[1], [0], [0], [1], [0, 0, 1, 1], [], []>} : vector<8x8xf32>, vector<8x16xf32>, vector<8x16xf32> -> vector<8x16xf32>
    %625 = vector.extract_strided_slice %610 {offsets = [8, 0], sizes = [8, 8], strides = [1, 1]} : vector<16x32xf32> to vector<8x8xf32>
    %626 = vector.extract_strided_slice %615 {offsets = [16, 0], sizes = [16, 8], strides = [1, 1]} : vector<32x32xf32> to vector<16x8xf32>
    %627 = tpu.transpose %626, [1, 0] : vector<16x8xf32> -> vector<8x16xf32>
    %cst_263 = arith.constant dense<0.000000e+00> : vector<8x16xf32>
    %628 = tpu.matmul %625, %627, %cst_263 {dimension_numbers = #tpu.dot_dimension_numbers<[1], [0], [0], [1], [0, 0, 1, 1], [], []>} : vector<8x8xf32>, vector<8x16xf32>, vector<8x16xf32> -> vector<8x16xf32>
    %629 = vector.extract_strided_slice %610 {offsets = [0, 8], sizes = [8, 8], strides = [1, 1]} : vector<16x32xf32> to vector<8x8xf32>
    %630 = vector.extract_strided_slice %615 {offsets = [0, 8], sizes = [16, 8], strides = [1, 1]} : vector<32x32xf32> to vector<16x8xf32>
    %631 = tpu.transpose %630, [1, 0] : vector<16x8xf32> -> vector<8x16xf32>
    %cst_264 = arith.constant dense<0.000000e+00> : vector<8x16xf32>
    %632 = tpu.matmul %629, %631, %cst_264 {dimension_numbers = #tpu.dot_dimension_numbers<[1], [0], [0], [1], [0, 0, 1, 1], [], []>} : vector<8x8xf32>, vector<8x16xf32>, vector<8x16xf32> -> vector<8x16xf32>
    %633 = vector.extract_strided_slice %610 {offsets = [8, 8], sizes = [8, 8], strides = [1, 1]} : vector<16x32xf32> to vector<8x8xf32>
    %634 = vector.extract_strided_slice %615 {offsets = [16, 8], sizes = [16, 8], strides = [1, 1]} : vector<32x32xf32> to vector<16x8xf32>
    %635 = tpu.transpose %634, [1, 0] : vector<16x8xf32> -> vector<8x16xf32>
    %cst_265 = arith.constant dense<0.000000e+00> : vector<8x16xf32>
    %636 = tpu.matmul %633, %635, %cst_265 {dimension_numbers = #tpu.dot_dimension_numbers<[1], [0], [0], [1], [0, 0, 1, 1], [], []>} : vector<8x8xf32>, vector<8x16xf32>, vector<8x16xf32> -> vector<8x16xf32>
    %637 = vector.extract_strided_slice %610 {offsets = [0, 16], sizes = [8, 8], strides = [1, 1]} : vector<16x32xf32> to vector<8x8xf32>
    %638 = vector.extract_strided_slice %615 {offsets = [0, 16], sizes = [16, 8], strides = [1, 1]} : vector<32x32xf32> to vector<16x8xf32>
    %639 = tpu.transpose %638, [1, 0] : vector<16x8xf32> -> vector<8x16xf32>
    %cst_266 = arith.constant dense<0.000000e+00> : vector<8x16xf32>
    %640 = tpu.matmul %637, %639, %cst_266 {dimension_numbers = #tpu.dot_dimension_numbers<[1], [0], [0], [1], [0, 0, 1, 1], [], []>} : vector<8x8xf32>, vector<8x16xf32>, vector<8x16xf32> -> vector<8x16xf32>
    %641 = vector.extract_strided_slice %610 {offsets = [8, 16], sizes = [8, 8], strides = [1, 1]} : vector<16x32xf32> to vector<8x8xf32>
    %642 = vector.extract_strided_slice %615 {offsets = [16, 16], sizes = [16, 8], strides = [1, 1]} : vector<32x32xf32> to vector<16x8xf32>
    %643 = tpu.transpose %642, [1, 0] : vector<16x8xf32> -> vector<8x16xf32>
    %cst_267 = arith.constant dense<0.000000e+00> : vector<8x16xf32>
    %644 = tpu.matmul %641, %643, %cst_267 {dimension_numbers = #tpu.dot_dimension_numbers<[1], [0], [0], [1], [0, 0, 1, 1], [], []>} : vector<8x8xf32>, vector<8x16xf32>, vector<8x16xf32> -> vector<8x16xf32>
    %645 = vector.extract_strided_slice %610 {offsets = [0, 24], sizes = [8, 8], strides = [1, 1]} : vector<16x32xf32> to vector<8x8xf32>
    %646 = vector.extract_strided_slice %615 {offsets = [0, 24], sizes = [16, 8], strides = [1, 1]} : vector<32x32xf32> to vector<16x8xf32>
    %647 = tpu.transpose %646, [1, 0] : vector<16x8xf32> -> vector<8x16xf32>
    %cst_268 = arith.constant dense<0.000000e+00> : vector<8x16xf32>
    %648 = tpu.matmul %645, %647, %cst_268 {dimension_numbers = #tpu.dot_dimension_numbers<[1], [0], [0], [1], [0, 0, 1, 1], [], []>} : vector<8x8xf32>, vector<8x16xf32>, vector<8x16xf32> -> vector<8x16xf32>
    %649 = vector.extract_strided_slice %610 {offsets = [8, 24], sizes = [8, 8], strides = [1, 1]} : vector<16x32xf32> to vector<8x8xf32>
    %650 = vector.extract_strided_slice %615 {offsets = [16, 24], sizes = [16, 8], strides = [1, 1]} : vector<32x32xf32> to vector<16x8xf32>
    %651 = tpu.transpose %650, [1, 0] : vector<16x8xf32> -> vector<8x16xf32>
    %cst_269 = arith.constant dense<0.000000e+00> : vector<8x16xf32>
    %652 = tpu.matmul %649, %651, %cst_269 {dimension_numbers = #tpu.dot_dimension_numbers<[1], [0], [0], [1], [0, 0, 1, 1], [], []>} : vector<8x8xf32>, vector<8x16xf32>, vector<8x16xf32> -> vector<8x16xf32>
    %653 = tpu.concatenate %624, %628, %632, %636, %640, %644, %648, %652 in 0 : vector<8x16xf32>, vector<8x16xf32>, vector<8x16xf32>, vector<8x16xf32>, vector<8x16xf32>, vector<8x16xf32>, vector<8x16xf32>, vector<8x16xf32> -> vector<64x16xf32>
    %cst_270 = arith.constant 0.353553385 : f32
    %654 = vector.broadcast %cst_270 : f32 to vector<64x16xf32>
    %655 = arith.mulf %653, %654 : vector<64x16xf32>
    %cst_271 = arith.constant dense<0xFF800000> : vector<64xf32>
    %656 = vector.multi_reduction <maximumf>, %655, %cst_271 [1] : vector<64x16xf32> to vector<64xf32>
    %657 = vector.shape_cast %656 : vector<64xf32> to vector<64x1xf32>
    %658 = vector.broadcast %657 : vector<64x1xf32> to vector<64x16xf32>
    %659 = arith.subf %655, %658 : vector<64x16xf32>
    %660 = math.exp %659 : vector<64x16xf32>
    %cst_272 = arith.constant dense<0.000000e+00> : vector<64xf32>
    %661 = vector.multi_reduction <add>, %660, %cst_272 [1] : vector<64x16xf32> to vector<64xf32>
    %662 = vector.shape_cast %661 : vector<64xf32> to vector<64x1xf32>
    %663 = tpu.reciprocal %662 {approx = true} : vector<64x1xf32> -> vector<64x1xf32>
    %664 = vector.broadcast %663 : vector<64x1xf32> to vector<64x16xf32>
    %665 = arith.mulf %660, %664 : vector<64x16xf32>
    %c0_273 = arith.constant 0 : index
    %c0_274 = arith.constant 0 : index
    %666 = vector.load %arg19[%c0_273, %c0_274] : memref<64x16xf32, #tpu.memory_space<vmem>>, vector<64x16xf32>
    tpu.vector_store %arg19[%c0_273, %c0_274], %665 {strides = array<i32>} : memref<64x16xf32, #tpu.memory_space<vmem>>, vector<64x16xf32>,
    %667 = vector.extract_strided_slice %665 {offsets = [0, 0], sizes = [8, 16], strides = [1, 1]} : vector<64x16xf32> to vector<8x16xf32>
    %668 = vector.extract_strided_slice %620 {offsets = [0, 0], sizes = [16, 8], strides = [1, 1]} : vector<32x32xf32> to vector<16x8xf32>
    %cst_275 = arith.constant dense<0.000000e+00> : vector<8x8xf32>
    %669 = tpu.matmul %667, %668, %cst_275 {dimension_numbers = #tpu.dot_dimension_numbers<[1], [0], [0], [1], [0, 0, 1, 1], [], []>} : vector<8x16xf32>, vector<16x8xf32>, vector<8x8xf32> -> vector<8x8xf32>
    %670 = vector.extract_strided_slice %665 {offsets = [16, 0], sizes = [8, 16], strides = [1, 1]} : vector<64x16xf32> to vector<8x16xf32>
    %671 = vector.extract_strided_slice %620 {offsets = [0, 8], sizes = [16, 8], strides = [1, 1]} : vector<32x32xf32> to vector<16x8xf32>
    %cst_276 = arith.constant dense<0.000000e+00> : vector<8x8xf32>
    %672 = tpu.matmul %670, %671, %cst_276 {dimension_numbers = #tpu.dot_dimension_numbers<[1], [0], [0], [1], [0, 0, 1, 1], [], []>} : vector<8x16xf32>, vector<16x8xf32>, vector<8x8xf32> -> vector<8x8xf32>
    %673 = vector.extract_strided_slice %665 {offsets = [32, 0], sizes = [8, 16], strides = [1, 1]} : vector<64x16xf32> to vector<8x16xf32>
    %674 = vector.extract_strided_slice %620 {offsets = [0, 16], sizes = [16, 8], strides = [1, 1]} : vector<32x32xf32> to vector<16x8xf32>
    %cst_277 = arith.constant dense<0.000000e+00> : vector<8x8xf32>
    %675 = tpu.matmul %673, %674, %cst_277 {dimension_numbers = #tpu.dot_dimension_numbers<[1], [0], [0], [1], [0, 0, 1, 1], [], []>} : vector<8x16xf32>, vector<16x8xf32>, vector<8x8xf32> -> vector<8x8xf32>
    %676 = vector.extract_strided_slice %665 {offsets = [48, 0], sizes = [8, 16], strides = [1, 1]} : vector<64x16xf32> to vector<8x16xf32>
    %677 = vector.extract_strided_slice %620 {offsets = [0, 24], sizes = [16, 8], strides = [1, 1]} : vector<32x32xf32> to vector<16x8xf32>
    %cst_278 = arith.constant dense<0.000000e+00> : vector<8x8xf32>
    %678 = tpu.matmul %676, %677, %cst_278 {dimension_numbers = #tpu.dot_dimension_numbers<[1], [0], [0], [1], [0, 0, 1, 1], [], []>} : vector<8x16xf32>, vector<16x8xf32>, vector<8x8xf32> -> vector<8x8xf32>
    %679 = tpu.concatenate %669, %672, %675, %678 in 1 : vector<8x8xf32>, vector<8x8xf32>, vector<8x8xf32>, vector<8x8xf32> -> vector<8x32xf32>
    %680 = vector.extract_strided_slice %665 {offsets = [8, 0], sizes = [8, 16], strides = [1, 1]} : vector<64x16xf32> to vector<8x16xf32>
    %681 = vector.extract_strided_slice %620 {offsets = [16, 0], sizes = [16, 8], strides = [1, 1]} : vector<32x32xf32> to vector<16x8xf32>
    %cst_279 = arith.constant dense<0.000000e+00> : vector<8x8xf32>
    %682 = tpu.matmul %680, %681, %cst_279 {dimension_numbers = #tpu.dot_dimension_numbers<[1], [0], [0], [1], [0, 0, 1, 1], [], []>} : vector<8x16xf32>, vector<16x8xf32>, vector<8x8xf32> -> vector<8x8xf32>
    %683 = vector.extract_strided_slice %665 {offsets = [24, 0], sizes = [8, 16], strides = [1, 1]} : vector<64x16xf32> to vector<8x16xf32>
    %684 = vector.extract_strided_slice %620 {offsets = [16, 8], sizes = [16, 8], strides = [1, 1]} : vector<32x32xf32> to vector<16x8xf32>
    %cst_280 = arith.constant dense<0.000000e+00> : vector<8x8xf32>
    %685 = tpu.matmul %683, %684, %cst_280 {dimension_numbers = #tpu.dot_dimension_numbers<[1], [0], [0], [1], [0, 0, 1, 1], [], []>} : vector<8x16xf32>, vector<16x8xf32>, vector<8x8xf32> -> vector<8x8xf32>
    %686 = vector.extract_strided_slice %665 {offsets = [40, 0], sizes = [8, 16], strides = [1, 1]} : vector<64x16xf32> to vector<8x16xf32>
    %687 = vector.extract_strided_slice %620 {offsets = [16, 16], sizes = [16, 8], strides = [1, 1]} : vector<32x32xf32> to vector<16x8xf32>
    %cst_281 = arith.constant dense<0.000000e+00> : vector<8x8xf32>
    %688 = tpu.matmul %686, %687, %cst_281 {dimension_numbers = #tpu.dot_dimension_numbers<[1], [0], [0], [1], [0, 0, 1, 1], [], []>} : vector<8x16xf32>, vector<16x8xf32>, vector<8x8xf32> -> vector<8x8xf32>
    %689 = vector.extract_strided_slice %665 {offsets = [56, 0], sizes = [8, 16], strides = [1, 1]} : vector<64x16xf32> to vector<8x16xf32>
    %690 = vector.extract_strided_slice %620 {offsets = [16, 24], sizes = [16, 8], strides = [1, 1]} : vector<32x32xf32> to vector<16x8xf32>
    %cst_282 = arith.constant dense<0.000000e+00> : vector<8x8xf32>
    %691 = tpu.matmul %689, %690, %cst_282 {dimension_numbers = #tpu.dot_dimension_numbers<[1], [0], [0], [1], [0, 0, 1, 1], [], []>} : vector<8x16xf32>, vector<16x8xf32>, vector<8x8xf32> -> vector<8x8xf32>
    %692 = tpu.concatenate %682, %685, %688, %691 in 1 : vector<8x8xf32>, vector<8x8xf32>, vector<8x8xf32>, vector<8x8xf32> -> vector<8x32xf32>
    %693 = tpu.concatenate %679, %692 in 0 : vector<8x32xf32>, vector<8x32xf32> -> vector<16x32xf32>
    %c0_283 = arith.constant 0 : index
    %c0_284 = arith.constant 0 : index
    %694 = vector.load %arg20[%c0_283, %c0_284] : memref<16x32xf32, #tpu.memory_space<vmem>>, vector<16x32xf32>
    tpu.vector_store %arg20[%c0_283, %c0_284], %693 {strides = array<i32>} : memref<16x32xf32, #tpu.memory_space<vmem>>, vector<16x32xf32>,
    %695 = tpu.concatenate %604, %693 in 1 : vector<16x32xf32>, vector<16x32xf32> -> vector<16x64xf32>
    %c0_285 = arith.constant 0 : index
    %c0_286 = arith.constant 0 : index
    %696 = vector.load %arg14[%c0_285, %c0_286] : memref<64x32xf32, #tpu.memory_space<vmem>>, vector<64x32xf32>
    %cst_287 = arith.constant dense<0.000000e+00> : vector<16x32xf32>
    %697 = tpu.matmul %695, %696, %cst_287 {dimension_numbers = #tpu.dot_dimension_numbers<[1], [0], [0], [1], [0, 0, 1, 1], [], []>} : vector<16x64xf32>, vector<64x32xf32>, vector<16x32xf32> -> vector<16x32xf32>
    %c0_288 = arith.constant 0 : index
    %c0_289 = arith.constant 0 : index
    %698 = vector.load %arg15[%c0_288, %c0_289] : memref<1x32xf32, #tpu.memory_space<vmem>>, vector<1x32xf32>
    %699 = vector.broadcast %698 : vector<1x32xf32> to vector<16x32xf32>
    %700 = arith.addf %697, %699 : vector<16x32xf32>
    %701 = math.tanh %700 : vector<16x32xf32>
    %c0_290 = arith.constant 0 : index
    %c0_291 = arith.constant 0 : index
    %702 = vector.load %arg16[%c0_290, %c0_291] : memref<32x16xf32, #tpu.memory_space<vmem>>, vector<32x16xf32>
    %cst_292 = arith.constant dense<0.000000e+00> : vector<16x16xf32>
    %703 = tpu.matmul %701, %702, %cst_292 {dimension_numbers = #tpu.dot_dimension_numbers<[1], [0], [0], [1], [0, 0, 1, 1], [], []>} : vector<16x32xf32>, vector<32x16xf32>, vector<16x16xf32> -> vector<16x16xf32>
    %c0_293 = arith.constant 0 : index
    %c0_294 = arith.constant 0 : index
    %704 = vector.load %arg17[%c0_293, %c0_294] : memref<1x16xf32, #tpu.memory_space<vmem>>, vector<1x16xf32>
    %705 = vector.broadcast %704 : vector<1x16xf32> to vector<16x16xf32>
    %706 = arith.addf %703, %705 : vector<16x16xf32>
    %cst_295 = arith.constant dense<0xFF800000> : vector<16xf32>
    %707 = vector.multi_reduction <maximumf>, %706, %cst_295 [1] : vector<16x16xf32> to vector<16xf32>
    %708 = vector.shape_cast %707 : vector<16xf32> to vector<16x1xf32>
    %709 = vector.broadcast %708 : vector<16x1xf32> to vector<16x16xf32>
    %710 = arith.subf %706, %709 : vector<16x16xf32>
    %711 = math.exp %710 : vector<16x16xf32>
    %cst_296 = arith.constant dense<0.000000e+00> : vector<16xf32>
    %712 = vector.multi_reduction <add>, %711, %cst_296 [1] : vector<16x16xf32> to vector<16xf32>
    %713 = vector.shape_cast %712 : vector<16xf32> to vector<16x1xf32>
    %714 = math.log %713 : vector<16x1xf32>
    %715 = arith.addf %714, %708 : vector<16x1xf32>
    %716 = vector.broadcast %715 : vector<16x1xf32> to vector<16x16xf32>
    %717 = arith.subf %706, %716 : vector<16x16xf32>
    %c0_297 = arith.constant 0 : index
    %c0_298 = arith.constant 0 : index
    %718 = vector.load %arg18[%c0_297, %c0_298] : memref<16x16xf32, #tpu.memory_space<vmem>>, vector<16x16xf32>
    tpu.vector_store %arg18[%c0_297, %c0_298], %717 {strides = array<i32>} : memref<16x16xf32, #tpu.memory_space<vmem>>, vector<16x16xf32>,
    return
  }
  func.func @transform_0(%arg0: i32, %arg1: memref<2x8xi32, #tpu.memory_space<smem>>) -> (i32, i32) {
    %c0_i32 = arith.constant 0 : i32
    %c0_i32_0 = arith.constant 0 : i32
    %c0_i32_1 = arith.constant 0 : i32
    return %c0_i32, %c0_i32_0 : i32, i32
  }
  func.func @transform_1(%arg0: i32, %arg1: memref<2x8xi32, #tpu.memory_space<smem>>) -> (i32, i32) {
    %c0_i32 = arith.constant 0 : i32
    %c0_i32_0 = arith.constant 0 : i32
    %c0_i32_1 = arith.constant 0 : i32
    return %c0_i32, %c0_i32_0 : i32, i32
  }
  func.func @transform_2(%arg0: i32, %arg1: memref<2x8xi32, #tpu.memory_space<smem>>) -> (i32, i32) {
    %c0_i32 = arith.constant 0 : i32
    %c0_i32_0 = arith.constant 0 : i32
    %c0_i32_1 = arith.constant 0 : i32
    return %c0_i32, %c0_i32_0 : i32, i32
  }
  func.func @transform_3(%arg0: i32, %arg1: memref<2x8xi32, #tpu.memory_space<smem>>) -> (i32, i32) {
    %c0_i32 = arith.constant 0 : i32
    %c0_i32_0 = arith.constant 0 : i32
    %c0_i32_1 = arith.constant 0 : i32
    return %c0_i32, %c0_i32_0 : i32, i32
  }
  func.func @transform_4(%arg0: i32, %arg1: memref<2x8xi32, #tpu.memory_space<smem>>) -> (i32, i32) {
    %c0_i32 = arith.constant 0 : i32
    %c0_i32_0 = arith.constant 0 : i32
    %c0_i32_1 = arith.constant 0 : i32
    return %c0_i32, %c0_i32_0 : i32, i32
  }
  func.func @transform_5(%arg0: i32, %arg1: memref<2x8xi32, #tpu.memory_space<smem>>) -> (i32, i32) {
    %c0_i32 = arith.constant 0 : i32
    %c0_i32_0 = arith.constant 0 : i32
    %c0_i32_1 = arith.constant 0 : i32
    return %c0_i32, %c0_i32_0 : i32, i32
  }
  func.func @transform_6(%arg0: i32, %arg1: memref<2x8xi32, #tpu.memory_space<smem>>) -> (i32, i32) {
    %c0_i32 = arith.constant 0 : i32
    %c0_i32_0 = arith.constant 0 : i32
    %c0_i32_1 = arith.constant 0 : i32
    return %c0_i32, %c0_i32_0 : i32, i32
  }
  func.func @transform_7(%arg0: i32, %arg1: memref<2x8xi32, #tpu.memory_space<smem>>) -> (i32, i32) {
    %c0_i32 = arith.constant 0 : i32
    %c0_i32_0 = arith.constant 0 : i32
    %c0_i32_1 = arith.constant 0 : i32
    return %c0_i32, %c0_i32_0 : i32, i32
  }
  func.func @transform_8(%arg0: i32, %arg1: memref<2x8xi32, #tpu.memory_space<smem>>) -> (i32, i32) {
    %c0_i32 = arith.constant 0 : i32
    %c0_i32_0 = arith.constant 0 : i32
    %c0_i32_1 = arith.constant 0 : i32
    return %c0_i32, %c0_i32_0 : i32, i32
  }
  func.func @transform_9(%arg0: i32, %arg1: memref<2x8xi32, #tpu.memory_space<smem>>) -> (i32, i32) {
    %c0_i32 = arith.constant 0 : i32
    %c0_i32_0 = arith.constant 0 : i32
    %c0_i32_1 = arith.constant 0 : i32
    return %c0_i32, %c0_i32_0 : i32, i32
  }
  func.func @transform_10(%arg0: i32, %arg1: memref<2x8xi32, #tpu.memory_space<smem>>) -> (i32, i32) {
    %c0_i32 = arith.constant 0 : i32
    %c0_i32_0 = arith.constant 0 : i32
    %c0_i32_1 = arith.constant 0 : i32
    return %c0_i32, %c0_i32_0 : i32, i32
  }
  func.func @transform_11(%arg0: i32, %arg1: memref<2x8xi32, #tpu.memory_space<smem>>) -> (i32, i32) {
    %c0_i32 = arith.constant 0 : i32
    %c0_i32_0 = arith.constant 0 : i32
    %c0_i32_1 = arith.constant 0 : i32
    return %c0_i32, %c0_i32_0 : i32, i32
  }
  func.func @transform_12(%arg0: i32, %arg1: memref<2x8xi32, #tpu.memory_space<smem>>) -> (i32, i32) {
    %c0_i32 = arith.constant 0 : i32
    %c0_i32_0 = arith.constant 0 : i32
    %c0_i32_1 = arith.constant 0 : i32
    return %c0_i32, %c0_i32_0 : i32, i32
  }
  func.func @transform_13(%arg0: i32, %arg1: memref<2x8xi32, #tpu.memory_space<smem>>) -> (i32, i32) {
    %c0_i32 = arith.constant 0 : i32
    %c0_i32_0 = arith.constant 0 : i32
    %c0_i32_1 = arith.constant 0 : i32
    return %c0_i32, %c0_i32_0 : i32, i32
  }
  func.func @transform_14(%arg0: i32, %arg1: memref<2x8xi32, #tpu.memory_space<smem>>) -> (i32, i32) {
    %c0_i32 = arith.constant 0 : i32
    %c0_i32_0 = arith.constant 0 : i32
    %c0_i32_1 = arith.constant 0 : i32
    return %c0_i32, %c0_i32_0 : i32, i32
  }
  func.func @transform_15(%arg0: i32, %arg1: memref<2x8xi32, #tpu.memory_space<smem>>) -> (i32, i32) {
    %c0_i32 = arith.constant 0 : i32
    %c0_i32_0 = arith.constant 0 : i32
    %c0_i32_1 = arith.constant 0 : i32
    return %c0_i32, %c0_i32_0 : i32, i32
  }
  func.func @transform_16(%arg0: i32, %arg1: memref<2x8xi32, #tpu.memory_space<smem>>) -> (i32, i32) {
    %c0_i32 = arith.constant 0 : i32
    %c0_i32_0 = arith.constant 0 : i32
    %c0_i32_1 = arith.constant 0 : i32
    return %c0_i32, %c0_i32_0 : i32, i32
  }
  func.func @transform_17(%arg0: i32, %arg1: memref<2x8xi32, #tpu.memory_space<smem>>) -> (i32, i32) {
    %c0_i32 = arith.constant 0 : i32
    %c0_i32_0 = arith.constant 0 : i32
    %c0_i32_1 = arith.constant 0 : i32
    return %c0_i32, %c0_i32_0 : i32, i32
  }
  func.func @transform_18(%arg0: i32, %arg1: memref<2x8xi32, #tpu.memory_space<smem>>) -> (i32, i32) {
    %c0_i32 = arith.constant 0 : i32
    %c0_i32_0 = arith.constant 0 : i32
    %c0_i32_1 = arith.constant 0 : i32
    return %c0_i32, %c0_i32_0 : i32, i32
  }
}

</mosaic_0001>

<llo_original>
// kernel: decoder_rnn_forward.1
$region0: #{decoder_rnn_forward.1}
  #allocation0 [shape = 'u32[]', space=smem, size = 0x4, offset = 0x4, fixed_abs, tag = 'smem constant byte address 0x4 - core index']
  #allocation1 [shape = 'u32[72,128]{1,0:T(1,128)}', space=vmem, size = 0x9000, scoped, tag = 'internal scratch']
  #allocation2 [shape = 'f32[2,32]{1,0:T(2,128)}', space=vmem, size = 0x400, scoped, tag = 'scratch operand']
  #allocation3 [shape = 'f32[16,32]{1,0:T(8,128)}', space=vmem, size = 0x2000, scoped, tag = 'scratch operand']
  #allocation4 [shape = 's32[1]{0}', space=sflag, size = 0x4, scoped, tag = 'scoped memory for decoder_rnn_forward.1']
  #allocation5 [shape = 'u8[1024]{0}', space=smem, size = 0x400, scoped, tag = 'prefetched SMEM operand 0']
  %s0 = inlined_call_operand.vmem [shape: s32[2,8], index: 0, kind: input, shape index: {}]
  %s1 = inlined_call_operand.vmem [shape: f32[16,32], index: 1, kind: input, shape index: {}]
  %s2 = inlined_call_operand.vmem [shape: f32[64,128], index: 2, kind: input, shape index: {}]
  %s3 = inlined_call_operand.vmem [shape: f32[1,128], index: 3, kind: input, shape index: {}]
  %s4 = inlined_call_operand.hbm [shape: f32[64,128], index: 4, kind: input, shape index: {}]
  %s5 = inlined_call_operand.vmem [shape: f32[1,128], index: 5, kind: input, shape index: {}]
  %s6 = inlined_call_operand.vmem [shape: f32[32,32], index: 6, kind: input, shape index: {}]
  %s7 = inlined_call_operand.hbm [shape: f32[32,32], index: 7, kind: input, shape index: {}]
  %s8 = inlined_call_operand.vmem [shape: f32[1,32], index: 8, kind: input, shape index: {}]
  %s9 = inlined_call_operand.hbm [shape: f32[32,32], index: 9, kind: input, shape index: {}]
  %s10 = inlined_call_operand.vmem [shape: f32[1,32], index: 10, kind: input, shape index: {}]
  %s11 = inlined_call_operand.hbm [shape: f32[32,32], index: 11, kind: input, shape index: {}]
  %s12 = inlined_call_operand.vmem [shape: f32[1,32], index: 12, kind: input, shape index: {}]
  %s13 = inlined_call_operand.vmem [shape: f32[64,32], index: 13, kind: input, shape index: {}]
  %s14 = inlined_call_operand.vmem [shape: f32[1,32], index: 14, kind: input, shape index: {}]
  %s15 = inlined_call_operand.vmem [shape: f32[32,16], index: 15, kind: input, shape index: {}]
  %s16 = inlined_call_operand.vmem [shape: f32[1,16], index: 16, kind: input, shape index: {}]
  %s17 = inlined_call_operand.hbm [shape: f32[16,16], index: 17, kind: output, shape index: {0}]
  %s18 = inlined_call_operand.hbm [shape: f32[64,16], index: 18, kind: output, shape index: {1}]
  %s19 = inlined_call_operand.hbm [shape: f32[16,32], index: 19, kind: output, shape index: {2}]
  %20 = xla_tuple %s17, %s18, %s19
  %s21 = sld [smem:[#allocation0]]
  $region106: #{decoder_rnn_forward.1} parent=0
    _
  %s23 = ssub.s32 1, %s21
  %s24 = scalar_select 0, %s23, %s21
  %s26 = sshll.u32 %s0, 4
  %s27 = int_to_ptr.vmem [resolvable:$true] %s26
  %29 = dma.vmem_to_smem %s27, 32, [#allocation5], [#allocation4]
  %31 = dma.done [#allocation4], 32
  %32 = sfence
  $region1: #{decoder_rnn_forward.1} parent=0
    #allocation6 [shape = 'u8[32768]{0}', space=vmem, size = 0x8000, scoped, tag = 'input window, operand 4, single buffered']
    #allocation7 [shape = 's32[1]{0}', space=sflag, size = 0x4, scoped, tag = 'scoped memory for decoder_rnn_forward.1']
    #allocation8 [shape = 's32[1]{0}', space=sflag, size = 0x4, scoped, tag = 'scoped memory for decoder_rnn_forward.1']
    #allocation9 [shape = 'u8[16384]{0}', space=vmem, size = 0x4000, scoped, tag = 'input window, operand 7, single buffered']
    #allocation10 [shape = 's32[1]{0}', space=sflag, size = 0x4, scoped, tag = 'scoped memory for decoder_rnn_forward.1']
    #allocation11 [shape = 'u8[16384]{0}', space=vmem, size = 0x4000, scoped, tag = 'input window, operand 9, single buffered']
    #allocation12 [shape = 'u8[16384]{0}', space=vmem, size = 0x4000, scoped, tag = 'input window, operand 11, single buffered']
    #allocation13 [shape = 's32[1]{0}', space=sflag, size = 0x4, scoped, tag = 'scoped memory for decoder_rnn_forward.1']
    #allocation14 [shape = 'u8[8192]{0}', space=vmem, size = 0x2000, scoped, tag = 'output window, operand 0, single buffered']
    #allocation15 [shape = 'u8[32768]{0}', space=vmem, size = 0x8000, scoped, tag = 'output window, operand 1, single buffered']
    #allocation16 [shape = 's32[1]{0}', space=sflag, size = 0x4, scoped, tag = 'scoped memory for decoder_rnn_forward.1']
    #allocation17 [shape = 'u8[8192]{0}', space=vmem, size = 0x2000, scoped, tag = 'output window, operand 2, single buffered']
    %33 = vsyncpa [#allocation7], 0
    %34 = vsyncpa [#allocation10], 0
    %35 = vsyncpa [#allocation13], 0
    %36 = vsyncpa [#allocation8], 0
    %37 = vsyncpa [#allocation16], 0
    // Predicated region
    $region2: #{decoder_rnn_forward.1} parent=1 // pred_check
      _
    $region3: #{decoder_rnn_forward.1} parent=1 // pred_check_branch
      %39 = sbr.rel (0) target = $region5
    $region4: #{decoder_rnn_forward.1} parent=1 // pred_region
      _
    $region5: #{decoder_rnn_forward.1} parent=1 // pred_fallthru
      _
    // Predicated region
    $region6: #{decoder_rnn_forward.1} parent=1 // pred_check
      _
    $region7: #{decoder_rnn_forward.1} parent=1 // pred_check_branch
      %41 = sbr.rel (0) target = $region9
    $region8: #{decoder_rnn_forward.1} parent=1 // pred_region
      _
    $region9: #{decoder_rnn_forward.1} parent=1 // pred_fallthru
      _
    // Predicated region
    $region10: #{decoder_rnn_forward.1} parent=1 // pred_check
      _
    $region11: #{decoder_rnn_forward.1} parent=1 // pred_check_branch
      %43 = sbr.rel (0) target = $region13
    $region12: #{decoder_rnn_forward.1} parent=1 // pred_region
      _
    $region13: #{decoder_rnn_forward.1} parent=1 // pred_fallthru
      _
    // Predicated region
    $region14: #{decoder_rnn_forward.1} parent=1 // pred_check
      _
    $region15: #{decoder_rnn_forward.1} parent=1 // pred_check_branch
      %45 = sbr.rel (0) target = $region17
    $region16: #{decoder_rnn_forward.1} parent=1 // pred_region
      %47 = vsyncadd [#allocation7], 0
      %s48 = sshll.u32 %s4, 4
      %s49 = int_to_ptr.hbm [resolvable:$true] %s48
      %s50 = sshll.u32 [#allocation6], 4
      %s51 = int_to_ptr.vmem [resolvable:$true] %s50
      %56 = dma.hbm_to_vmem [thread:$0]  %s49, 1024, %s51, [#allocation7], 128, 128, 8
    $region17: #{decoder_rnn_forward.1} parent=1 // pred_fallthru
      _
    // Predicated region
    $region18: #{decoder_rnn_forward.1} parent=1 // pred_check
      _
    $region19: #{decoder_rnn_forward.1} parent=1 // pred_check_branch
      %58 = sbr.rel (0) target = $region21
    $region20: #{decoder_rnn_forward.1} parent=1 // pred_region
      _
    $region21: #{decoder_rnn_forward.1} parent=1 // pred_fallthru
      _
    // Predicated region
    $region22: #{decoder_rnn_forward.1} parent=1 // pred_check
      _
    $region23: #{decoder_rnn_forward.1} parent=1 // pred_check_branch
      %60 = sbr.rel (0) target = $region25
    $region24: #{decoder_rnn_forward.1} parent=1 // pred_region
      _
    $region25: #{decoder_rnn_forward.1} parent=1 // pred_fallthru
      _
    // Predicated region
    $region26: #{decoder_rnn_forward.1} parent=1 // pred_check
      _
    $region27: #{decoder_rnn_forward.1} parent=1 // pred_check_branch
      %62 = sbr.rel (0) target = $region29
    $region28: #{decoder_rnn_forward.1} parent=1 // pred_region
      %64 = vsyncadd [#allocation10], 0
      %s65 = sshll.u32 %s7, 4
      %s66 = int_to_ptr.hbm [resolvable:$true] %s65
      %s67 = sshll.u32 [#allocation9], 4
      %s68 = int_to_ptr.vmem [resolvable:$true] %s67
      %73 = dma.hbm_to_vmem [thread:$0]  %s66, 512, %s68, [#allocation10], 128, 128, 8
    $region29: #{decoder_rnn_forward.1} parent=1 // pred_fallthru
      _
    // Predicated region
    $region30: #{decoder_rnn_forward.1} parent=1 // pred_check
      _
    $region31: #{decoder_rnn_forward.1} parent=1 // pred_check_branch
      %75 = sbr.rel (0) target = $region33
    $region32: #{decoder_rnn_forward.1} parent=1 // pred_region
      _
    $region33: #{decoder_rnn_forward.1} parent=1 // pred_fallthru
      _
    // Predicated region
    $region34: #{decoder_rnn_forward.1} parent=1 // pred_check
      _
    $region35: #{decoder_rnn_forward.1} parent=1 // pred_check_branch
      %77 = sbr.rel (0) target = $region37
    $region36: #{decoder_rnn_forward.1} parent=1 // pred_region
      %79 = vsyncadd [#allocation10], 0
      %s80 = sshll.u32 %s9, 4
      %s81 = int_to_ptr.hbm [resolvable:$true] %s80
      %s82 = sshll.u32 [#allocation11], 4
      %s83 = int_to_ptr.vmem [resolvable:$true] %s82
      %88 = dma.hbm_to_vmem [thread:$0]  %s81, 512, %s83, [#allocation10], 128, 128, 8
    $region37: #{decoder_rnn_forward.1} parent=1 // pred_fallthru
      _
    // Predicated region
    $region38: #{decoder_rnn_forward.1} parent=1 // pred_check
      _
    $region39: #{decoder_rnn_forward.1} parent=1 // pred_check_branch
      %90 = sbr.rel (0) target = $region41
    $region40: #{decoder_rnn_forward.1} parent=1 // pred_region
      _
    $region41: #{decoder_rnn_forward.1} parent=1 // pred_fallthru
      _
    // Predicated region
    $region42: #{decoder_rnn_forward.1} parent=1 // pred_check
      _
    $region43: #{decoder_rnn_forward.1} parent=1 // pred_check_branch
      %92 = sbr.rel (0) target = $region45
    $region44: #{decoder_rnn_forward.1} parent=1 // pred_region
      %94 = vsyncadd [#allocation13], 0
      %s95 = sshll.u32 %s11, 4
      %s96 = int_to_ptr.hbm [resolvable:$true] %s95
      %s97 = sshll.u32 [#allocation12], 4
      %s98 = int_to_ptr.vmem [resolvable:$true] %s97
      %103 = dma.hbm_to_vmem [thread:$0]  %s96, 512, %s98, [#allocation13], 128, 128, 8
    $region45: #{decoder_rnn_forward.1} parent=1 // pred_fallthru
      _
    // Predicated region
    $region46: #{decoder_rnn_forward.1} parent=1 // pred_check
      _
    $region47: #{decoder_rnn_forward.1} parent=1 // pred_check_branch
      %105 = sbr.rel (0) target = $region49
    $region48: #{decoder_rnn_forward.1} parent=1 // pred_region
      _
    $region49: #{decoder_rnn_forward.1} parent=1 // pred_fallthru
      _
    // Predicated region
    $region50: #{decoder_rnn_forward.1} parent=1 // pred_check
      _
    $region51: #{decoder_rnn_forward.1} parent=1 // pred_check_branch
      %107 = sbr.rel (0) target = $region53
    $region52: #{decoder_rnn_forward.1} parent=1 // pred_region
      _
    $region53: #{decoder_rnn_forward.1} parent=1 // pred_fallthru
      _
    // Predicated region
    $region54: #{decoder_rnn_forward.1} parent=1 // pred_check
      _
    $region55: #{decoder_rnn_forward.1} parent=1 // pred_check_branch
      %109 = sbr.rel (0) target = $region57
    $region56: #{decoder_rnn_forward.1} parent=1 // pred_region
      _
    $region57: #{decoder_rnn_forward.1} parent=1 // pred_fallthru
      _
    // Predicated region
    $region58: #{decoder_rnn_forward.1} parent=1 // pred_check
      _
    $region59: #{decoder_rnn_forward.1} parent=1 // pred_check_branch
      %111 = sbr.rel (0) target = $region61
    $region60: #{decoder_rnn_forward.1} parent=1 // pred_region
      _
    $region61: #{decoder_rnn_forward.1} parent=1 // pred_fallthru
      _
    // Predicated region
    $region62: #{decoder_rnn_forward.1} parent=1 // pred_check
      _
    $region63: #{decoder_rnn_forward.1} parent=1 // pred_check_branch
      %113 = sbr.rel (0) target = $region65
    $region64: #{decoder_rnn_forward.1} parent=1 // pred_region
      _
    $region65: #{decoder_rnn_forward.1} parent=1 // pred_fallthru
      _
    // Predicated region
    $region66: #{decoder_rnn_forward.1} parent=1 // pred_check
      _
    $region67: #{decoder_rnn_forward.1} parent=1 // pred_check_branch
      %115 = sbr.rel (0) target = $region69
    $region68: #{decoder_rnn_forward.1} parent=1 // pred_region
      %117 = dma.done [#allocation7], 1024
    $region69: #{decoder_rnn_forward.1} parent=1 // pred_fallthru
      _
    // Predicated region
    $region70: #{decoder_rnn_forward.1} parent=1 // pred_check
      _
    $region71: #{decoder_rnn_forward.1} parent=1 // pred_check_branch
      %119 = sbr.rel (0) target = $region73
    $region72: #{decoder_rnn_forward.1} parent=1 // pred_region
      %121 = dma.done [#allocation10], 512
    $region73: #{decoder_rnn_forward.1} parent=1 // pred_fallthru
      _
    // Predicated region
    $region74: #{decoder_rnn_forward.1} parent=1 // pred_check
      _
    $region75: #{decoder_rnn_forward.1} parent=1 // pred_check_branch
      %123 = sbr.rel (0) target = $region77
    $region76: #{decoder_rnn_forward.1} parent=1 // pred_region
      %125 = dma.done [#allocation10], 512
    $region77: #{decoder_rnn_forward.1} parent=1 // pred_fallthru
      _
    // Predicated region
    $region78: #{decoder_rnn_forward.1} parent=1 // pred_check
      _
    $region79: #{decoder_rnn_forward.1} parent=1 // pred_check_branch
      %127 = sbr.rel (0) target = $region81
    $region80: #{decoder_rnn_forward.1} parent=1 // pred_region
      %129 = dma.done [#allocation13], 512
    $region81: #{decoder_rnn_forward.1} parent=1 // pred_fallthru
      _
    %s130 = sld [smem:[#allocation5]]
    %s131 = scalar_lea.vmem %s1, %s130
    %v132 = vld [vmem:[%s131] sm:$0x1]
    %vm133 = vcmask 253952
    %134 = vst.msk [vmem:[#allocation2] sm:$0x1] %vm133, %v132
    %s135 = sld [smem:[#allocation5 + $0x80]]
    %s136 = scalar_lea.vmem %s1, %s135
    %v137 = vld [vmem:[%s136] sm:$0x1]
    %138 = vst.msk [vmem:[#allocation2 + $0x1] sm:$0x1] %vm133, %v137
    %v139 = vld [vmem:[#allocation2] sm:$0x3]
    %vm140 = vcmask 261120
    %v141 = vsel %vm140, %v139, 0.0
    %v142 = vld [vmem:[%s2] sm:$0xff]
    %v143 = vld [vmem:[%s2 + $0x8] sm:$0xff]
    %v144 = vld [vmem:[%s2 + $0x10] sm:$0xff]
    %v145 = vld [vmem:[%s2 + $0x18] sm:$0xff]
    %v146 = vld [vmem:[%s2 + $0x20] sm:$0xff]
    %v147 = vld [vmem:[%s2 + $0x28] sm:$0xff]
    %v148 = vld [vmem:[%s2 + $0x30] sm:$0xff]
    %v149 = vld [vmem:[%s2 + $0x38] sm:$0xff]
    %v150 = vld [vmem:[%s3] sm:$0x1]
    %v152 = vperm.slane %v150, 0
    %vm154 = vcmask 523264
    %v156 = vsel %vm154, %v141, 0
    %158 = vmatpush.msra.mxu0 0.0
    %159 = vmatpush.msra.mxu0 0.0
    %160 = vmatpush.msra.mxu0 0.0
    %161 = vmatpush.msra.mxu0 0.0
    %162 = vmatpush.msra.mxu0 0.0
    %163 = vmatpush.msra.mxu0 0.0
    %164 = vmatpush.msra.mxu0 0.0
    %165 = vmatpush.msra.mxu0 0.0
    %166 = vmatpush.msra.mxu0 %v149
    %167 = vmatpush.msra.mxu0 %v148
    %168 = vmatpush.msra.mxu0 %v147
    %169 = vmatpush.msra.mxu0 %v146
    %170 = vmatpush.msra.mxu0 %v145
    %171 = vmatpush.msra.mxu0 %v144
    %172 = vmatpush.msra.mxu0 %v143
    %173 = vmatpush.msra.mxu0 %v142
    %174 = vmatmul.f32.gmra.mxu0 %v156
    %v175 = vpop.f32.mrf.mxu0
    %v176 = vadd.f32 %v152, %v175
    %177 = vdwg.mxu0
    %v178 = vxor.u32 %v176, 2147483648
    %v179 = vmul.f32 %v178, 1.442695
    %v180 = vpow.pop %v179
    %v181 = vadd.f32 %v180, 1.0
    %v182 = vrcp.pop %v181
    %v183 = vmul.f32 %v181, %v182
    %v184 = vsub.f32 1.0, %v183
    %v185 = vmul.f32 %v182, %v184
    %v186 = vadd.f32 %v182, %v185
    %vm187 = vweird.f32 %v181
    %vm188 = vweird.f32 %v182
    %vm189 = vmor %vm187, %vm188
    %v190 = vsel %vm189, %v182, %v186
    %v191 = vand.u32 2147483647, %v181
    %vm192 = vcmp.eq.f32.partialorder %v191, 8.507059e+37
    %v193 = vand.u32 %v181, 2147483648
    %v194 = vor.u32 1.1754944e-38, %v193
    %v195 = vsel %vm192, %v194, %v190
    %v196 = vmul.f32 1.0, %v195
    %v197 = vtanh.pop %v176
    %v198 = vmul.f32 %v196, 0.0
    %200 = vrot.lane.b32.xlu0 %v197, 64
    %v201 = vpop.permute.xlu0 %200
    %v203 = vmul.f32 %v196, %v201
    %205 = vrot.lane.b32.xlu0 %v203, 32
    %v206 = vpop.permute.xlu0 %205
    %v208 = vadd.f32 %v198, %v206
    %v209 = vtanh.pop %v208
    %211 = vrot.lane.b32.xlu0 %v209, 64
    %v212 = vpop.permute.xlu0 %211
    %v214 = vmul.f32 %v196, %v212
    %216 = vrot.lane.b32.xlu0 %v214, 32
    %v217 = vpop.permute.xlu0 %216
    %v219 = vsel %vm140, %v217, 0.0
    %v220 = vld [vmem:[#allocation6] sm:$0xff]
    %v221 = vld [vmem:[#allocation6 + $0x8] sm:$0xff]
    %v222 = vld [vmem:[#allocation6 + $0x10] sm:$0xff]
    %v223 = vld [vmem:[#allocation6 + $0x18] sm:$0xff]
    %v224 = vld [vmem:[#allocation6 + $0x20] sm:$0xff]
    %v225 = vld [vmem:[#allocation6 + $0x28] sm:$0xff]
    %v226 = vld [vmem:[#allocation6 + $0x30] sm:$0xff]
    %v227 = vld [vmem:[#allocation6 + $0x38] sm:$0xff]
    %v228 = vld [vmem:[%s5] sm:$0x1]
    %v230 = vperm.slane %v228, 0
    %v233 = vsel %vm154, %v219, 0
    %235 = vmatpush.msra.mxu0 0.0
    %236 = vmatpush.msra.mxu0 0.0
    %237 = vmatpush.msra.mxu0 0.0
    %238 = vmatpush.msra.mxu0 0.0
    %239 = vmatpush.msra.mxu0 0.0
    %240 = vmatpush.msra.mxu0 0.0
    %241 = vmatpush.msra.mxu0 0.0
    %242 = vmatpush.msra.mxu0 0.0
    %243 = vmatpush.msra.mxu0 %v227
    %244 = vmatpush.msra.mxu0 %v226
    %245 = vmatpush.msra.mxu0 %v225
    %246 = vmatpush.msra.mxu0 %v224
    %247 = vmatpush.msra.mxu0 %v223
    %248 = vmatpush.msra.mxu0 %v222
    %249 = vmatpush.msra.mxu0 %v221
    %250 = vmatpush.msra.mxu0 %v220
    %251 = vmatmul.f32.gmra.mxu0 %v233
    %v252 = vpop.f32.mrf.mxu0
    %v253 = vadd.f32 %v230, %v252
    %254 = vdwg.mxu0
    %v255 = vxor.u32 %v253, 2147483648
    %v256 = vmul.f32 %v255, 1.442695
    %v257 = vpow.pop %v256
    %v258 = vadd.f32 %v257, 1.0
    %v259 = vrcp.pop %v258
    %v260 = vmul.f32 %v258, %v259
    %v261 = vsub.f32 1.0, %v260
    %v262 = vmul.f32 %v259, %v261
    %v263 = vadd.f32 %v259, %v262
    %vm264 = vweird.f32 %v258
    %vm265 = vweird.f32 %v259
    %vm266 = vmor %vm264, %vm265
    %v267 = vsel %vm266, %v259, %v263
    %v268 = vand.u32 2147483647, %v258
    %vm269 = vcmp.eq.f32.partialorder %v268, 8.507059e+37
    %v270 = vand.u32 %v258, 2147483648
    %v271 = vor.u32 1.1754944e-38, %v270
    %v272 = vsel %vm269, %v271, %v267
    %v273 = vmul.f32 1.0, %v272
    %v274 = vtanh.pop %v253
    %v275 = vmul.f32 %v273, 0.0
    %277 = vrot.lane.b32.xlu0 %v274, 64
    %v278 = vpop.permute.xlu0 %277
    %v280 = vmul.f32 %v273, %v278
    %282 = vrot.lane.b32.xlu0 %v280, 32
    %v283 = vpop.permute.xlu0 %282
    %v285 = vadd.f32 %v275, %v283
    %v286 = vtanh.pop %v285
    %288 = vrot.lane.b32.xlu0 %v286, 64
    %v289 = vpop.permute.xlu0 %288
    %v291 = vmul.f32 %v273, %v289
    %293 = vrot.lane.b32.xlu0 %v291, 32
    %v294 = vpop.permute.xlu0 %293
    %296 = vst.msk [vmem:[#allocation3] sm:$0x1] %vm133, %v294
    %vm297 = vcmask 254977
    %298 = vst.msk [vmem:[#allocation3 + $0x7] sm:$0x2] %vm297, %v294
    %s299 = sld [smem:[#allocation5 + $0x1]]
    %s300 = scalar_lea.vmem %s1, %s299
    %v301 = vld [vmem:[%s300] sm:$0x1]
    %302 = vst.msk [vmem:[#allocation2] sm:$0x1] %vm133, %v301
    %s303 = sld [smem:[#allocation5 + $0x81]]
    %s304 = scalar_lea.vmem %s1, %s303
    %v305 = vld [vmem:[%s304] sm:$0x1]
    %306 = vst.msk [vmem:[#allocation2 + $0x1] sm:$0x1] %vm133, %v305
    %v307 = vld [vmem:[#allocation2] sm:$0x3]
    %308 = vrot.lane.b32.xlu0 %v214, 64
    %v309 = vpop.permute.xlu0 %308
    %v311 = vsel %vm140, %v307, %v309
    %v312 = vld [vmem:[%s2] sm:$0xff]
    %v313 = vld [vmem:[%s2 + $0x8] sm:$0xff]
    %v314 = vld [vmem:[%s2 + $0x10] sm:$0xff]
    %v315 = vld [vmem:[%s2 + $0x18] sm:$0xff]
    %v316 = vld [vmem:[%s2 + $0x20] sm:$0xff]
    %v317 = vld [vmem:[%s2 + $0x28] sm:$0xff]
    %v318 = vld [vmem:[%s2 + $0x30] sm:$0xff]
    %v319 = vld [vmem:[%s2 + $0x38] sm:$0xff]
    %v320 = vld [vmem:[%s3] sm:$0x1]
    %v322 = vperm.slane %v320, 0
    %v325 = vsel %vm154, %v311, 0
    %327 = vmatpush.msra.mxu0 0.0
    %328 = vmatpush.msra.mxu0 0.0
    %329 = vmatpush.msra.mxu0 0.0
    %330 = vmatpush.msra.mxu0 0.0
    %331 = vmatpush.msra.mxu0 0.0
    %332 = vmatpush.msra.mxu0 0.0
    %333 = vmatpush.msra.mxu0 0.0
    %334 = vmatpush.msra.mxu0 0.0
    %335 = vmatpush.msra.mxu0 %v319
    %336 = vmatpush.msra.mxu0 %v318
    %337 = vmatpush.msra.mxu0 %v317
    %338 = vmatpush.msra.mxu0 %v316
    %339 = vmatpush.msra.mxu0 %v315
    %340 = vmatpush.msra.mxu0 %v314
    %341 = vmatpush.msra.mxu0 %v313
    %342 = vmatpush.msra.mxu0 %v312
    %343 = vmatmul.f32.gmra.mxu0 %v325
    %v344 = vpop.f32.mrf.mxu0
    %v345 = vadd.f32 %v322, %v344
    %346 = vdwg.mxu0
    %v347 = vxor.u32 %v345, 2147483648
    %v348 = vmul.f32 %v347, 1.442695
    %v349 = vpow.pop %v348
    %v350 = vadd.f32 %v349, 1.0
    %v351 = vrcp.pop %v350
    %v352 = vmul.f32 %v350, %v351
    %v353 = vsub.f32 1.0, %v352
    %v354 = vmul.f32 %v351, %v353
    %v355 = vadd.f32 %v351, %v354
    %vm356 = vweird.f32 %v350
    %vm357 = vweird.f32 %v351
    %vm358 = vmor %vm356, %vm357
    %v359 = vsel %vm358, %v351, %v355
    %v360 = vand.u32 2147483647, %v350
    %vm361 = vcmp.eq.f32.partialorder %v360, 8.507059e+37
    %v362 = vand.u32 %v350, 2147483648
    %v363 = vor.u32 1.1754944e-38, %v362
    %v364 = vsel %vm361, %v363, %v359
    %v365 = vmul.f32 1.0, %v364
    %v366 = vtanh.pop %v345
    %v367 = vmul.f32 %v365, %v208
    %369 = vrot.lane.b32.xlu0 %v366, 64
    %v370 = vpop.permute.xlu0 %369
    %v372 = vmul.f32 %v365, %v370
    %374 = vrot.lane.b32.xlu0 %v372, 32
    %v375 = vpop.permute.xlu0 %374
    %v377 = vadd.f32 %v367, %v375
    %v378 = vtanh.pop %v377
    %380 = vrot.lane.b32.xlu0 %v378, 64
    %v381 = vpop.permute.xlu0 %380
    %v383 = vmul.f32 %v365, %v381
    %385 = vrot.lane.b32.xlu0 %v383, 32
    %v386 = vpop.permute.xlu0 %385
    %388 = vrot.lane.b32.xlu0 %v291, 64
    %v389 = vpop.permute.xlu0 %388
    %v391 = vsel %vm140, %v386, %v389
    %v392 = vld [vmem:[#allocation6] sm:$0xff]
    %v393 = vld [vmem:[#allocation6 + $0x8] sm:$0xff]
    %v394 = vld [vmem:[#allocation6 + $0x10] sm:$0xff]
    %v395 = vld [vmem:[#allocation6 + $0x18] sm:$0xff]
    %v396 = vld [vmem:[#allocation6 + $0x20] sm:$0xff]
    %v397 = vld [vmem:[#allocation6 + $0x28] sm:$0xff]
    %v398 = vld [vmem:[#allocation6 + $0x30] sm:$0xff]
    %v399 = vld [vmem:[#allocation6 + $0x38] sm:$0xff]
    %v400 = vld [vmem:[%s5] sm:$0x1]
    %v402 = vperm.slane %v400, 0
    %v405 = vsel %vm154, %v391, 0
    %407 = vmatpush.msra.mxu0 0.0
    %408 = vmatpush.msra.mxu0 0.0
    %409 = vmatpush.msra.mxu0 0.0
    %410 = vmatpush.msra.mxu0 0.0
    %411 = vmatpush.msra.mxu0 0.0
    %412 = vmatpush.msra.mxu0 0.0
    %413 = vmatpush.msra.mxu0 0.0
    %414 = vmatpush.msra.mxu0 0.0
    %415 = vmatpush.msra.mxu0 %v399
    %416 = vmatpush.msra.mxu0 %v398
    %417 = vmatpush.msra.mxu0 %v397
    %418 = vmatpush.msra.mxu0 %v396
    %419 = vmatpush.msra.mxu0 %v395
    %420 = vmatpush.msra.mxu0 %v394
    %421 = vmatpush.msra.mxu0 %v393
    %422 = vmatpush.msra.mxu0 %v392
    %423 = vmatmul.f32.gmra.mxu0 %v405
    %v424 = vpop.f32.mrf.mxu0
    %v425 = vadd.f32 %v402, %v424
    %426 = vdwg.mxu0
    %v427 = vxor.u32 %v425, 2147483648
    %v428 = vmul.f32 %v427, 1.442695
    %v429 = vpow.pop %v428
    %v430 = vadd.f32 %v429, 1.0
    %v431 = vrcp.pop %v430
    %v432 = vmul.f32 %v430, %v431
    %v433 = vsub.f32 1.0, %v432
    %v434 = vmul.f32 %v431, %v433
    %v435 = vadd.f32 %v431, %v434
    %vm436 = vweird.f32 %v430
    %vm437 = vweird.f32 %v431
    %vm438 = vmor %vm436, %vm437
    %v439 = vsel %vm438, %v431, %v435
    %v440 = vand.u32 2147483647, %v430
    %vm441 = vcmp.eq.f32.partialorder %v440, 8.507059e+37
    %v442 = vand.u32 %v430, 2147483648
    %v443 = vor.u32 1.1754944e-38, %v442
    %v444 = vsel %vm441, %v443, %v439
    %v445 = vmul.f32 1.0, %v444
    %v446 = vtanh.pop %v425
    %v447 = vmul.f32 %v445, %v285
    %449 = vrot.lane.b32.xlu0 %v446, 64
    %v450 = vpop.permute.xlu0 %449
    %v452 = vmul.f32 %v445, %v450
    %454 = vrot.lane.b32.xlu0 %v452, 32
    %v455 = vpop.permute.xlu0 %454
    %v457 = vadd.f32 %v447, %v455
    %v458 = vtanh.pop %v457
    %460 = vrot.lane.b32.xlu0 %v458, 64
    %v461 = vpop.permute.xlu0 %460
    %v463 = vmul.f32 %v445, %v461
    %465 = vrot.lane.b32.xlu0 %v463, 32
    %v466 = vpop.permute.xlu0 %465
    %468 = vst.msk [vmem:[#allocation3 + $0x1] sm:$0x1] %vm133, %v466
    %469 = vst.msk [vmem:[#allocation3 + $0x8] sm:$0x2] %vm297, %v466
    %s470 = sld [smem:[#allocation5 + $0x2]]
    %s471 = scalar_lea.vmem %s1, %s470
    %v472 = vld [vmem:[%s471] sm:$0x1]
    %473 = vst.msk [vmem:[#allocation2] sm:$0x1] %vm133, %v472
    %s474 = sld [smem:[#allocation5 + $0x82]]
    %s475 = scalar_lea.vmem %s1, %s474
    %v476 = vld [vmem:[%s475] sm:$0x1]
    %477 = vst.msk [vmem:[#allocation2 + $0x1] sm:$0x1] %vm133, %v476
    %v478 = vld [vmem:[#allocation2] sm:$0x3]
    %479 = vrot.lane.b32.xlu0 %v383, 64
    %v480 = vpop.permute.xlu0 %479
    %v482 = vsel %vm140, %v478, %v480
    %v483 = vld [vmem:[%s2] sm:$0xff]
    %v484 = vld [vmem:[%s2 + $0x8] sm:$0xff]
    %v485 = vld [vmem:[%s2 + $0x10] sm:$0xff]
    %v486 = vld [vmem:[%s2 + $0x18] sm:$0xff]
    %v487 = vld [vmem:[%s2 + $0x20] sm:$0xff]
    %v488 = vld [vmem:[%s2 + $0x28] sm:$0xff]
    %v489 = vld [vmem:[%s2 + $0x30] sm:$0xff]
    %v490 = vld [vmem:[%s2 + $0x38] sm:$0xff]
    %v491 = vld [vmem:[%s3] sm:$0x1]
    %v493 = vperm.slane %v491, 0
    %v496 = vsel %vm154, %v482, 0
    %498 = vmatpush.msra.mxu0 0.0
    %499 = vmatpush.msra.mxu0 0.0
    %500 = vmatpush.msra.mxu0 0.0
    %501 = vmatpush.msra.mxu0 0.0
    %502 = vmatpush.msra.mxu0 0.0
    %503 = vmatpush.msra.mxu0 0.0
    %504 = vmatpush.msra.mxu0 0.0
    %505 = vmatpush.msra.mxu0 0.0
    %506 = vmatpush.msra.mxu0 %v490
    %507 = vmatpush.msra.mxu0 %v489
    %508 = vmatpush.msra.mxu0 %v488
    %509 = vmatpush.msra.mxu0 %v487
    %510 = vmatpush.msra.mxu0 %v486
    %511 = vmatpush.msra.mxu0 %v485
    %512 = vmatpush.msra.mxu0 %v484
    %513 = vmatpush.msra.mxu0 %v483
    %514 = vmatmul.f32.gmra.mxu0 %v496
    %v515 = vpop.f32.mrf.mxu0
    %v516 = vadd.f32 %v493, %v515
    %517 = vdwg.mxu0
    %v518 = vxor.u32 %v516, 2147483648
    %v519 = vmul.f32 %v518, 1.442695
    %v520 = vpow.pop %v519
    %v521 = vadd.f32 %v520, 1.0
    %v522 = vrcp.pop %v521
    %v523 = vmul.f32 %v521, %v522
    %v524 = vsub.f32 1.0, %v523
    %v525 = vmul.f32 %v522, %v524
    %v526 = vadd.f32 %v522, %v525
    %vm527 = vweird.f32 %v521
    %vm528 = vweird.f32 %v522
    %vm529 = vmor %vm527, %vm528
    %v530 = vsel %vm529, %v522, %v526
    %v531 = vand.u32 2147483647, %v521
    %vm532 = vcmp.eq.f32.partialorder %v531, 8.507059e+37
    %v533 = vand.u32 %v521, 2147483648
    %v534 = vor.u32 1.1754944e-38, %v533
    %v535 = vsel %vm532, %v534, %v530
    %v536 = vmul.f32 1.0, %v535
    %v537 = vtanh.pop %v516
    %v538 = vmul.f32 %v536, %v377
    %540 = vrot.lane.b32.xlu0 %v537, 64
    %v541 = vpop.permute.xlu0 %540
    %v543 = vmul.f32 %v536, %v541
    %545 = vrot.lane.b32.xlu0 %v543, 32
    %v546 = vpop.permute.xlu0 %545
    %v548 = vadd.f32 %v538, %v546
    %v549 = vtanh.pop %v548
    %551 = vrot.lane.b32.xlu0 %v549, 64
    %v552 = vpop.permute.xlu0 %551
    %v554 = vmul.f32 %v536, %v552
    %556 = vrot.lane.b32.xlu0 %v554, 32
    %v557 = vpop.permute.xlu0 %556
    %559 = vrot.lane.b32.xlu0 %v463, 64
    %v560 = vpop.permute.xlu0 %559
    %v562 = vsel %vm140, %v557, %v560
    %v563 = vld [vmem:[#allocation6] sm:$0xff]
    %v564 = vld [vmem:[#allocation6 + $0x8] sm:$0xff]
    %v565 = vld [vmem:[#allocation6 + $0x10] sm:$0xff]
    %v566 = vld [vmem:[#allocation6 + $0x18] sm:$0xff]
    %v567 = vld [vmem:[#allocation6 + $0x20] sm:$0xff]
    %v568 = vld [vmem:[#allocation6 + $0x28] sm:$0xff]
    %v569 = vld [vmem:[#allocation6 + $0x30] sm:$0xff]
    %v570 = vld [vmem:[#allocation6 + $0x38] sm:$0xff]
    %v571 = vld [vmem:[%s5] sm:$0x1]
    %v573 = vperm.slane %v571, 0
    %v576 = vsel %vm154, %v562, 0
    %578 = vmatpush.msra.mxu0 0.0
    %579 = vmatpush.msra.mxu0 0.0
    %580 = vmatpush.msra.mxu0 0.0
    %581 = vmatpush.msra.mxu0 0.0
    %582 = vmatpush.msra.mxu0 0.0
    %583 = vmatpush.msra.mxu0 0.0
    %584 = vmatpush.msra.mxu0 0.0
    %585 = vmatpush.msra.mxu0 0.0
    %586 = vmatpush.msra.mxu0 %v570
    %587 = vmatpush.msra.mxu0 %v569
    %588 = vmatpush.msra.mxu0 %v568
    %589 = vmatpush.msra.mxu0 %v567
    %590 = vmatpush.msra.mxu0 %v566
    %591 = vmatpush.msra.mxu0 %v565
    %592 = vmatpush.msra.mxu0 %v564
    %593 = vmatpush.msra.mxu0 %v563
    %594 = vmatmul.f32.gmra.mxu0 %v576
    %v595 = vpop.f32.mrf.mxu0
    %v596 = vadd.f32 %v573, %v595
    %597 = vdwg.mxu0
    %v598 = vxor.u32 %v596, 2147483648
    %v599 = vmul.f32 %v598, 1.442695
    %v600 = vpow.pop %v599
    %v601 = vadd.f32 %v600, 1.0
    %v602 = vrcp.pop %v601
    %v603 = vmul.f32 %v601, %v602
    %v604 = vsub.f32 1.0, %v603
    %v605 = vmul.f32 %v602, %v604
    %v606 = vadd.f32 %v602, %v605
    %vm607 = vweird.f32 %v601
    %vm608 = vweird.f32 %v602
    %vm609 = vmor %vm607, %vm608
    %v610 = vsel %vm609, %v602, %v606
    %v611 = vand.u32 2147483647, %v601
    %vm612 = vcmp.eq.f32.partialorder %v611, 8.507059e+37
    %v613 = vand.u32 %v601, 2147483648
    %v614 = vor.u32 1.1754944e-38, %v613
    %v615 = vsel %vm612, %v614, %v610
    %v616 = vmul.f32 1.0, %v615
    %v617 = vtanh.pop %v596
    %v618 = vmul.f32 %v616, %v457
    %620 = vrot.lane.b32.xlu0 %v617, 64
    %v621 = vpop.permute.xlu0 %620
    %v623 = vmul.f32 %v616, %v621
    %625 = vrot.lane.b32.xlu0 %v623, 32
    %v626 = vpop.permute.xlu0 %625
    %v628 = vadd.f32 %v618, %v626
    %v629 = vtanh.pop %v628
    %631 = vrot.lane.b32.xlu0 %v629, 64
    %v632 = vpop.permute.xlu0 %631
    %v634 = vmul.f32 %v616, %v632
    %636 = vrot.lane.b32.xlu0 %v634, 32
    %v637 = vpop.permute.xlu0 %636
    %639 = vst.msk [vmem:[#allocation3 + $0x2] sm:$0x1] %vm133, %v637
    %640 = vst.msk [vmem:[#allocation3 + $0x9] sm:$0x2] %vm297, %v637
    %s641 = sld [smem:[#allocation5 + $0x3]]
    %s642 = scalar_lea.vmem %s1, %s641
    %v643 = vld [vmem:[%s642] sm:$0x1]
    %644 = vst.msk [vmem:[#allocation2] sm:$0x1] %vm133, %v643
    %s645 = sld [smem:[#allocation5 + $0x83]]
    %s646 = scalar_lea.vmem %s1, %s645
    %v647 = vld [vmem:[%s646] sm:$0x1]
    %648 = vst.msk [vmem:[#allocation2 + $0x1] sm:$0x1] %vm133, %v647
    %v649 = vld [vmem:[#allocation2] sm:$0x3]
    %650 = vrot.lane.b32.xlu0 %v554, 64
    %v651 = vpop.permute.xlu0 %650
    %v653 = vsel %vm140, %v649, %v651
    %v654 = vld [vmem:[%s2] sm:$0xff]
    %v655 = vld [vmem:[%s2 + $0x8] sm:$0xff]
    %v656 = vld [vmem:[%s2 + $0x10] sm:$0xff]
    %v657 = vld [vmem:[%s2 + $0x18] sm:$0xff]
    %v658 = vld [vmem:[%s2 + $0x20] sm:$0xff]
    %v659 = vld [vmem:[%s2 + $0x28] sm:$0xff]
    %v660 = vld [vmem:[%s2 + $0x30] sm:$0xff]
    %v661 = vld [vmem:[%s2 + $0x38] sm:$0xff]
    %v662 = vld [vmem:[%s3] sm:$0x1]
    %v664 = vperm.slane %v662, 0
    %v667 = vsel %vm154, %v653, 0
    %669 = vmatpush.msra.mxu0 0.0
    %670 = vmatpush.msra.mxu0 0.0
    %671 = vmatpush.msra.mxu0 0.0
    %672 = vmatpush.msra.mxu0 0.0
    %673 = vmatpush.msra.mxu0 0.0
    %674 = vmatpush.msra.mxu0 0.0
    %675 = vmatpush.msra.mxu0 0.0
    %676 = vmatpush.msra.mxu0 0.0
    %677 = vmatpush.msra.mxu0 %v661
    %678 = vmatpush.msra.mxu0 %v660
    %679 = vmatpush.msra.mxu0 %v659
    %680 = vmatpush.msra.mxu0 %v658
    %681 = vmatpush.msra.mxu0 %v657
    %682 = vmatpush.msra.mxu0 %v656
    %683 = vmatpush.msra.mxu0 %v655
    %684 = vmatpush.msra.mxu0 %v654
    %685 = vmatmul.f32.gmra.mxu0 %v667
    %v686 = vpop.f32.mrf.mxu0
    %v687 = vadd.f32 %v664, %v686
    %688 = vdwg.mxu0
    %v689 = vxor.u32 %v687, 2147483648
    %v690 = vmul.f32 %v689, 1.442695
    %v691 = vpow.pop %v690
    %v692 = vadd.f32 %v691, 1.0
    %v693 = vrcp.pop %v692
    %v694 = vmul.f32 %v692, %v693
    %v695 = vsub.f32 1.0, %v694
    %v696 = vmul.f32 %v693, %v695
    %v697 = vadd.f32 %v693, %v696
    %vm698 = vweird.f32 %v692
    %vm699 = vweird.f32 %v693
    %vm700 = vmor %vm698, %vm699
    %v701 = vsel %vm700, %v693, %v697
    %v702 = vand.u32 2147483647, %v692
    %vm703 = vcmp.eq.f32.partialorder %v702, 8.507059e+37
    %v704 = vand.u32 %v692, 2147483648
    %v705 = vor.u32 1.1754944e-38, %v704
    %v706 = vsel %vm703, %v705, %v701
    %v707 = vmul.f32 1.0, %v706
    %v708 = vtanh.pop %v687
    %v709 = vmul.f32 %v707, %v548
    %711 = vrot.lane.b32.xlu0 %v708, 64
    %v712 = vpop.permute.xlu0 %711
    %v714 = vmul.f32 %v707, %v712
    %716 = vrot.lane.b32.xlu0 %v714, 32
    %v717 = vpop.permute.xlu0 %716
    %v719 = vadd.f32 %v709, %v717
    %v720 = vtanh.pop %v719
    %722 = vrot.lane.b32.xlu0 %v720, 64
    %v723 = vpop.permute.xlu0 %722
    %v725 = vmul.f32 %v707, %v723
    %727 = vrot.lane.b32.xlu0 %v725, 32
    %v728 = vpop.permute.xlu0 %727
    %730 = vrot.lane.b32.xlu0 %v634, 64
    %v731 = vpop.permute.xlu0 %730
    %v733 = vsel %vm140, %v728, %v731
    %v734 = vld [vmem:[#allocation6] sm:$0xff]
    %v735 = vld [vmem:[#allocation6 + $0x8] sm:$0xff]
    %v736 = vld [vmem:[#allocation6 + $0x10] sm:$0xff]
    %v737 = vld [vmem:[#allocation6 + $0x18] sm:$0xff]
    %v738 = vld [vmem:[#allocation6 + $0x20] sm:$0xff]
    %v739 = vld [vmem:[#allocation6 + $0x28] sm:$0xff]
    %v740 = vld [vmem:[#allocation6 + $0x30] sm:$0xff]
    %v741 = vld [vmem:[#allocation6 + $0x38] sm:$0xff]
    %v742 = vld [vmem:[%s5] sm:$0x1]
    %v744 = vperm.slane %v742, 0
    %v747 = vsel %vm154, %v733, 0
    %749 = vmatpush.msra.mxu0 0.0
    %750 = vmatpush.msra.mxu0 0.0
    %751 = vmatpush.msra.mxu0 0.0
    %752 = vmatpush.msra.mxu0 0.0
    %753 = vmatpush.msra.mxu0 0.0
    %754 = vmatpush.msra.mxu0 0.0
    %755 = vmatpush.msra.mxu0 0.0
    %756 = vmatpush.msra.mxu0 0.0
    %757 = vmatpush.msra.mxu0 %v741
    %758 = vmatpush.msra.mxu0 %v740
    %759 = vmatpush.msra.mxu0 %v739
    %760 = vmatpush.msra.mxu0 %v738
    %761 = vmatpush.msra.mxu0 %v737
    %762 = vmatpush.msra.mxu0 %v736
    %763 = vmatpush.msra.mxu0 %v735
    %764 = vmatpush.msra.mxu0 %v734
    %765 = vmatmul.f32.gmra.mxu0 %v747
    %v766 = vpop.f32.mrf.mxu0
    %v767 = vadd.f32 %v744, %v766
    %768 = vdwg.mxu0
    %v769 = vxor.u32 %v767, 2147483648
    %v770 = vmul.f32 %v769, 1.442695
    %v771 = vpow.pop %v770
    %v772 = vadd.f32 %v771, 1.0
    %v773 = vrcp.pop %v772
    %v774 = vmul.f32 %v772, %v773
    %v775 = vsub.f32 1.0, %v774
    %v776 = vmul.f32 %v773, %v775
    %v777 = vadd.f32 %v773, %v776
    %vm778 = vweird.f32 %v772
    %vm779 = vweird.f32 %v773
    %vm780 = vmor %vm778, %vm779
    %v781 = vsel %vm780, %v773, %v777
    %v782 = vand.u32 2147483647, %v772
    %vm783 = vcmp.eq.f32.partialorder %v782, 8.507059e+37
    %v784 = vand.u32 %v772, 2147483648
    %v785 = vor.u32 1.1754944e-38, %v784
    %v786 = vsel %vm783, %v785, %v781
    %v787 = vmul.f32 1.0, %v786
    %v788 = vtanh.pop %v767
    %v789 = vmul.f32 %v787, %v628
    %791 = vrot.lane.b32.xlu0 %v788, 64
    %v792 = vpop.permute.xlu0 %791
    %v794 = vmul.f32 %v787, %v792
    %796 = vrot.lane.b32.xlu0 %v794, 32
    %v797 = vpop.permute.xlu0 %796
    %v799 = vadd.f32 %v789, %v797
    %v800 = vtanh.pop %v799
    %802 = vrot.lane.b32.xlu0 %v800, 64
    %v803 = vpop.permute.xlu0 %802
    %v805 = vmul.f32 %v787, %v803
    %807 = vrot.lane.b32.xlu0 %v805, 32
    %v808 = vpop.permute.xlu0 %807
    %810 = vst.msk [vmem:[#allocation3 + $0x3] sm:$0x1] %vm133, %v808
    %811 = vst.msk [vmem:[#allocation3 + $0xa] sm:$0x2] %vm297, %v808
    %s812 = sld [smem:[#allocation5 + $0x4]]
    %s813 = scalar_lea.vmem %s1, %s812
    %v814 = vld [vmem:[%s813] sm:$0x1]
    %815 = vst.msk [vmem:[#allocation2] sm:$0x1] %vm133, %v814
    %s816 = sld [smem:[#allocation5 + $0x84]]
    %s817 = scalar_lea.vmem %s1, %s816
    %v818 = vld [vmem:[%s817] sm:$0x1]
    %819 = vst.msk [vmem:[#allocation2 + $0x1] sm:$0x1] %vm133, %v818
    %v820 = vld [vmem:[#allocation2] sm:$0x3]
    %821 = vrot.lane.b32.xlu0 %v725, 64
    %v822 = vpop.permute.xlu0 %821
    %v824 = vsel %vm140, %v820, %v822
    %v825 = vld [vmem:[%s2] sm:$0xff]
    %v826 = vld [vmem:[%s2 + $0x8] sm:$0xff]
    %v827 = vld [vmem:[%s2 + $0x10] sm:$0xff]
    %v828 = vld [vmem:[%s2 + $0x18] sm:$0xff]
    %v829 = vld [vmem:[%s2 + $0x20] sm:$0xff]
    %v830 = vld [vmem:[%s2 + $0x28] sm:$0xff]
    %v831 = vld [vmem:[%s2 + $0x30] sm:$0xff]
    %v832 = vld [vmem:[%s2 + $0x38] sm:$0xff]
    %v833 = vld [vmem:[%s3] sm:$0x1]
    %v835 = vperm.slane %v833, 0
    %v838 = vsel %vm154, %v824, 0
    %840 = vmatpush.msra.mxu0 0.0
    %841 = vmatpush.msra.mxu0 0.0
    %842 = vmatpush.msra.mxu0 0.0
    %843 = vmatpush.msra.mxu0 0.0
    %844 = vmatpush.msra.mxu0 0.0
    %845 = vmatpush.msra.mxu0 0.0
    %846 = vmatpush.msra.mxu0 0.0
    %847 = vmatpush.msra.mxu0 0.0
    %848 = vmatpush.msra.mxu0 %v832
    %849 = vmatpush.msra.mxu0 %v831
    %850 = vmatpush.msra.mxu0 %v830
    %851 = vmatpush.msra.mxu0 %v829
    %852 = vmatpush.msra.mxu0 %v828
    %853 = vmatpush.msra.mxu0 %v827
    %854 = vmatpush.msra.mxu0 %v826
    %855 = vmatpush.msra.mxu0 %v825
    %856 = vmatmul.f32.gmra.mxu0 %v838
    %v857 = vpop.f32.mrf.mxu0
    %v858 = vadd.f32 %v835, %v857
    %859 = vdwg.mxu0
    %v860 = vxor.u32 %v858, 2147483648
    %v861 = vmul.f32 %v860, 1.442695
    %v862 = vpow.pop %v861
    %v863 = vadd.f32 %v862, 1.0
    %v864 = vrcp.pop %v863
    %v865 = vmul.f32 %v863, %v864
    %v866 = vsub.f32 1.0, %v865
    %v867 = vmul.f32 %v864, %v866
    %v868 = vadd.f32 %v864, %v867
    %vm869 = vweird.f32 %v863
    %vm870 = vweird.f32 %v864
    %vm871 = vmor %vm869, %vm870
    %v872 = vsel %vm871, %v864, %v868
    %v873 = vand.u32 2147483647, %v863
    %vm874 = vcmp.eq.f32.partialorder %v873, 8.507059e+37
    %v875 = vand.u32 %v863, 2147483648
    %v876 = vor.u32 1.1754944e-38, %v875
    %v877 = vsel %vm874, %v876, %v872
    %v878 = vmul.f32 1.0, %v877
    %v879 = vtanh.pop %v858
    %v880 = vmul.f32 %v878, %v719
    %882 = vrot.lane.b32.xlu0 %v879, 64
    %v883 = vpop.permute.xlu0 %882
    %v885 = vmul.f32 %v878, %v883
    %887 = vrot.lane.b32.xlu0 %v885, 32
    %v888 = vpop.permute.xlu0 %887
    %v890 = vadd.f32 %v880, %v888
    %v891 = vtanh.pop %v890
    %893 = vrot.lane.b32.xlu0 %v891, 64
    %v894 = vpop.permute.xlu0 %893
    %v896 = vmul.f32 %v878, %v894
    %898 = vrot.lane.b32.xlu0 %v896, 32
    %v899 = vpop.permute.xlu0 %898
    %901 = vrot.lane.b32.xlu0 %v805, 64
    %v902 = vpop.permute.xlu0 %901
    %v904 = vsel %vm140, %v899, %v902
    %v905 = vld [vmem:[#allocation6] sm:$0xff]
    %v906 = vld [vmem:[#allocation6 + $0x8] sm:$0xff]
    %v907 = vld [vmem:[#allocation6 + $0x10] sm:$0xff]
    %v908 = vld [vmem:[#allocation6 + $0x18] sm:$0xff]
    %v909 = vld [vmem:[#allocation6 + $0x20] sm:$0xff]
    %v910 = vld [vmem:[#allocation6 + $0x28] sm:$0xff]
    %v911 = vld [vmem:[#allocation6 + $0x30] sm:$0xff]
    %v912 = vld [vmem:[#allocation6 + $0x38] sm:$0xff]
    %v913 = vld [vmem:[%s5] sm:$0x1]
    %v915 = vperm.slane %v913, 0
    %v918 = vsel %vm154, %v904, 0
    %920 = vmatpush.msra.mxu0 0.0
    %921 = vmatpush.msra.mxu0 0.0
    %922 = vmatpush.msra.mxu0 0.0
    %923 = vmatpush.msra.mxu0 0.0
    %924 = vmatpush.msra.mxu0 0.0
    %925 = vmatpush.msra.mxu0 0.0
    %926 = vmatpush.msra.mxu0 0.0
    %927 = vmatpush.msra.mxu0 0.0
    %928 = vmatpush.msra.mxu0 %v912
    %929 = vmatpush.msra.mxu0 %v911
    %930 = vmatpush.msra.mxu0 %v910
    %931 = vmatpush.msra.mxu0 %v909
    %932 = vmatpush.msra.mxu0 %v908
    %933 = vmatpush.msra.mxu0 %v907
    %934 = vmatpush.msra.mxu0 %v906
    %935 = vmatpush.msra.mxu0 %v905
    %936 = vmatmul.f32.gmra.mxu0 %v918
    %v937 = vpop.f32.mrf.mxu0
    %v938 = vadd.f32 %v915, %v937
    %939 = vdwg.mxu0
    %v940 = vxor.u32 %v938, 2147483648
    %v941 = vmul.f32 %v940, 1.442695
    %v942 = vpow.pop %v941
    %v943 = vadd.f32 %v942, 1.0
    %v944 = vrcp.pop %v943
    %v945 = vmul.f32 %v943, %v944
    %v946 = vsub.f32 1.0, %v945
    %v947 = vmul.f32 %v944, %v946
    %v948 = vadd.f32 %v944, %v947
    %vm949 = vweird.f32 %v943
    %vm950 = vweird.f32 %v944
    %vm951 = vmor %vm949, %vm950
    %v952 = vsel %vm951, %v944, %v948
    %v953 = vand.u32 2147483647, %v943
    %vm954 = vcmp.eq.f32.partialorder %v953, 8.507059e+37
    %v955 = vand.u32 %v943, 2147483648
    %v956 = vor.u32 1.1754944e-38, %v955
    %v957 = vsel %vm954, %v956, %v952
    %v958 = vmul.f32 1.0, %v957
    %v959 = vtanh.pop %v938
    %v960 = vmul.f32 %v958, %v799
    %962 = vrot.lane.b32.xlu0 %v959, 64
    %v963 = vpop.permute.xlu0 %962
    %v965 = vmul.f32 %v958, %v963
    %967 = vrot.lane.b32.xlu0 %v965, 32
    %v968 = vpop.permute.xlu0 %967
    %v970 = vadd.f32 %v960, %v968
    %v971 = vtanh.pop %v970
    %973 = vrot.lane.b32.xlu0 %v971, 64
    %v974 = vpop.permute.xlu0 %973
    %v976 = vmul.f32 %v958, %v974
    %978 = vrot.lane.b32.xlu0 %v976, 32
    %v979 = vpop.permute.xlu0 %978
    %981 = vst.msk [vmem:[#allocation3 + $0x4] sm:$0x1] %vm133, %v979
    %982 = vst.msk [vmem:[#allocation3 + $0xb] sm:$0x2] %vm297, %v979
    %s983 = sld [smem:[#allocation5 + $0x5]]
    %s984 = scalar_lea.vmem %s1, %s983
    %v985 = vld [vmem:[%s984] sm:$0x1]
    %986 = vst.msk [vmem:[#allocation2] sm:$0x1] %vm133, %v985
    %s987 = sld [smem:[#allocation5 + $0x85]]
    %s988 = scalar_lea.vmem %s1, %s987
    %v989 = vld [vmem:[%s988] sm:$0x1]
    %990 = vst.msk [vmem:[#allocation2 + $0x1] sm:$0x1] %vm133, %v989
    %v991 = vld [vmem:[#allocation2] sm:$0x3]
    %992 = vrot.lane.b32.xlu0 %v896, 64
    %v993 = vpop.permute.xlu0 %992
    %v995 = vsel %vm140, %v991, %v993
    %v996 = vld [vmem:[%s2] sm:$0xff]
    %v997 = vld [vmem:[%s2 + $0x8] sm:$0xff]
    %v998 = vld [vmem:[%s2 + $0x10] sm:$0xff]
    %v999 = vld [vmem:[%s2 + $0x18] sm:$0xff]
    %v1000 = vld [vmem:[%s2 + $0x20] sm:$0xff]
    %v1001 = vld [vmem:[%s2 + $0x28] sm:$0xff]
    %v1002 = vld [vmem:[%s2 + $0x30] sm:$0xff]
    %v1003 = vld [vmem:[%s2 + $0x38] sm:$0xff]
    %v1004 = vld [vmem:[%s3] sm:$0x1]
    %v1006 = vperm.slane %v1004, 0
    %v1009 = vsel %vm154, %v995, 0
    %1011 = vmatpush.msra.mxu0 0.0
    %1012 = vmatpush.msra.mxu0 0.0
    %1013 = vmatpush.msra.mxu0 0.0
    %1014 = vmatpush.msra.mxu0 0.0
    %1015 = vmatpush.msra.mxu0 0.0
    %1016 = vmatpush.msra.mxu0 0.0
    %1017 = vmatpush.msra.mxu0 0.0
    %1018 = vmatpush.msra.mxu0 0.0
    %1019 = vmatpush.msra.mxu0 %v1003
    %1020 = vmatpush.msra.mxu0 %v1002
    %1021 = vmatpush.msra.mxu0 %v1001
    %1022 = vmatpush.msra.mxu0 %v1000
    %1023 = vmatpush.msra.mxu0 %v999
    %1024 = vmatpush.msra.mxu0 %v998
    %1025 = vmatpush.msra.mxu0 %v997
    %1026 = vmatpush.msra.mxu0 %v996
    %1027 = vmatmul.f32.gmra.mxu0 %v1009
    %v1028 = vpop.f32.mrf.mxu0
    %v1029 = vadd.f32 %v1006, %v1028
    %1030 = vdwg.mxu0
    %v1031 = vxor.u32 %v1029, 2147483648
    %v1032 = vmul.f32 %v1031, 1.442695
    %v1033 = vpow.pop %v1032
    %v1034 = vadd.f32 %v1033, 1.0
    %v1035 = vrcp.pop %v1034
    %v1036 = vmul.f32 %v1034, %v1035
    %v1037 = vsub.f32 1.0, %v1036
    %v1038 = vmul.f32 %v1035, %v1037
    %v1039 = vadd.f32 %v1035, %v1038
    %vm1040 = vweird.f32 %v1034
    %vm1041 = vweird.f32 %v1035
    %vm1042 = vmor %vm1040, %vm1041
    %v1043 = vsel %vm1042, %v1035, %v1039
    %v1044 = vand.u32 2147483647, %v1034
    %vm1045 = vcmp.eq.f32.partialorder %v1044, 8.507059e+37
    %v1046 = vand.u32 %v1034, 2147483648
    %v1047 = vor.u32 1.1754944e-38, %v1046
    %v1048 = vsel %vm1045, %v1047, %v1043
    %v1049 = vmul.f32 1.0, %v1048
    %v1050 = vtanh.pop %v1029
    %v1051 = vmul.f32 %v1049, %v890
    %1053 = vrot.lane.b32.xlu0 %v1050, 64
    %v1054 = vpop.permute.xlu0 %1053
    %v1056 = vmul.f32 %v1049, %v1054
    %1058 = vrot.lane.b32.xlu0 %v1056, 32
    %v1059 = vpop.permute.xlu0 %1058
    %v1061 = vadd.f32 %v1051, %v1059
    %v1062 = vtanh.pop %v1061
    %1064 = vrot.lane.b32.xlu0 %v1062, 64
    %v1065 = vpop.permute.xlu0 %1064
    %v1067 = vmul.f32 %v1049, %v1065
    %1069 = vrot.lane.b32.xlu0 %v1067, 32
    %v1070 = vpop.permute.xlu0 %1069
    %1072 = vrot.lane.b32.xlu0 %v976, 64
    %v1073 = vpop.permute.xlu0 %1072
    %v1075 = vsel %vm140, %v1070, %v1073
    %v1076 = vld [vmem:[#allocation6] sm:$0xff]
    %v1077 = vld [vmem:[#allocation6 + $0x8] sm:$0xff]
    %v1078 = vld [vmem:[#allocation6 + $0x10] sm:$0xff]
    %v1079 = vld [vmem:[#allocation6 + $0x18] sm:$0xff]
    %v1080 = vld [vmem:[#allocation6 + $0x20] sm:$0xff]
    %v1081 = vld [vmem:[#allocation6 + $0x28] sm:$0xff]
    %v1082 = vld [vmem:[#allocation6 + $0x30] sm:$0xff]
    %v1083 = vld [vmem:[#allocation6 + $0x38] sm:$0xff]
    %v1084 = vld [vmem:[%s5] sm:$0x1]
    %v1086 = vperm.slane %v1084, 0
    %v1089 = vsel %vm154, %v1075, 0
    %1091 = vmatpush.msra.mxu0 0.0
    %1092 = vmatpush.msra.mxu0 0.0
    %1093 = vmatpush.msra.mxu0 0.0
    %1094 = vmatpush.msra.mxu0 0.0
    %1095 = vmatpush.msra.mxu0 0.0
    %1096 = vmatpush.msra.mxu0 0.0
    %1097 = vmatpush.msra.mxu0 0.0
    %1098 = vmatpush.msra.mxu0 0.0
    %1099 = vmatpush.msra.mxu0 %v1083
    %1100 = vmatpush.msra.mxu0 %v1082
    %1101 = vmatpush.msra.mxu0 %v1081
    %1102 = vmatpush.msra.mxu0 %v1080
    %1103 = vmatpush.msra.mxu0 %v1079
    %1104 = vmatpush.msra.mxu0 %v1078
    %1105 = vmatpush.msra.mxu0 %v1077
    %1106 = vmatpush.msra.mxu0 %v1076
    %1107 = vmatmul.f32.gmra.mxu0 %v1089
    %v1108 = vpop.f32.mrf.mxu0
    %v1109 = vadd.f32 %v1086, %v1108
    %1110 = vdwg.mxu0
    %v1111 = vxor.u32 %v1109, 2147483648
    %v1112 = vmul.f32 %v1111, 1.442695
    %v1113 = vpow.pop %v1112
    %v1114 = vadd.f32 %v1113, 1.0
    %v1115 = vrcp.pop %v1114
    %v1116 = vmul.f32 %v1114, %v1115
    %v1117 = vsub.f32 1.0, %v1116
    %v1118 = vmul.f32 %v1115, %v1117
    %v1119 = vadd.f32 %v1115, %v1118
    %vm1120 = vweird.f32 %v1114
    %vm1121 = vweird.f32 %v1115
    %vm1122 = vmor %vm1120, %vm1121
    %v1123 = vsel %vm1122, %v1115, %v1119
    %v1124 = vand.u32 2147483647, %v1114
    %vm1125 = vcmp.eq.f32.partialorder %v1124, 8.507059e+37
    %v1126 = vand.u32 %v1114, 2147483648
    %v1127 = vor.u32 1.1754944e-38, %v1126
    %v1128 = vsel %vm1125, %v1127, %v1123
    %v1129 = vmul.f32 1.0, %v1128
    %v1130 = vtanh.pop %v1109
    %v1131 = vmul.f32 %v1129, %v970
    %1133 = vrot.lane.b32.xlu0 %v1130, 64
    %v1134 = vpop.permute.xlu0 %1133
    %v1136 = vmul.f32 %v1129, %v1134
    %1138 = vrot.lane.b32.xlu0 %v1136, 32
    %v1139 = vpop.permute.xlu0 %1138
    %v1141 = vadd.f32 %v1131, %v1139
    %v1142 = vtanh.pop %v1141
    %1144 = vrot.lane.b32.xlu0 %v1142, 64
    %v1145 = vpop.permute.xlu0 %1144
    %v1147 = vmul.f32 %v1129, %v1145
    %1149 = vrot.lane.b32.xlu0 %v1147, 32
    %v1150 = vpop.permute.xlu0 %1149
    %1152 = vst.msk [vmem:[#allocation3 + $0x5] sm:$0x1] %vm133, %v1150
    %1153 = vst.msk [vmem:[#allocation3 + $0xc] sm:$0x2] %vm297, %v1150
    %s1154 = sld [smem:[#allocation5 + $0x6]]
    %s1155 = scalar_lea.vmem %s1, %s1154
    %v1156 = vld [vmem:[%s1155] sm:$0x1]
    %1157 = vst.msk [vmem:[#allocation2] sm:$0x1] %vm133, %v1156
    %s1158 = sld [smem:[#allocation5 + $0x86]]
    %s1159 = scalar_lea.vmem %s1, %s1158
    %v1160 = vld [vmem:[%s1159] sm:$0x1]
    %1161 = vst.msk [vmem:[#allocation2 + $0x1] sm:$0x1] %vm133, %v1160
    %v1162 = vld [vmem:[#allocation2] sm:$0x3]
    %1163 = vrot.lane.b32.xlu0 %v1067, 64
    %v1164 = vpop.permute.xlu0 %1163
    %v1166 = vsel %vm140, %v1162, %v1164
    %v1167 = vld [vmem:[%s2] sm:$0xff]
    %v1168 = vld [vmem:[%s2 + $0x8] sm:$0xff]
    %v1169 = vld [vmem:[%s2 + $0x10] sm:$0xff]
    %v1170 = vld [vmem:[%s2 + $0x18] sm:$0xff]
    %v1171 = vld [vmem:[%s2 + $0x20] sm:$0xff]
    %v1172 = vld [vmem:[%s2 + $0x28] sm:$0xff]
    %v1173 = vld [vmem:[%s2 + $0x30] sm:$0xff]
    %v1174 = vld [vmem:[%s2 + $0x38] sm:$0xff]
    %v1175 = vld [vmem:[%s3] sm:$0x1]
    %v1177 = vperm.slane %v1175, 0
    %v1180 = vsel %vm154, %v1166, 0
    %1182 = vmatpush.msra.mxu0 0.0
    %1183 = vmatpush.msra.mxu0 0.0
    %1184 = vmatpush.msra.mxu0 0.0
    %1185 = vmatpush.msra.mxu0 0.0
    %1186 = vmatpush.msra.mxu0 0.0
    %1187 = vmatpush.msra.mxu0 0.0
    %1188 = vmatpush.msra.mxu0 0.0
    %1189 = vmatpush.msra.mxu0 0.0
    %1190 = vmatpush.msra.mxu0 %v1174
    %1191 = vmatpush.msra.mxu0 %v1173
    %1192 = vmatpush.msra.mxu0 %v1172
    %1193 = vmatpush.msra.mxu0 %v1171
    %1194 = vmatpush.msra.mxu0 %v1170
    %1195 = vmatpush.msra.mxu0 %v1169
    %1196 = vmatpush.msra.mxu0 %v1168
    %1197 = vmatpush.msra.mxu0 %v1167
    %1198 = vmatmul.f32.gmra.mxu0 %v1180
    %v1199 = vpop.f32.mrf.mxu0
    %v1200 = vadd.f32 %v1177, %v1199
    %1201 = vdwg.mxu0
    %v1202 = vxor.u32 %v1200, 2147483648
    %v1203 = vmul.f32 %v1202, 1.442695
    %v1204 = vpow.pop %v1203
    %v1205 = vadd.f32 %v1204, 1.0
    %v1206 = vrcp.pop %v1205
    %v1207 = vmul.f32 %v1205, %v1206
    %v1208 = vsub.f32 1.0, %v1207
    %v1209 = vmul.f32 %v1206, %v1208
    %v1210 = vadd.f32 %v1206, %v1209
    %vm1211 = vweird.f32 %v1205
    %vm1212 = vweird.f32 %v1206
    %vm1213 = vmor %vm1211, %vm1212
    %v1214 = vsel %vm1213, %v1206, %v1210
    %v1215 = vand.u32 2147483647, %v1205
    %vm1216 = vcmp.eq.f32.partialorder %v1215, 8.507059e+37
    %v1217 = vand.u32 %v1205, 2147483648
    %v1218 = vor.u32 1.1754944e-38, %v1217
    %v1219 = vsel %vm1216, %v1218, %v1214
    %v1220 = vmul.f32 1.0, %v1219
    %v1221 = vtanh.pop %v1200
    %v1222 = vmul.f32 %v1220, %v1061
    %1224 = vrot.lane.b32.xlu0 %v1221, 64
    %v1225 = vpop.permute.xlu0 %1224
    %v1227 = vmul.f32 %v1220, %v1225
    %1229 = vrot.lane.b32.xlu0 %v1227, 32
    %v1230 = vpop.permute.xlu0 %1229
    %v1232 = vadd.f32 %v1222, %v1230
    %v1233 = vtanh.pop %v1232
    %1235 = vrot.lane.b32.xlu0 %v1233, 64
    %v1236 = vpop.permute.xlu0 %1235
    %v1238 = vmul.f32 %v1220, %v1236
    %1240 = vrot.lane.b32.xlu0 %v1238, 32
    %v1241 = vpop.permute.xlu0 %1240
    %1243 = vrot.lane.b32.xlu0 %v1147, 64
    %v1244 = vpop.permute.xlu0 %1243
    %v1246 = vsel %vm140, %v1241, %v1244
    %v1247 = vld [vmem:[#allocation6] sm:$0xff]
    %v1248 = vld [vmem:[#allocation6 + $0x8] sm:$0xff]
    %v1249 = vld [vmem:[#allocation6 + $0x10] sm:$0xff]
    %v1250 = vld [vmem:[#allocation6 + $0x18] sm:$0xff]
    %v1251 = vld [vmem:[#allocation6 + $0x20] sm:$0xff]
    %v1252 = vld [vmem:[#allocation6 + $0x28] sm:$0xff]
    %v1253 = vld [vmem:[#allocation6 + $0x30] sm:$0xff]
    %v1254 = vld [vmem:[#allocation6 + $0x38] sm:$0xff]
    %v1255 = vld [vmem:[%s5] sm:$0x1]
    %v1257 = vperm.slane %v1255, 0
    %v1260 = vsel %vm154, %v1246, 0
    %1262 = vmatpush.msra.mxu0 0.0
    %1263 = vmatpush.msra.mxu0 0.0
    %1264 = vmatpush.msra.mxu0 0.0
    %1265 = vmatpush.msra.mxu0 0.0
    %1266 = vmatpush.msra.mxu0 0.0
    %1267 = vmatpush.msra.mxu0 0.0
    %1268 = vmatpush.msra.mxu0 0.0
    %1269 = vmatpush.msra.mxu0 0.0
    %1270 = vmatpush.msra.mxu0 %v1254
    %1271 = vmatpush.msra.mxu0 %v1253
    %1272 = vmatpush.msra.mxu0 %v1252
    %1273 = vmatpush.msra.mxu0 %v1251
    %1274 = vmatpush.msra.mxu0 %v1250
    %1275 = vmatpush.msra.mxu0 %v1249
    %1276 = vmatpush.msra.mxu0 %v1248
    %1277 = vmatpush.msra.mxu0 %v1247
    %1278 = vmatmul.f32.gmra.mxu0 %v1260
    %v1279 = vpop.f32.mrf.mxu0
    %v1280 = vadd.f32 %v1257, %v1279
    %1281 = vdwg.mxu0
    %v1282 = vxor.u32 %v1280, 2147483648
    %v1283 = vmul.f32 %v1282, 1.442695
    %v1284 = vpow.pop %v1283
    %v1285 = vadd.f32 %v1284, 1.0
    %v1286 = vrcp.pop %v1285
    %v1287 = vmul.f32 %v1285, %v1286
    %v1288 = vsub.f32 1.0, %v1287
    %v1289 = vmul.f32 %v1286, %v1288
    %v1290 = vadd.f32 %v1286, %v1289
    %vm1291 = vweird.f32 %v1285
    %vm1292 = vweird.f32 %v1286
    %vm1293 = vmor %vm1291, %vm1292
    %v1294 = vsel %vm1293, %v1286, %v1290
    %v1295 = vand.u32 2147483647, %v1285
    %vm1296 = vcmp.eq.f32.partialorder %v1295, 8.507059e+37
    %v1297 = vand.u32 %v1285, 2147483648
    %v1298 = vor.u32 1.1754944e-38, %v1297
    %v1299 = vsel %vm1296, %v1298, %v1294
    %v1300 = vmul.f32 1.0, %v1299
    %v1301 = vtanh.pop %v1280
    %v1302 = vmul.f32 %v1300, %v1141
    %1304 = vrot.lane.b32.xlu0 %v1301, 64
    %v1305 = vpop.permute.xlu0 %1304
    %v1307 = vmul.f32 %v1300, %v1305
    %1309 = vrot.lane.b32.xlu0 %v1307, 32
    %v1310 = vpop.permute.xlu0 %1309
    %v1312 = vadd.f32 %v1302, %v1310
    %v1313 = vtanh.pop %v1312
    %1315 = vrot.lane.b32.xlu0 %v1313, 64
    %v1316 = vpop.permute.xlu0 %1315
    %v1318 = vmul.f32 %v1300, %v1316
    %1320 = vrot.lane.b32.xlu0 %v1318, 32
    %v1321 = vpop.permute.xlu0 %1320
    %1323 = vst.msk [vmem:[#allocation3 + $0x6] sm:$0x1] %vm133, %v1321
    %1324 = vst.msk [vmem:[#allocation3 + $0xd] sm:$0x2] %vm297, %v1321
    %s1325 = sld [smem:[#allocation5 + $0x7]]
    %s1326 = scalar_lea.vmem %s1, %s1325
    %v1327 = vld [vmem:[%s1326] sm:$0x1]
    %1328 = vst.msk [vmem:[#allocation2] sm:$0x1] %vm133, %v1327
    %s1329 = sld [smem:[#allocation5 + $0x87]]
    %s1330 = scalar_lea.vmem %s1, %s1329
    %v1331 = vld [vmem:[%s1330] sm:$0x1]
    %1332 = vst.msk [vmem:[#allocation2 + $0x1] sm:$0x1] %vm133, %v1331
    %v1333 = vld [vmem:[#allocation2] sm:$0x3]
    %1334 = vrot.lane.b32.xlu0 %v1238, 64
    %v1335 = vpop.permute.xlu0 %1334
    %v1337 = vsel %vm140, %v1333, %v1335
    %v1338 = vld [vmem:[%s2] sm:$0xff]
    %v1339 = vld [vmem:[%s2 + $0x8] sm:$0xff]
    %v1340 = vld [vmem:[%s2 + $0x10] sm:$0xff]
    %v1341 = vld [vmem:[%s2 + $0x18] sm:$0xff]
    %v1342 = vld [vmem:[%s2 + $0x20] sm:$0xff]
    %v1343 = vld [vmem:[%s2 + $0x28] sm:$0xff]
    %v1344 = vld [vmem:[%s2 + $0x30] sm:$0xff]
    %v1345 = vld [vmem:[%s2 + $0x38] sm:$0xff]
    %v1346 = vld [vmem:[%s3] sm:$0x1]
    %v1348 = vperm.slane %v1346, 0
    %v1351 = vsel %vm154, %v1337, 0
    %1353 = vmatpush.msra.mxu0 0.0
    %1354 = vmatpush.msra.mxu0 0.0
    %1355 = vmatpush.msra.mxu0 0.0
    %1356 = vmatpush.msra.mxu0 0.0
    %1357 = vmatpush.msra.mxu0 0.0
    %1358 = vmatpush.msra.mxu0 0.0
    %1359 = vmatpush.msra.mxu0 0.0
    %1360 = vmatpush.msra.mxu0 0.0
    %1361 = vmatpush.msra.mxu0 %v1345
    %1362 = vmatpush.msra.mxu0 %v1344
    %1363 = vmatpush.msra.mxu0 %v1343
    %1364 = vmatpush.msra.mxu0 %v1342
    %1365 = vmatpush.msra.mxu0 %v1341
    %1366 = vmatpush.msra.mxu0 %v1340
    %1367 = vmatpush.msra.mxu0 %v1339
    %1368 = vmatpush.msra.mxu0 %v1338
    %1369 = vmatmul.f32.gmra.mxu0 %v1351
    %v1370 = vpop.f32.mrf.mxu0
    %v1371 = vadd.f32 %v1348, %v1370
    %1372 = vdwg.mxu0
    %v1373 = vxor.u32 %v1371, 2147483648
    %v1374 = vmul.f32 %v1373, 1.442695
    %v1375 = vpow.pop %v1374
    %v1376 = vadd.f32 %v1375, 1.0
    %v1377 = vrcp.pop %v1376
    %v1378 = vmul.f32 %v1376, %v1377
    %v1379 = vsub.f32 1.0, %v1378
    %v1380 = vmul.f32 %v1377, %v1379
    %v1381 = vadd.f32 %v1377, %v1380
    %vm1382 = vweird.f32 %v1376
    %vm1383 = vweird.f32 %v1377
    %vm1384 = vmor %vm1382, %vm1383
    %v1385 = vsel %vm1384, %v1377, %v1381
    %v1386 = vand.u32 2147483647, %v1376
    %vm1387 = vcmp.eq.f32.partialorder %v1386, 8.507059e+37
    %v1388 = vand.u32 %v1376, 2147483648
    %v1389 = vor.u32 1.1754944e-38, %v1388
    %v1390 = vsel %vm1387, %v1389, %v1385
    %v1391 = vmul.f32 1.0, %v1390
    %v1392 = vtanh.pop %v1371
    %v1393 = vmul.f32 %v1391, %v1232
    %1395 = vrot.lane.b32.xlu0 %v1392, 64
    %v1396 = vpop.permute.xlu0 %1395
    %v1398 = vmul.f32 %v1391, %v1396
    %1400 = vrot.lane.b32.xlu0 %v1398, 32
    %v1401 = vpop.permute.xlu0 %1400
    %v1403 = vadd.f32 %v1393, %v1401
    %v1404 = vtanh.pop %v1403
    %1406 = vrot.lane.b32.xlu0 %v1404, 64
    %v1407 = vpop.permute.xlu0 %1406
    %v1409 = vmul.f32 %v1391, %v1407
    %1411 = vrot.lane.b32.xlu0 %v1409, 32
    %v1412 = vpop.permute.xlu0 %1411
    %1414 = vrot.lane.b32.xlu0 %v1318, 64
    %v1415 = vpop.permute.xlu0 %1414
    %v1417 = vsel %vm140, %v1412, %v1415
    %v1418 = vld [vmem:[#allocation6] sm:$0xff]
    %v1419 = vld [vmem:[#allocation6 + $0x8] sm:$0xff]
    %v1420 = vld [vmem:[#allocation6 + $0x10] sm:$0xff]
    %v1421 = vld [vmem:[#allocation6 + $0x18] sm:$0xff]
    %v1422 = vld [vmem:[#allocation6 + $0x20] sm:$0xff]
    %v1423 = vld [vmem:[#allocation6 + $0x28] sm:$0xff]
    %v1424 = vld [vmem:[#allocation6 + $0x30] sm:$0xff]
    %v1425 = vld [vmem:[#allocation6 + $0x38] sm:$0xff]
    %v1426 = vld [vmem:[%s5] sm:$0x1]
    %v1428 = vperm.slane %v1426, 0
    %v1431 = vsel %vm154, %v1417, 0
    %1433 = vmatpush.msra.mxu0 0.0
    %1434 = vmatpush.msra.mxu0 0.0
    %1435 = vmatpush.msra.mxu0 0.0
    %1436 = vmatpush.msra.mxu0 0.0
    %1437 = vmatpush.msra.mxu0 0.0
    %1438 = vmatpush.msra.mxu0 0.0
    %1439 = vmatpush.msra.mxu0 0.0
    %1440 = vmatpush.msra.mxu0 0.0
    %1441 = vmatpush.msra.mxu0 %v1425
    %1442 = vmatpush.msra.mxu0 %v1424
    %1443 = vmatpush.msra.mxu0 %v1423
    %1444 = vmatpush.msra.mxu0 %v1422
    %1445 = vmatpush.msra.mxu0 %v1421
    %1446 = vmatpush.msra.mxu0 %v1420
    %1447 = vmatpush.msra.mxu0 %v1419
    %1448 = vmatpush.msra.mxu0 %v1418
    %1449 = vmatmul.f32.gmra.mxu0 %v1431
    %v1450 = vpop.f32.mrf.mxu0
    %v1451 = vadd.f32 %v1428, %v1450
    %1452 = vdwg.mxu0
    %v1453 = vxor.u32 %v1451, 2147483648
    %v1454 = vmul.f32 %v1453, 1.442695
    %v1455 = vpow.pop %v1454
    %v1456 = vadd.f32 %v1455, 1.0
    %v1457 = vrcp.pop %v1456
    %v1458 = vmul.f32 %v1456, %v1457
    %v1459 = vsub.f32 1.0, %v1458
    %v1460 = vmul.f32 %v1457, %v1459
    %v1461 = vadd.f32 %v1457, %v1460
    %vm1462 = vweird.f32 %v1456
    %vm1463 = vweird.f32 %v1457
    %vm1464 = vmor %vm1462, %vm1463
    %v1465 = vsel %vm1464, %v1457, %v1461
    %v1466 = vand.u32 2147483647, %v1456
    %vm1467 = vcmp.eq.f32.partialorder %v1466, 8.507059e+37
    %v1468 = vand.u32 %v1456, 2147483648
    %v1469 = vor.u32 1.1754944e-38, %v1468
    %v1470 = vsel %vm1467, %v1469, %v1465
    %v1471 = vmul.f32 1.0, %v1470
    %v1472 = vtanh.pop %v1451
    %v1473 = vmul.f32 %v1471, %v1312
    %1475 = vrot.lane.b32.xlu0 %v1472, 64
    %v1476 = vpop.permute.xlu0 %1475
    %v1478 = vmul.f32 %v1471, %v1476
    %1480 = vrot.lane.b32.xlu0 %v1478, 32
    %v1481 = vpop.permute.xlu0 %1480
    %v1483 = vadd.f32 %v1473, %v1481
    %v1484 = vtanh.pop %v1483
    %1486 = vrot.lane.b32.xlu0 %v1484, 64
    %v1487 = vpop.permute.xlu0 %1486
    %v1489 = vmul.f32 %v1471, %v1487
    %1491 = vrot.lane.b32.xlu0 %v1489, 32
    %v1492 = vpop.permute.xlu0 %1491
    %1494 = vst.msk [vmem:[#allocation3 + $0x7] sm:$0x1] %vm133, %v1492
    %1495 = vst.msk [vmem:[#allocation3 + $0xe] sm:$0x2] %vm297, %v1492
    %v1496 = vld [vmem:[#allocation3] sm:$0xff]
    %v1497 = vld [vmem:[#allocation3 + $0x8] sm:$0xff]
    %v1498 = vld [vmem:[%s6] sm:$0xff]
    %v1499 = vld [vmem:[%s6 + $0x8] sm:$0xff]
    %v1500 = vld [vmem:[%s6 + $0x10] sm:$0xff]
    %v1501 = vld [vmem:[%s6 + $0x18] sm:$0xff]
    %v1502 = vld [vmem:[#allocation9] sm:$0xff]
    %v1503 = vld [vmem:[#allocation9 + $0x8] sm:$0xff]
    %v1504 = vld [vmem:[#allocation9 + $0x10] sm:$0xff]
    %v1505 = vld [vmem:[#allocation9 + $0x18] sm:$0xff]
    %v1506 = vld [vmem:[%s8] sm:$0x1]
    %v1508 = vperm.slane %v1506, 0
    %v1511 = vsel %vm140, %v1496, 0
    %v1514 = vsel %vm140, %v1497, 0
    %1516 = vmatpush.msra.mxu0 0.0
    %1517 = vmatpush.msra.mxu0 0.0
    %1518 = vmatpush.msra.mxu0 0.0
    %1519 = vmatpush.msra.mxu0 0.0
    %1520 = vmatpush.msra.mxu0 0.0
    %1521 = vmatpush.msra.mxu0 0.0
    %1522 = vmatpush.msra.mxu0 0.0
    %1523 = vmatpush.msra.mxu0 0.0
    %1524 = vmatpush.msra.mxu0 0.0
    %1525 = vmatpush.msra.mxu0 0.0
    %1526 = vmatpush.msra.mxu0 0.0
    %1527 = vmatpush.msra.mxu0 0.0
    %1528 = vmatpush.msra.mxu0 %v1505
    %1529 = vmatpush.msra.mxu0 %v1504
    %1530 = vmatpush.msra.mxu0 %v1503
    %1531 = vmatpush.msra.mxu0 %v1502
    %1532 = vmatmul.f32.gmra.mxu0 %v1511
    %v1533 = vpop.f32.mrf.mxu0
    %v1534 = vadd.f32 %v1508, %v1533
    %1535 = vmatmul.f32.gmra.mxu0 %v1514
    %v1536 = vpop.f32.mrf.mxu0
    %v1537 = vadd.f32 %v1508, %v1536
    %1538 = vdwg.mxu0
    %v1539 = vld [vmem:[#allocation11] sm:$0xff]
    %v1540 = vld [vmem:[#allocation11 + $0x8] sm:$0xff]
    %v1541 = vld [vmem:[#allocation11 + $0x10] sm:$0xff]
    %v1542 = vld [vmem:[#allocation11 + $0x18] sm:$0xff]
    %v1543 = vld [vmem:[%s10] sm:$0x1]
    %v1545 = vperm.slane %v1543, 0
    %v1548 = vsel %vm140, %v1498, 0
    %v1551 = vsel %vm140, %v1499, 0
    %v1554 = vsel %vm140, %v1500, 0
    %v1557 = vsel %vm140, %v1501, 0
    %1559 = vmatpush.msra.mxu0 0.0
    %1560 = vmatpush.msra.mxu0 0.0
    %1561 = vmatpush.msra.mxu0 0.0
    %1562 = vmatpush.msra.mxu0 0.0
    %1563 = vmatpush.msra.mxu0 0.0
    %1564 = vmatpush.msra.mxu0 0.0
    %1565 = vmatpush.msra.mxu0 0.0
    %1566 = vmatpush.msra.mxu0 0.0
    %1567 = vmatpush.msra.mxu0 0.0
    %1568 = vmatpush.msra.mxu0 0.0
    %1569 = vmatpush.msra.mxu0 0.0
    %1570 = vmatpush.msra.mxu0 0.0
    %1571 = vmatpush.msra.mxu0 %v1542
    %1572 = vmatpush.msra.mxu0 %v1541
    %1573 = vmatpush.msra.mxu0 %v1540
    %1574 = vmatpush.msra.mxu0 %v1539
    %1575 = vmatmul.f32.gmra.mxu0 %v1548
    %v1576 = vpop.f32.mrf.mxu0
    %v1577 = vadd.f32 %v1545, %v1576
    %1578 = vmatmul.f32.gmra.mxu0 %v1551
    %v1579 = vpop.f32.mrf.mxu0
    %v1580 = vadd.f32 %v1545, %v1579
    %1581 = vmatmul.f32.gmra.mxu0 %v1554
    %v1582 = vpop.f32.mrf.mxu0
    %v1583 = vadd.f32 %v1545, %v1582
    %1584 = vmatmul.f32.gmra.mxu0 %v1557
    %v1585 = vpop.f32.mrf.mxu0
    %v1586 = vadd.f32 %v1545, %v1585
    %1587 = vdwg.mxu0
    %v1588 = vld [vmem:[#allocation12] sm:$0xff]
    %v1589 = vld [vmem:[#allocation12 + $0x8] sm:$0xff]
    %v1590 = vld [vmem:[#allocation12 + $0x10] sm:$0xff]
    %v1591 = vld [vmem:[#allocation12 + $0x18] sm:$0xff]
    %v1592 = vld [vmem:[%s12] sm:$0x1]
    %v1594 = vperm.slane %v1592, 0
    %1596 = vmatpush.msra.mxu0 0.0
    %1597 = vmatpush.msra.mxu0 0.0
    %1598 = vmatpush.msra.mxu0 0.0
    %1599 = vmatpush.msra.mxu0 0.0
    %1600 = vmatpush.msra.mxu0 0.0
    %1601 = vmatpush.msra.mxu0 0.0
    %1602 = vmatpush.msra.mxu0 0.0
    %1603 = vmatpush.msra.mxu0 0.0
    %1604 = vmatpush.msra.mxu0 0.0
    %1605 = vmatpush.msra.mxu0 0.0
    %1606 = vmatpush.msra.mxu0 0.0
    %1607 = vmatpush.msra.mxu0 0.0
    %1608 = vmatpush.msra.mxu0 %v1591
    %1609 = vmatpush.msra.mxu0 %v1590
    %1610 = vmatpush.msra.mxu0 %v1589
    %1611 = vmatpush.msra.mxu0 %v1588
    %1612 = vmatmul.f32.gmra.mxu0 %v1548
    %v1613 = vpop.f32.mrf.mxu0
    %v1614 = vadd.f32 %v1594, %v1613
    %1615 = vmatmul.f32.gmra.mxu0 %v1551
    %v1616 = vpop.f32.mrf.mxu0
    %v1617 = vadd.f32 %v1594, %v1616
    %1618 = vmatmul.f32.gmra.mxu0 %v1554
    %v1619 = vpop.f32.mrf.mxu0
    %v1620 = vadd.f32 %v1594, %v1619
    %1621 = vmatmul.f32.gmra.mxu0 %v1557
    %v1622 = vpop.f32.mrf.mxu0
    %v1623 = vadd.f32 %v1594, %v1622
    %1624 = vdwg.mxu0
    %vm1625 = vcmask 64512
    %v1627 = vsel %vm1625, %v1534, 0
    %v1630 = vsel %vm1625, %v1577, 0
    %v1633 = vsel %vm1625, %v1580, 0
    %1635 = vmatpush.xpose.msra.mxu0 0.0
    %1636 = vmatpush.xpose.msra.mxu0 0.0
    %1637 = vmatpush.xpose.msra.mxu0 0.0
    %1638 = vmatpush.xpose.msra.mxu0 0.0
    %1639 = vmatpush.xpose.msra.mxu0 0.0
    %1640 = vmatpush.xpose.msra.mxu0 0.0
    %1641 = vmatpush.xpose.msra.mxu0 0.0
    %1642 = vmatpush.xpose.msra.mxu0 0.0
    %1643 = vmatpush.xpose.msra.mxu0 0.0
    %1644 = vmatpush.xpose.msra.mxu0 0.0
    %1645 = vmatpush.xpose.msra.mxu0 0.0
    %1646 = vmatpush.xpose.msra.mxu0 0.0
    %1647 = vmatpush.xpose.msra.mxu0 0.0
    %1648 = vmatpush.xpose.msra.mxu0 0.0
    %1649 = vmatpush.xpose.msra.mxu0 %v1633
    %1650 = vmatpush.xpose.msra.mxu0 %v1630
    %1651 = vmatmul.f32.gmra.mxu0 %v1627
    %v1652 = vpop.f32.mrf.mxu0
    %v1653 = vadd.f32 0.0, %v1652
    %1654 = vdwg.mxu0
    %v1656 = vsel %vm1625, %v1537, 0
    %v1659 = vsel %vm1625, %v1583, 0
    %v1662 = vsel %vm1625, %v1586, 0
    %1664 = vmatpush.xpose.msra.mxu0 0.0
    %1665 = vmatpush.xpose.msra.mxu0 0.0
    %1666 = vmatpush.xpose.msra.mxu0 0.0
    %1667 = vmatpush.xpose.msra.mxu0 0.0
    %1668 = vmatpush.xpose.msra.mxu0 0.0
    %1669 = vmatpush.xpose.msra.mxu0 0.0
    %1670 = vmatpush.xpose.msra.mxu0 0.0
    %1671 = vmatpush.xpose.msra.mxu0 0.0
    %1672 = vmatpush.xpose.msra.mxu0 0.0
    %1673 = vmatpush.xpose.msra.mxu0 0.0
    %1674 = vmatpush.xpose.msra.mxu0 0.0
    %1675 = vmatpush.xpose.msra.mxu0 0.0
    %1676 = vmatpush.xpose.msra.mxu0 0.0
    %1677 = vmatpush.xpose.msra.mxu0 0.0
    %1678 = vmatpush.xpose.msra.mxu0 %v1662
    %1679 = vmatpush.xpose.msra.mxu0 %v1659
    %1680 = vmatmul.f32.gmra.mxu0 %v1656
    %v1681 = vpop.f32.mrf.mxu0
    %v1682 = vadd.f32 0.0, %v1681
    %1683 = vdwg.mxu0
    %1684 = vrot.lane.b32.xlu0 %v1534, 120
    %v1685 = vpop.permute.xlu0 %1684
    %1686 = vrot.lane.b32.xlu0 %v1577, 120
    %v1687 = vpop.permute.xlu0 %1686
    %1688 = vrot.lane.b32.xlu0 %v1580, 120
    %v1689 = vpop.permute.xlu0 %1688
    %v1690 = vsel %vm1625, %v1685, 0
    %v1692 = vsel %vm1625, %v1687, 0
    %v1694 = vsel %vm1625, %v1689, 0
    %1696 = vmatpush.xpose.msra.mxu0 0.0
    %1697 = vmatpush.xpose.msra.mxu0 0.0
    %1698 = vmatpush.xpose.msra.mxu0 0.0
    %1699 = vmatpush.xpose.msra.mxu0 0.0
    %1700 = vmatpush.xpose.msra.mxu0 0.0
    %1701 = vmatpush.xpose.msra.mxu0 0.0
    %1702 = vmatpush.xpose.msra.mxu0 0.0
    %1703 = vmatpush.xpose.msra.mxu0 0.0
    %1704 = vmatpush.xpose.msra.mxu0 0.0
    %1705 = vmatpush.xpose.msra.mxu0 0.0
    %1706 = vmatpush.xpose.msra.mxu0 0.0
    %1707 = vmatpush.xpose.msra.mxu0 0.0
    %1708 = vmatpush.xpose.msra.mxu0 0.0
    %1709 = vmatpush.xpose.msra.mxu0 0.0
    %1710 = vmatpush.xpose.msra.mxu0 %v1694
    %1711 = vmatpush.xpose.msra.mxu0 %v1692
    %1712 = vmatmul.f32.gmra.mxu0 %v1690
    %v1713 = vpop.f32.mrf.mxu0
    %v1714 = vadd.f32 0.0, %v1713
    %1715 = vdwg.mxu0
    %1716 = vrot.lane.b32.xlu0 %v1537, 120
    %v1717 = vpop.permute.xlu0 %1716
    %1718 = vrot.lane.b32.xlu0 %v1583, 120
    %v1719 = vpop.permute.xlu0 %1718
    %1720 = vrot.lane.b32.xlu0 %v1586, 120
    %v1721 = vpop.permute.xlu0 %1720
    %v1722 = vsel %vm1625, %v1717, 0
    %v1724 = vsel %vm1625, %v1719, 0
    %v1726 = vsel %vm1625, %v1721, 0
    %1728 = vmatpush.xpose.msra.mxu0 0.0
    %1729 = vmatpush.xpose.msra.mxu0 0.0
    %1730 = vmatpush.xpose.msra.mxu0 0.0
    %1731 = vmatpush.xpose.msra.mxu0 0.0
    %1732 = vmatpush.xpose.msra.mxu0 0.0
    %1733 = vmatpush.xpose.msra.mxu0 0.0
    %1734 = vmatpush.xpose.msra.mxu0 0.0
    %1735 = vmatpush.xpose.msra.mxu0 0.0
    %1736 = vmatpush.xpose.msra.mxu0 0.0
    %1737 = vmatpush.xpose.msra.mxu0 0.0
    %1738 = vmatpush.xpose.msra.mxu0 0.0
    %1739 = vmatpush.xpose.msra.mxu0 0.0
    %1740 = vmatpush.xpose.msra.mxu0 0.0
    %1741 = vmatpush.xpose.msra.mxu0 0.0
    %1742 = vmatpush.xpose.msra.mxu0 %v1726
    %1743 = vmatpush.xpose.msra.mxu0 %v1724
    %1744 = vmatmul.f32.gmra.mxu0 %v1722
    %v1745 = vpop.f32.mrf.mxu0
    %v1746 = vadd.f32 0.0, %v1745
    %1747 = vdwg.mxu0
    %1748 = vrot.lane.b32.xlu0 %v1534, 112
    %v1749 = vpop.permute.xlu0 %1748
    %1750 = vrot.lane.b32.xlu0 %v1577, 112
    %v1751 = vpop.permute.xlu0 %1750
    %1752 = vrot.lane.b32.xlu0 %v1580, 112
    %v1753 = vpop.permute.xlu0 %1752
    %v1754 = vsel %vm1625, %v1749, 0
    %v1756 = vsel %vm1625, %v1751, 0
    %v1758 = vsel %vm1625, %v1753, 0
    %1760 = vmatpush.xpose.msra.mxu0 0.0
    %1761 = vmatpush.xpose.msra.mxu0 0.0
    %1762 = vmatpush.xpose.msra.mxu0 0.0
    %1763 = vmatpush.xpose.msra.mxu0 0.0
    %1764 = vmatpush.xpose.msra.mxu0 0.0
    %1765 = vmatpush.xpose.msra.mxu0 0.0
    %1766 = vmatpush.xpose.msra.mxu0 0.0
    %1767 = vmatpush.xpose.msra.mxu0 0.0
    %1768 = vmatpush.xpose.msra.mxu0 0.0
    %1769 = vmatpush.xpose.msra.mxu0 0.0
    %1770 = vmatpush.xpose.msra.mxu0 0.0
    %1771 = vmatpush.xpose.msra.mxu0 0.0
    %1772 = vmatpush.xpose.msra.mxu0 0.0
    %1773 = vmatpush.xpose.msra.mxu0 0.0
    %1774 = vmatpush.xpose.msra.mxu0 %v1758
    %1775 = vmatpush.xpose.msra.mxu0 %v1756
    %1776 = vmatmul.f32.gmra.mxu0 %v1754
    %v1777 = vpop.f32.mrf.mxu0
    %v1778 = vadd.f32 0.0, %v1777
    %1779 = vdwg.mxu0
    %1780 = vrot.lane.b32.xlu0 %v1537, 112
    %v1781 = vpop.permute.xlu0 %1780
    %1782 = vrot.lane.b32.xlu0 %v1583, 112
    %v1783 = vpop.permute.xlu0 %1782
    %1784 = vrot.lane.b32.xlu0 %v1586, 112
    %v1785 = vpop.permute.xlu0 %1784
    %v1786 = vsel %vm1625, %v1781, 0
    %v1788 = vsel %vm1625, %v1783, 0
    %v1790 = vsel %vm1625, %v1785, 0
    %1792 = vmatpush.xpose.msra.mxu0 0.0
    %1793 = vmatpush.xpose.msra.mxu0 0.0
    %1794 = vmatpush.xpose.msra.mxu0 0.0
    %1795 = vmatpush.xpose.msra.mxu0 0.0
    %1796 = vmatpush.xpose.msra.mxu0 0.0
    %1797 = vmatpush.xpose.msra.mxu0 0.0
    %1798 = vmatpush.xpose.msra.mxu0 0.0
    %1799 = vmatpush.xpose.msra.mxu0 0.0
    %1800 = vmatpush.xpose.msra.mxu0 0.0
    %1801 = vmatpush.xpose.msra.mxu0 0.0
    %1802 = vmatpush.xpose.msra.mxu0 0.0
    %1803 = vmatpush.xpose.msra.mxu0 0.0
    %1804 = vmatpush.xpose.msra.mxu0 0.0
    %1805 = vmatpush.xpose.msra.mxu0 0.0
    %1806 = vmatpush.xpose.msra.mxu0 %v1790
    %1807 = vmatpush.xpose.msra.mxu0 %v1788
    %1808 = vmatmul.f32.gmra.mxu0 %v1786
    %v1809 = vpop.f32.mrf.mxu0
    %v1810 = vadd.f32 0.0, %v1809
    %1811 = vdwg.mxu0
    %1812 = vrot.lane.b32.xlu0 %v1534, 104
    %v1813 = vpop.permute.xlu0 %1812
    %1814 = vrot.lane.b32.xlu0 %v1577, 104
    %v1815 = vpop.permute.xlu0 %1814
    %1816 = vrot.lane.b32.xlu0 %v1580, 104
    %v1817 = vpop.permute.xlu0 %1816
    %v1818 = vsel %vm1625, %v1813, 0
    %v1820 = vsel %vm1625, %v1815, 0
    %v1822 = vsel %vm1625, %v1817, 0
    %1824 = vmatpush.xpose.msra.mxu0 0.0
    %1825 = vmatpush.xpose.msra.mxu0 0.0
    %1826 = vmatpush.xpose.msra.mxu0 0.0
    %1827 = vmatpush.xpose.msra.mxu0 0.0
    %1828 = vmatpush.xpose.msra.mxu0 0.0
    %1829 = vmatpush.xpose.msra.mxu0 0.0
    %1830 = vmatpush.xpose.msra.mxu0 0.0
    %1831 = vmatpush.xpose.msra.mxu0 0.0
    %1832 = vmatpush.xpose.msra.mxu0 0.0
    %1833 = vmatpush.xpose.msra.mxu0 0.0
    %1834 = vmatpush.xpose.msra.mxu0 0.0
    %1835 = vmatpush.xpose.msra.mxu0 0.0
    %1836 = vmatpush.xpose.msra.mxu0 0.0
    %1837 = vmatpush.xpose.msra.mxu0 0.0
    %1838 = vmatpush.xpose.msra.mxu0 %v1822
    %1839 = vmatpush.xpose.msra.mxu0 %v1820
    %1840 = vmatmul.f32.gmra.mxu0 %v1818
    %v1841 = vpop.f32.mrf.mxu0
    %v1842 = vadd.f32 0.0, %v1841
    %1843 = vdwg.mxu0
    %1844 = vrot.lane.b32.xlu0 %v1537, 104
    %v1845 = vpop.permute.xlu0 %1844
    %1846 = vrot.lane.b32.xlu0 %v1583, 104
    %v1847 = vpop.permute.xlu0 %1846
    %1848 = vrot.lane.b32.xlu0 %v1586, 104
    %v1849 = vpop.permute.xlu0 %1848
    %v1850 = vsel %vm1625, %v1845, 0
    %v1852 = vsel %vm1625, %v1847, 0
    %v1854 = vsel %vm1625, %v1849, 0
    %1856 = vmatpush.xpose.msra.mxu0 0.0
    %1857 = vmatpush.xpose.msra.mxu0 0.0
    %1858 = vmatpush.xpose.msra.mxu0 0.0
    %1859 = vmatpush.xpose.msra.mxu0 0.0
    %1860 = vmatpush.xpose.msra.mxu0 0.0
    %1861 = vmatpush.xpose.msra.mxu0 0.0
    %1862 = vmatpush.xpose.msra.mxu0 0.0
    %1863 = vmatpush.xpose.msra.mxu0 0.0
    %1864 = vmatpush.xpose.msra.mxu0 0.0
    %1865 = vmatpush.xpose.msra.mxu0 0.0
    %1866 = vmatpush.xpose.msra.mxu0 0.0
    %1867 = vmatpush.xpose.msra.mxu0 0.0
    %1868 = vmatpush.xpose.msra.mxu0 0.0
    %1869 = vmatpush.xpose.msra.mxu0 0.0
    %1870 = vmatpush.xpose.msra.mxu0 %v1854
    %1871 = vmatpush.xpose.msra.mxu0 %v1852
    %1872 = vmatmul.f32.gmra.mxu0 %v1850
    %v1873 = vpop.f32.mrf.mxu0
    %v1874 = vadd.f32 0.0, %v1873
    %1875 = vdwg.mxu0
    %v1876 = vmul.f32 %v1653, 0.35355338
    %v1877 = vmul.f32 %v1682, 0.35355338
    %v1878 = vmul.f32 %v1714, 0.35355338
    %v1879 = vmul.f32 %v1746, 0.35355338
    %v1880 = vmul.f32 %v1778, 0.35355338
    %v1881 = vmul.f32 %v1810, 0.35355338
    %v1882 = vmul.f32 %v1842, 0.35355338
    %v1883 = vmul.f32 %v1874, 0.35355338
    %vm1884 = vcmask 130048
    %v1885 = vsel %vm1884, %v1876, -inf
    %1886 = vmax.xlane.f32.xlu0 %v1885
    %v1887 = vpop.xlane.xlu0 %1886
    %v1888 = vsel %vm1884, %v1877, -inf
    %1889 = vmax.xlane.f32.xlu0 %v1888
    %v1890 = vpop.xlane.xlu0 %1889
    %v1891 = vsel %vm1884, %v1878, -inf
    %1892 = vmax.xlane.f32.xlu0 %v1891
    %v1893 = vpop.xlane.xlu0 %1892
    %v1894 = vsel %vm1884, %v1879, -inf
    %1895 = vmax.xlane.f32.xlu0 %v1894
    %v1896 = vpop.xlane.xlu0 %1895
    %v1897 = vsel %vm1884, %v1880, -inf
    %1898 = vmax.xlane.f32.xlu0 %v1897
    %v1899 = vpop.xlane.xlu0 %1898
    %v1900 = vsel %vm1884, %v1881, -inf
    %1901 = vmax.xlane.f32.xlu0 %v1900
    %v1902 = vpop.xlane.xlu0 %1901
    %v1903 = vsel %vm1884, %v1882, -inf
    %1904 = vmax.xlane.f32.xlu0 %v1903
    %v1905 = vpop.xlane.xlu0 %1904
    %v1906 = vsel %vm1884, %v1883, -inf
    %1907 = vmax.xlane.f32.xlu0 %v1906
    %v1908 = vpop.xlane.xlu0 %1907
    %v1909 = vsub.f32 %v1876, %v1887
    %v1910 = vsub.f32 %v1877, %v1890
    %v1911 = vsub.f32 %v1878, %v1893
    %v1912 = vsub.f32 %v1879, %v1896
    %v1913 = vsub.f32 %v1880, %v1899
    %v1914 = vsub.f32 %v1881, %v1902
    %v1915 = vsub.f32 %v1882, %v1905
    %v1916 = vsub.f32 %v1883, %v1908
    %v1917 = vmul.f32 %v1909, 1.442695
    %v1918 = vpow.pop %v1917
    %v1919 = vmul.f32 %v1910, 1.442695
    %v1920 = vpow.pop %v1919
    %v1921 = vmul.f32 %v1911, 1.442695
    %v1922 = vpow.pop %v1921
    %v1923 = vmul.f32 %v1912, 1.442695
    %v1924 = vpow.pop %v1923
    %v1925 = vmul.f32 %v1913, 1.442695
    %v1926 = vpow.pop %v1925
    %v1927 = vmul.f32 %v1914, 1.442695
    %v1928 = vpow.pop %v1927
    %v1929 = vmul.f32 %v1915, 1.442695
    %v1930 = vpow.pop %v1929
    %v1931 = vmul.f32 %v1916, 1.442695
    %v1932 = vpow.pop %v1931
    %v1933 = vsel %vm1884, %v1918, 0.0
    %1934 = vadd.xlane.f32.xlu0 %v1933
    %v1935 = vpop.xlane.xlu0 %1934
    %v1936 = vsel %vm1884, %v1920, 0.0
    %1937 = vadd.xlane.f32.xlu0 %v1936
    %v1938 = vpop.xlane.xlu0 %1937
    %v1939 = vsel %vm1884, %v1922, 0.0
    %1940 = vadd.xlane.f32.xlu0 %v1939
    %v1941 = vpop.xlane.xlu0 %1940
    %v1942 = vsel %vm1884, %v1924, 0.0
    %1943 = vadd.xlane.f32.xlu0 %v1942
    %v1944 = vpop.xlane.xlu0 %1943
    %v1945 = vsel %vm1884, %v1926, 0.0
    %1946 = vadd.xlane.f32.xlu0 %v1945
    %v1947 = vpop.xlane.xlu0 %1946
    %v1948 = vsel %vm1884, %v1928, 0.0
    %1949 = vadd.xlane.f32.xlu0 %v1948
    %v1950 = vpop.xlane.xlu0 %1949
    %v1951 = vsel %vm1884, %v1930, 0.0
    %1952 = vadd.xlane.f32.xlu0 %v1951
    %v1953 = vpop.xlane.xlu0 %1952
    %v1954 = vsel %vm1884, %v1932, 0.0
    %1955 = vadd.xlane.f32.xlu0 %v1954
    %v1956 = vpop.xlane.xlu0 %1955
    %v1957 = vrcp.pop %v1935
    %v1958 = vrcp.pop %v1938
    %v1959 = vrcp.pop %v1941
    %v1960 = vrcp.pop %v1944
    %v1961 = vrcp.pop %v1947
    %v1962 = vrcp.pop %v1950
    %v1963 = vrcp.pop %v1953
    %v1964 = vrcp.pop %v1956
    %v1965 = vmul.f32 %v1918, %v1957
    %v1966 = vmul.f32 %v1920, %v1958
    %v1967 = vmul.f32 %v1922, %v1959
    %v1968 = vmul.f32 %v1924, %v1960
    %v1969 = vmul.f32 %v1926, %v1961
    %v1970 = vmul.f32 %v1928, %v1962
    %v1971 = vmul.f32 %v1930, %v1963
    %v1972 = vmul.f32 %v1932, %v1964
    %1973 = vst.msk [vmem:[#allocation15] sm:$0xff] %vm1884, %v1965
    %1974 = vst.msk [vmem:[#allocation15 + $0x8] sm:$0xff] %vm1884, %v1966
    %1975 = vst.msk [vmem:[#allocation15 + $0x10] sm:$0xff] %vm1884, %v1967
    %1976 = vst.msk [vmem:[#allocation15 + $0x18] sm:$0xff] %vm1884, %v1968
    %1977 = vst.msk [vmem:[#allocation15 + $0x20] sm:$0xff] %vm1884, %v1969
    %1978 = vst.msk [vmem:[#allocation15 + $0x28] sm:$0xff] %vm1884, %v1970
    %1979 = vst.msk [vmem:[#allocation15 + $0x30] sm:$0xff] %vm1884, %v1971
    %1980 = vst.msk [vmem:[#allocation15 + $0x38] sm:$0xff] %vm1884, %v1972
    %v1982 = vsel %vm1884, %v1965, 0
    %1984 = vmatpush.msra.mxu0 0.0
    %1985 = vmatpush.msra.mxu0 0.0
    %1986 = vmatpush.msra.mxu0 0.0
    %1987 = vmatpush.msra.mxu0 0.0
    %1988 = vmatpush.msra.mxu0 0.0
    %1989 = vmatpush.msra.mxu0 0.0
    %1990 = vmatpush.msra.mxu0 0.0
    %1991 = vmatpush.msra.mxu0 0.0
    %1992 = vmatpush.msra.mxu0 0.0
    %1993 = vmatpush.msra.mxu0 0.0
    %1994 = vmatpush.msra.mxu0 0.0
    %1995 = vmatpush.msra.mxu0 0.0
    %1996 = vmatpush.msra.mxu0 0.0
    %1997 = vmatpush.msra.mxu0 0.0
    %1998 = vmatpush.msra.mxu0 %v1617
    %1999 = vmatpush.msra.mxu0 %v1614
    %2000 = vmatmul.f32.gmra.mxu0 %v1982
    %v2001 = vpop.f32.mrf.mxu0
    %v2002 = vadd.f32 0.0, %v2001
    %2003 = vdwg.mxu0
    %2006 = vrot.lane.b32.xlu0 %v1614, 120
    %v2007 = vpop.permute.xlu0 %2006
    %2008 = vrot.lane.b32.xlu0 %v1617, 120
    %v2009 = vpop.permute.xlu0 %2008
    %v2013 = vsel %vm1884, %v1967, 0
    %2015 = vmatpush.msra.mxu0 0.0
    %2016 = vmatpush.msra.mxu0 0.0
    %2017 = vmatpush.msra.mxu0 0.0
    %2018 = vmatpush.msra.mxu0 0.0
    %2019 = vmatpush.msra.mxu0 0.0
    %2020 = vmatpush.msra.mxu0 0.0
    %2021 = vmatpush.msra.mxu0 0.0
    %2022 = vmatpush.msra.mxu0 0.0
    %2023 = vmatpush.msra.mxu0 0.0
    %2024 = vmatpush.msra.mxu0 0.0
    %2025 = vmatpush.msra.mxu0 0.0
    %2026 = vmatpush.msra.mxu0 0.0
    %2027 = vmatpush.msra.mxu0 0.0
    %2028 = vmatpush.msra.mxu0 0.0
    %2029 = vmatpush.msra.mxu0 %v2009
    %2030 = vmatpush.msra.mxu0 %v2007
    %2031 = vmatmul.f32.gmra.mxu0 %v2013
    %v2032 = vpop.f32.mrf.mxu0
    %v2033 = vadd.f32 0.0, %v2032
    %2034 = vdwg.mxu0
    %2035 = vrot.lane.b32.xlu0 %v1614, 112
    %v2036 = vpop.permute.xlu0 %2035
    %2037 = vrot.lane.b32.xlu0 %v1617, 112
    %v2038 = vpop.permute.xlu0 %2037
    %v2042 = vsel %vm1884, %v1969, 0
    %2044 = vmatpush.msra.mxu0 0.0
    %2045 = vmatpush.msra.mxu0 0.0
    %2046 = vmatpush.msra.mxu0 0.0
    %2047 = vmatpush.msra.mxu0 0.0
    %2048 = vmatpush.msra.mxu0 0.0
    %2049 = vmatpush.msra.mxu0 0.0
    %2050 = vmatpush.msra.mxu0 0.0
    %2051 = vmatpush.msra.mxu0 0.0
    %2052 = vmatpush.msra.mxu0 0.0
    %2053 = vmatpush.msra.mxu0 0.0
    %2054 = vmatpush.msra.mxu0 0.0
    %2055 = vmatpush.msra.mxu0 0.0
    %2056 = vmatpush.msra.mxu0 0.0
    %2057 = vmatpush.msra.mxu0 0.0
    %2058 = vmatpush.msra.mxu0 %v2038
    %2059 = vmatpush.msra.mxu0 %v2036
    %2060 = vmatmul.f32.gmra.mxu0 %v2042
    %v2061 = vpop.f32.mrf.mxu0
    %v2062 = vadd.f32 0.0, %v2061
    %2063 = vdwg.mxu0
    %2064 = vrot.lane.b32.xlu0 %v1614, 104
    %v2065 = vpop.permute.xlu0 %2064
    %2066 = vrot.lane.b32.xlu0 %v1617, 104
    %v2067 = vpop.permute.xlu0 %2066
    %v2071 = vsel %vm1884, %v1971, 0
    %2073 = vmatpush.msra.mxu0 0.0
    %2074 = vmatpush.msra.mxu0 0.0
    %2075 = vmatpush.msra.mxu0 0.0
    %2076 = vmatpush.msra.mxu0 0.0
    %2077 = vmatpush.msra.mxu0 0.0
    %2078 = vmatpush.msra.mxu0 0.0
    %2079 = vmatpush.msra.mxu0 0.0
    %2080 = vmatpush.msra.mxu0 0.0
    %2081 = vmatpush.msra.mxu0 0.0
    %2082 = vmatpush.msra.mxu0 0.0
    %2083 = vmatpush.msra.mxu0 0.0
    %2084 = vmatpush.msra.mxu0 0.0
    %2085 = vmatpush.msra.mxu0 0.0
    %2086 = vmatpush.msra.mxu0 0.0
    %2087 = vmatpush.msra.mxu0 %v2067
    %2088 = vmatpush.msra.mxu0 %v2065
    %2089 = vmatmul.f32.gmra.mxu0 %v2071
    %v2090 = vpop.f32.mrf.mxu0
    %v2091 = vadd.f32 0.0, %v2090
    %2092 = vdwg.mxu0
    %2094 = vrot.lane.b32.xlu0 %v2033, 8
    %v2095 = vpop.permute.xlu0 %2094
    %2098 = vrot.lane.b32.xlu0 %v2062, 16
    %v2099 = vpop.permute.xlu0 %2098
    %2102 = vrot.lane.b32.xlu0 %v2091, 24
    %v2103 = vpop.permute.xlu0 %2102
    %v2105 = vsel %vm1625, %v2002, %v2095
    %v2106 = vsel %vm1884, %v2105, %v2099
    %vm2107 = vcmask 195584
    %v2108 = vsel %vm2107, %v2106, %v2103
    %v2110 = vsel %vm1884, %v1966, 0
    %2112 = vmatpush.msra.mxu0 0.0
    %2113 = vmatpush.msra.mxu0 0.0
    %2114 = vmatpush.msra.mxu0 0.0
    %2115 = vmatpush.msra.mxu0 0.0
    %2116 = vmatpush.msra.mxu0 0.0
    %2117 = vmatpush.msra.mxu0 0.0
    %2118 = vmatpush.msra.mxu0 0.0
    %2119 = vmatpush.msra.mxu0 0.0
    %2120 = vmatpush.msra.mxu0 0.0
    %2121 = vmatpush.msra.mxu0 0.0
    %2122 = vmatpush.msra.mxu0 0.0
    %2123 = vmatpush.msra.mxu0 0.0
    %2124 = vmatpush.msra.mxu0 0.0
    %2125 = vmatpush.msra.mxu0 0.0
    %2126 = vmatpush.msra.mxu0 %v1623
    %2127 = vmatpush.msra.mxu0 %v1620
    %2128 = vmatmul.f32.gmra.mxu0 %v2110
    %v2129 = vpop.f32.mrf.mxu0
    %v2130 = vadd.f32 0.0, %v2129
    %2131 = vdwg.mxu0
    %2134 = vrot.lane.b32.xlu0 %v1620, 120
    %v2135 = vpop.permute.xlu0 %2134
    %2136 = vrot.lane.b32.xlu0 %v1623, 120
    %v2137 = vpop.permute.xlu0 %2136
    %v2141 = vsel %vm1884, %v1968, 0
    %2143 = vmatpush.msra.mxu0 0.0
    %2144 = vmatpush.msra.mxu0 0.0
    %2145 = vmatpush.msra.mxu0 0.0
    %2146 = vmatpush.msra.mxu0 0.0
    %2147 = vmatpush.msra.mxu0 0.0
    %2148 = vmatpush.msra.mxu0 0.0
    %2149 = vmatpush.msra.mxu0 0.0
    %2150 = vmatpush.msra.mxu0 0.0
    %2151 = vmatpush.msra.mxu0 0.0
    %2152 = vmatpush.msra.mxu0 0.0
    %2153 = vmatpush.msra.mxu0 0.0
    %2154 = vmatpush.msra.mxu0 0.0
    %2155 = vmatpush.msra.mxu0 0.0
    %2156 = vmatpush.msra.mxu0 0.0
    %2157 = vmatpush.msra.mxu0 %v2137
    %2158 = vmatpush.msra.mxu0 %v2135
    %2159 = vmatmul.f32.gmra.mxu0 %v2141
    %v2160 = vpop.f32.mrf.mxu0
    %v2161 = vadd.f32 0.0, %v2160
    %2162 = vdwg.mxu0
    %2163 = vrot.lane.b32.xlu0 %v1620, 112
    %v2164 = vpop.permute.xlu0 %2163
    %2165 = vrot.lane.b32.xlu0 %v1623, 112
    %v2166 = vpop.permute.xlu0 %2165
    %v2170 = vsel %vm1884, %v1970, 0
    %2172 = vmatpush.msra.mxu0 0.0
    %2173 = vmatpush.msra.mxu0 0.0
    %2174 = vmatpush.msra.mxu0 0.0
    %2175 = vmatpush.msra.mxu0 0.0
    %2176 = vmatpush.msra.mxu0 0.0
    %2177 = vmatpush.msra.mxu0 0.0
    %2178 = vmatpush.msra.mxu0 0.0
    %2179 = vmatpush.msra.mxu0 0.0
    %2180 = vmatpush.msra.mxu0 0.0
    %2181 = vmatpush.msra.mxu0 0.0
    %2182 = vmatpush.msra.mxu0 0.0
    %2183 = vmatpush.msra.mxu0 0.0
    %2184 = vmatpush.msra.mxu0 0.0
    %2185 = vmatpush.msra.mxu0 0.0
    %2186 = vmatpush.msra.mxu0 %v2166
    %2187 = vmatpush.msra.mxu0 %v2164
    %2188 = vmatmul.f32.gmra.mxu0 %v2170
    %v2189 = vpop.f32.mrf.mxu0
    %v2190 = vadd.f32 0.0, %v2189
    %2191 = vdwg.mxu0
    %2192 = vrot.lane.b32.xlu0 %v1620, 104
    %v2193 = vpop.permute.xlu0 %2192
    %2194 = vrot.lane.b32.xlu0 %v1623, 104
    %v2195 = vpop.permute.xlu0 %2194
    %v2199 = vsel %vm1884, %v1972, 0
    %2201 = vmatpush.msra.mxu0 0.0
    %2202 = vmatpush.msra.mxu0 0.0
    %2203 = vmatpush.msra.mxu0 0.0
    %2204 = vmatpush.msra.mxu0 0.0
    %2205 = vmatpush.msra.mxu0 0.0
    %2206 = vmatpush.msra.mxu0 0.0
    %2207 = vmatpush.msra.mxu0 0.0
    %2208 = vmatpush.msra.mxu0 0.0
    %2209 = vmatpush.msra.mxu0 0.0
    %2210 = vmatpush.msra.mxu0 0.0
    %2211 = vmatpush.msra.mxu0 0.0
    %2212 = vmatpush.msra.mxu0 0.0
    %2213 = vmatpush.msra.mxu0 0.0
    %2214 = vmatpush.msra.mxu0 0.0
    %2215 = vmatpush.msra.mxu0 %v2195
    %2216 = vmatpush.msra.mxu0 %v2193
    %2217 = vmatmul.f32.gmra.mxu0 %v2199
    %v2218 = vpop.f32.mrf.mxu0
    %v2219 = vadd.f32 0.0, %v2218
    %2220 = vdwg.mxu0
    %2222 = vrot.lane.b32.xlu0 %v2161, 8
    %v2223 = vpop.permute.xlu0 %2222
    %2226 = vrot.lane.b32.xlu0 %v2190, 16
    %v2227 = vpop.permute.xlu0 %2226
    %2230 = vrot.lane.b32.xlu0 %v2219, 24
    %v2231 = vpop.permute.xlu0 %2230
    %v2233 = vsel %vm1625, %v2130, %v2223
    %v2234 = vsel %vm1884, %v2233, %v2227
    %v2235 = vsel %vm2107, %v2234, %v2231
    %2236 = vst.msk [vmem:[#allocation17] sm:$0xff] %vm140, %v2108
    %2237 = vst.msk [vmem:[#allocation17 + $0x8] sm:$0xff] %vm140, %v2235
    %2240 = vrot.lane.b32.xlu0 %v2108, 32
    %v2241 = vpop.permute.xlu0 %2240
    %2242 = vrot.lane.b32.xlu0 %v2235, 32
    %v2243 = vpop.permute.xlu0 %2242
    %v2246 = vsel %vm140, %v1496, %v2241
    %v2247 = vsel %vm140, %v1497, %v2243
    %v2248 = vld [vmem:[%s13] sm:$0xff]
    %v2249 = vld [vmem:[%s13 + $0x8] sm:$0xff]
    %v2250 = vld [vmem:[%s13 + $0x10] sm:$0xff]
    %v2251 = vld [vmem:[%s13 + $0x18] sm:$0xff]
    %v2252 = vld [vmem:[%s13 + $0x20] sm:$0xff]
    %v2253 = vld [vmem:[%s13 + $0x28] sm:$0xff]
    %v2254 = vld [vmem:[%s13 + $0x30] sm:$0xff]
    %v2255 = vld [vmem:[%s13 + $0x38] sm:$0xff]
    %v2256 = vld [vmem:[%s14] sm:$0x1]
    %v2258 = vperm.slane %v2256, 0
    %v2261 = vsel %vm154, %v2246, 0
    %v2264 = vsel %vm154, %v2247, 0
    %2266 = vmatpush.msra.mxu0 0.0
    %2267 = vmatpush.msra.mxu0 0.0
    %2268 = vmatpush.msra.mxu0 0.0
    %2269 = vmatpush.msra.mxu0 0.0
    %2270 = vmatpush.msra.mxu0 0.0
    %2271 = vmatpush.msra.mxu0 0.0
    %2272 = vmatpush.msra.mxu0 0.0
    %2273 = vmatpush.msra.mxu0 0.0
    %2274 = vmatpush.msra.mxu0 %v2255
    %2275 = vmatpush.msra.mxu0 %v2254
    %2276 = vmatpush.msra.mxu0 %v2253
    %2277 = vmatpush.msra.mxu0 %v2252
    %2278 = vmatpush.msra.mxu0 %v2251
    %2279 = vmatpush.msra.mxu0 %v2250
    %2280 = vmatpush.msra.mxu0 %v2249
    %2281 = vmatpush.msra.mxu0 %v2248
    %2282 = vmatmul.f32.gmra.mxu0 %v2261
    %v2283 = vpop.f32.mrf.mxu0
    %v2284 = vadd.f32 %v2258, %v2283
    %2285 = vmatmul.f32.gmra.mxu0 %v2264
    %v2286 = vpop.f32.mrf.mxu0
    %v2287 = vadd.f32 %v2258, %v2286
    %2288 = vdwg.mxu0
    %v2289 = vtanh.pop %v2284
    %v2290 = vtanh.pop %v2287
    %v2291 = vld [vmem:[%s15] sm:$0xff]
    %v2292 = vld [vmem:[%s15 + $0x8] sm:$0xff]
    %v2293 = vld [vmem:[%s15 + $0x10] sm:$0xff]
    %v2294 = vld [vmem:[%s15 + $0x18] sm:$0xff]
    %v2295 = vld [vmem:[%s16] sm:$0x1]
    %v2297 = vperm.slane %v2295, 0
    %v2300 = vsel %vm140, %v2289, 0
    %v2303 = vsel %vm140, %v2290, 0
    %2305 = vmatpush.msra.mxu0 0.0
    %2306 = vmatpush.msra.mxu0 0.0
    %2307 = vmatpush.msra.mxu0 0.0
    %2308 = vmatpush.msra.mxu0 0.0
    %2309 = vmatpush.msra.mxu0 0.0
    %2310 = vmatpush.msra.mxu0 0.0
    %2311 = vmatpush.msra.mxu0 0.0
    %2312 = vmatpush.msra.mxu0 0.0
    %2313 = vmatpush.msra.mxu0 0.0
    %2314 = vmatpush.msra.mxu0 0.0
    %2315 = vmatpush.msra.mxu0 0.0
    %2316 = vmatpush.msra.mxu0 0.0
    %2317 = vmatpush.msra.mxu0 %v2294
    %2318 = vmatpush.msra.mxu0 %v2293
    %2319 = vmatpush.msra.mxu0 %v2292
    %2320 = vmatpush.msra.mxu0 %v2291
    %2321 = vmatmul.f32.gmra.mxu0 %v2300
    %v2322 = vpop.f32.mrf.mxu0
    %v2323 = vadd.f32 %v2297, %v2322
    %2324 = vmatmul.f32.gmra.mxu0 %v2303
    %v2325 = vpop.f32.mrf.mxu0
    %v2326 = vadd.f32 %v2297, %v2325
    %2327 = vdwg.mxu0
    %v2328 = vsel %vm1884, %v2323, -inf
    %2329 = vmax.xlane.f32.xlu0 %v2328
    %v2330 = vpop.xlane.xlu0 %2329
    %v2331 = vsel %vm1884, %v2326, -inf
    %2332 = vmax.xlane.f32.xlu0 %v2331
    %v2333 = vpop.xlane.xlu0 %2332
    %v2334 = vsub.f32 %v2323, %v2330
    %v2335 = vsub.f32 %v2326, %v2333
    %v2336 = vmul.f32 %v2334, 1.442695
    %v2337 = vpow.pop %v2336
    %v2338 = vmul.f32 %v2335, 1.442695
    %v2339 = vpow.pop %v2338
    %v2340 = vsel %vm1884, %v2337, 0.0
    %2341 = vadd.xlane.f32.xlu0 %v2340
    %v2342 = vpop.xlane.xlu0 %2341
    %v2343 = vsel %vm1884, %v2339, 0.0
    %2344 = vadd.xlane.f32.xlu0 %v2343
    %v2345 = vpop.xlane.xlu0 %2344
    %v2346 = vlog2.pop %v2342
    %v2347 = vmul.f32 %v2346, 0.6931472
    %v2348 = vlog2.pop %v2345
    %v2349 = vmul.f32 %v2348, 0.6931472
    %v2350 = vadd.f32 %v2347, %v2330
    %v2351 = vadd.f32 %v2349, %v2333
    %v2352 = vsub.f32 %v2323, %v2350
    %v2353 = vsub.f32 %v2326, %v2351
    %2354 = vst.msk [vmem:[#allocation14] sm:$0xff] %vm1884, %v2352
    %2355 = vst.msk [vmem:[#allocation14 + $0x8] sm:$0xff] %vm1884, %v2353
    // Predicated region
    $region82: #{decoder_rnn_forward.1} parent=1 // pred_check
      _
    $region83: #{decoder_rnn_forward.1} parent=1 // pred_check_branch
      %2357 = sbr.rel (0) target = $region85
    $region84: #{decoder_rnn_forward.1} parent=1 // pred_region
      %2359 = vsyncadd [#allocation8], 0
      %s2360 = sshll.u32 [#allocation14], 4
      %s2361 = int_to_ptr.vmem [resolvable:$true] %s2360
      %s2362 = sshll.u32 %s17, 4
      %s2363 = int_to_ptr.hbm [resolvable:$true] %s2362
      %2368 = dma.vmem_to_hbm [thread:$0]  %s2361, 256, %s2363, [#allocation8], 128, 128, 8
    $region85: #{decoder_rnn_forward.1} parent=1 // pred_fallthru
      _
    // Predicated region
    $region86: #{decoder_rnn_forward.1} parent=1 // pred_check
      _
    $region87: #{decoder_rnn_forward.1} parent=1 // pred_check_branch
      %2370 = sbr.rel (0) target = $region89
    $region88: #{decoder_rnn_forward.1} parent=1 // pred_region
      %2372 = vsyncadd [#allocation16], 0
      %s2373 = sshll.u32 [#allocation15], 4
      %s2374 = int_to_ptr.vmem [resolvable:$true] %s2373
      %s2375 = sshll.u32 %s18, 4
      %s2376 = int_to_ptr.hbm [resolvable:$true] %s2375
      %2381 = dma.vmem_to_hbm [thread:$0]  %s2374, 1024, %s2376, [#allocation16], 128, 128, 8
    $region89: #{decoder_rnn_forward.1} parent=1 // pred_fallthru
      _
    // Predicated region
    $region90: #{decoder_rnn_forward.1} parent=1 // pred_check
      _
    $region91: #{decoder_rnn_forward.1} parent=1 // pred_check_branch
      %2383 = sbr.rel (0) target = $region93
    $region92: #{decoder_rnn_forward.1} parent=1 // pred_region
      %2385 = vsyncadd [#allocation16], 0
      %s2386 = sshll.u32 [#allocation17], 4
      %s2387 = int_to_ptr.vmem [resolvable:$true] %s2386
      %s2388 = sshll.u32 %s19, 4
      %s2389 = int_to_ptr.hbm [resolvable:$true] %s2388
      %2394 = dma.vmem_to_hbm [thread:$0]  %s2387, 256, %s2389, [#allocation16], 128, 128, 8
    $region93: #{decoder_rnn_forward.1} parent=1 // pred_fallthru
      _
    // Predicated region
    $region94: #{decoder_rnn_forward.1} parent=1 // pred_check
      _
    $region95: #{decoder_rnn_forward.1} parent=1 // pred_check_branch
      %2396 = sbr.rel (0) target = $region97
    $region96: #{decoder_rnn_forward.1} parent=1 // pred_region
      %2398 = dma.done [#allocation8], 256
    $region97: #{decoder_rnn_forward.1} parent=1 // pred_fallthru
      _
    // Predicated region
    $region98: #{decoder_rnn_forward.1} parent=1 // pred_check
      _
    $region99: #{decoder_rnn_forward.1} parent=1 // pred_check_branch
      %2400 = sbr.rel (0) target = $region101
    $region100: #{decoder_rnn_forward.1} parent=1 // pred_region
      %2402 = dma.done [#allocation16], 1024
    $region101: #{decoder_rnn_forward.1} parent=1 // pred_fallthru
      _
    // Predicated region
    $region102: #{decoder_rnn_forward.1} parent=1 // pred_check
      _
    $region103: #{decoder_rnn_forward.1} parent=1 // pred_check_branch
      %2404 = sbr.rel (0) target = $region105
    $region104: #{decoder_rnn_forward.1} parent=1 // pred_region
      %2406 = dma.done [#allocation16], 256
    $region105: #{decoder_rnn_forward.1} parent=1 // pred_fallthru
      _
    %2407 = vsyncpa [#allocation7], 1
    %2408 = vsyncpa [#allocation10], 1
    %2409 = vsyncpa [#allocation13], 1
    %2410 = vsyncpa [#allocation8], 1
    %2411 = vsyncpa [#allocation16], 1

</llo_original>
